<compile_context>
chip_gen: v6e
topology: v6e:2x2x1
jax: 0.10.0
libtpu: 0.0.40
codegen_flags: <defaults>
</compile_context>

<pallas_src>
import functools
import numpy as np
import jax
import jax.numpy as jnp
from jax.experimental import pallas as pl
from jax.experimental.pallas import tpu as pltpu


# ---------------------------------------------------------------------------
# Pallas kernels
# ---------------------------------------------------------------------------

def _mm_bn_kernel(a_ref, w_ref, s_ref, b_ref, o_ref, acc_ref, *, relu):
    """Tiled matmul with fused folded-BN (per-channel scale/bias) + optional ReLU."""
    @pl.when(pl.program_id(2) == 0)
    def _():
        acc_ref[...] = jnp.zeros_like(acc_ref)

    acc_ref[...] += jnp.dot(a_ref[...], w_ref[...],
                            preferred_element_type=jnp.float32)

    @pl.when(pl.program_id(2) == pl.num_programs(2) - 1)
    def _():
        y = acc_ref[...] * s_ref[...] + b_ref[...]
        if relu:
            y = jnp.maximum(y, 0.0)
        o_ref[...] = y.astype(o_ref.dtype)


def _mm_bn_res_kernel(a_ref, w_ref, s_ref, b_ref, r_ref, o_ref, acc_ref, *, relu):
    """Same as _mm_bn_kernel plus a fused residual add (bottleneck shortcut)."""
    @pl.when(pl.program_id(2) == 0)
    def _():
        acc_ref[...] = jnp.zeros_like(acc_ref)

    acc_ref[...] += jnp.dot(a_ref[...], w_ref[...],
                            preferred_element_type=jnp.float32)

    @pl.when(pl.program_id(2) == pl.num_programs(2) - 1)
    def _():
        y = acc_ref[...] * s_ref[...] + b_ref[...] + r_ref[...].astype(jnp.float32)
        if relu:
            y = jnp.maximum(y, 0.0)
        o_ref[...] = y.astype(o_ref.dtype)


def _conv3x3_flat_kernel(x_ref, w_ref, s_ref, b_ref, o_ref, *,
                         cin, row_stride, mv, relu):
    """Direct stride-1 3x3 conv on a per-image flattened padded slab.

    x_ref:  (1, S, Cin)   flattened zero-padded image, S = (H+3)*(W+2)
    w_ref:  (9*Cin, tn)   weights, tap-major (ky, kx, Cin)
    o_ref:  (1, Mv, tn)   "virtual" output rows, Mv = H*(W+2)
    The 9 taps are statically-offset row windows of the slab; their matmuls are
    accumulated in f32 and the BN/ReLU epilogue is fused.
    """
    acc = None
    for t in range(9):
        ky, kx = divmod(t, 3)
        off = ky * row_stride + kx
        lhs = x_ref[0, off:off + mv, :]                 # (Mv, Cin), static offset
        rhs = w_ref[t * cin:(t + 1) * cin, :]           # (Cin, tn)
        d = jnp.dot(lhs, rhs, preferred_element_type=jnp.float32)
        acc = d if acc is None else acc + d
    y = acc * s_ref[...] + b_ref[...]
    if relu:
        y = jnp.maximum(y, 0.0)
    o_ref[0] = y.astype(o_ref.dtype)


def _max9_kernel(x_ref, o_ref):
    # x_ref: (9, tile_rows, lane) -- the 9 window-shifted copies; max over axis 0.
    o_ref[...] = jnp.max(x_ref[...], axis=0)


def _gap_kernel(x_ref, o_ref):
    # x_ref: (N, H*W, C) -> mean over the spatial axis (global average pool).
    inv = 1.0 / x_ref.shape[1]
    o_ref[...] = (jnp.sum(x_ref[...].astype(jnp.float32), axis=1) * inv).astype(o_ref.dtype)


# ---------------------------------------------------------------------------
# Tiling helpers
# ---------------------------------------------------------------------------

def _round_up(x, m):
    return (x + m - 1) // m * m


_TM_CANDIDATES = (1024, 896, 784, 768, 640, 576, 512, 448, 416, 384,
                  320, 256, 224, 192, 160, 128)


def _pick_tm(m, cap=1024):
    """Largest row tile that exactly divides m (or full m if small); None -> pad."""
    if m <= cap:
        return m                      # single full-extent block (always legal)
    for c in _TM_CANDIDATES:
        if c <= cap and m % c == 0:
            return c
    return None


def _pick_tk(k):
    if k <= 1024:
        return k                      # single K step, full-extent block
    for c in (512, 384, 256, 128):
        if k % c == 0:
            return c
    return None


def _pick_tn(c):
    if c <= 256 or c % 256 != 0:
        return c
    return 256


# ---------------------------------------------------------------------------
# Pallas wrappers
# ---------------------------------------------------------------------------

def fused_conv_matmul(a, w, scale, bias, *, relu, residual=None):
    """out = [relu]( (a @ w) * scale + bias [+ residual] ), run on the MXU."""
    M, K = a.shape
    C = w.shape[1]

    tm = _pick_tm(M)
    if tm is None:                    # fallback (never hit for this network)
        tm = 512
        Mp = _round_up(M, tm)
    else:
        Mp = M
    tk = _pick_tk(K)
    if tk is None:
        tk = 512
        Kp = _round_up(K, tk)
    else:
        Kp = K
    tn = _pick_tn(C)

    a_p = a if (Mp == M and Kp == K) else jnp.pad(a, ((0, Mp - M), (0, Kp - K)))
    w_p = w if Kp == K else jnp.pad(w, ((0, Kp - K), (0, 0)))

    grid = (Mp // tm, C // tn, Kp // tk)
    a_spec = pl.BlockSpec((tm, tk), lambda i, j, k: (i, k))
    w_spec = pl.BlockSpec((tk, tn), lambda i, j, k: (k, j))
    v_spec = pl.BlockSpec((1, tn), lambda i, j, k: (0, j))
    o_spec = pl.BlockSpec((tm, tn), lambda i, j, k: (i, j))
    scratch = [pltpu.VMEM((tm, tn), jnp.float32)]
    cparams = pltpu.CompilerParams(
        dimension_semantics=("parallel", "parallel", "arbitrary"))
    out_shape = jax.ShapeDtypeStruct((Mp, C), jnp.bfloat16)

    if residual is None:
        out = pl.pallas_call(
            functools.partial(_mm_bn_kernel, relu=relu),
            out_shape=out_shape,
            grid_spec=pltpu.PrefetchScalarGridSpec(
                num_scalar_prefetch=0, grid=grid,
                in_specs=[a_spec, w_spec, v_spec, v_spec],
                out_specs=o_spec, scratch_shapes=scratch),
            compiler_params=cparams,
        )(a_p, w_p, scale, bias)
    else:
        r_p = residual if Mp == M else jnp.pad(residual, ((0, Mp - M), (0, 0)))
        out = pl.pallas_call(
            functools.partial(_mm_bn_res_kernel, relu=relu),
            out_shape=out_shape,
            grid_spec=pltpu.PrefetchScalarGridSpec(
                num_scalar_prefetch=0, grid=grid,
                in_specs=[a_spec, w_spec, v_spec, v_spec, o_spec],
                out_specs=o_spec, scratch_shapes=scratch),
            compiler_params=cparams,
        )(a_p, w_p, scale, bias, r_p)

    return out if Mp == M else out[:M]


def conv3x3_s1_flat(x, p, *, relu=True):
    """Stride-1 3x3 conv (pad=1) without im2col: per-image flattened-slab kernel."""
    N, H, W, Cin = x.shape
    Cout = p["w"].shape[1]
    rs = W + 2                                   # row stride of the padded layout
    S = (H + 3) * rs                             # 1 top + 2 bottom pad rows
    Mv = H * rs                                  # virtual output rows per image
    tn = _pick_tn(Cout)

    xp = jnp.pad(x, ((0, 0), (1, 2), (1, 1), (0, 0))).reshape(N, S, Cin)

    out = pl.pallas_call(
        functools.partial(_conv3x3_flat_kernel,
                          cin=Cin, row_stride=rs, mv=Mv, relu=relu),
        out_shape=jax.ShapeDtypeStruct((N, Mv, Cout), jnp.bfloat16),
        grid_spec=pltpu.PrefetchScalarGridSpec(
            num_scalar_prefetch=0, grid=(N, Cout // tn),
            in_specs=[pl.BlockSpec((1, S, Cin), lambda n, j: (n, 0, 0)),
                      pl.BlockSpec((9 * Cin, tn), lambda n, j: (0, j)),
                      pl.BlockSpec((1, tn), lambda n, j: (0, j)),
                      pl.BlockSpec((1, tn), lambda n, j: (0, j))],
            out_specs=pl.BlockSpec((1, Mv, tn), lambda n, j: (n, 0, j))),
        compiler_params=pltpu.CompilerParams(
            dimension_semantics=("parallel", "parallel")),
    )(xp, p["w"], p["scale"], p["bias"])

    # Virtual rows include the W-padding columns; drop them.
    return out.reshape(N, H, rs, Cout)[:, :, :W, :]


def maxpool_3x3_s2_p1(x):
    """MaxPool2d(kernel=3, stride=2, padding=1) on an NHWC tensor (lane-dense)."""
    N, H, W, C = x.shape
    Hout = (H - 1) // 2 + 1
    Wout = (W - 1) // 2 + 1
    xp = jnp.pad(x, ((0, 0), (1, 1), (1, 1), (0, 0)), constant_values=-jnp.inf)
    slices = [xp[:, dy:dy + 2 * Hout:2, dx:dx + 2 * Wout:2, :]
              for dy in range(3) for dx in range(3)]
    total = N * Hout * Wout * C
    lane = 128 if total % 128 == 0 else C        # lane-dense output when possible
    rows = total // lane
    stacked = jnp.stack(slices, axis=0).reshape(9, rows, lane)

    tr = _pick_tm(rows)
    if tr is None:
        tr = 512
        rows_p = _round_up(rows, tr)
        stacked = jnp.pad(stacked, ((0, 0), (0, rows_p - rows), (0, 0)))
    else:
        rows_p = rows

    out = pl.pallas_call(
        _max9_kernel,
        out_shape=jax.ShapeDtypeStruct((rows_p, lane), x.dtype),
        grid_spec=pltpu.PrefetchScalarGridSpec(
            num_scalar_prefetch=0, grid=(rows_p // tr,),
            in_specs=[pl.BlockSpec((9, tr, lane), lambda i: (0, i, 0))],
            out_specs=pl.BlockSpec((tr, lane), lambda i: (i, 0))),
        compiler_params=pltpu.CompilerParams(dimension_semantics=("parallel",)),
    )(stacked)
    if rows_p != rows:
        out = out[:rows]
    return out.reshape(N, Hout, Wout, C)


def global_avg_pool(x):
    """AdaptiveAvgPool2d(1) + flatten: (N, H, W, C) -> (N, C)."""
    N, H, W, C = x.shape
    xf = x.reshape(N, H * W, C)
    return pl.pallas_call(
        _gap_kernel,
        out_shape=jax.ShapeDtypeStruct((N, C), x.dtype),
    )(xf)


# ---------------------------------------------------------------------------
# ResNet-50 forward
# ---------------------------------------------------------------------------

def conv_bn(x, p, kh, kw, stride, pad, relu, residual=None):
    N, H, W, Cin = x.shape
    Cout = p["w"].shape[1]

    if (kh, kw) == (3, 3) and stride == 1 and pad == 1:
        # direct kernel, no im2col materialization
        return conv3x3_s1_flat(x, p, relu=relu)

    Hout = (H + 2 * pad - kh) // stride + 1
    Wout = (W + 2 * pad - kw) // stride + 1
    if kh == 1 and kw == 1:
        xs = x[:, ::stride, ::stride, :] if stride > 1 else x
        patches = xs.reshape(N * Hout * Wout, Cin)
    else:
        # im2col only for the 7x7 stem and the three stride-2 3x3 convs.
        xp = jnp.pad(x, ((0, 0), (pad, pad), (pad, pad), (0, 0)))
        cols = [xp[:, dy:dy + stride * Hout:stride, dx:dx + stride * Wout:stride, :]
                for dy in range(kh) for dx in range(kw)]
        patches = jnp.concatenate(cols, axis=-1).reshape(N * Hout * Wout, kh * kw * Cin)

    res2d = None if residual is None else residual.reshape(N * Hout * Wout, Cout)
    y = fused_conv_matmul(patches, p["w"], p["scale"], p["bias"],
                          relu=relu, residual=res2d)
    return y.reshape(N, Hout, Wout, Cout)


def bottleneck(x, blk):
    identity = x
    s = blk["stride"]
    out = conv_bn(x, blk["conv1"], 1, 1, 1, 0, relu=True)
    out = conv_bn(out, blk["conv2"], 3, 3, s, 1, relu=True)
    if "downsample" in blk:
        identity = conv_bn(x, blk["downsample"], 1, 1, s, 0, relu=False)
    return conv_bn(out, blk["conv3"], 1, 1, 1, 0, relu=True, residual=identity)


def feature_extractor_forward(params, x_nchw):
    assert x_nchw.ndim == 4
    assert x_nchw.shape[1:] == (3, 224, 224)
    x = jnp.transpose(x_nchw, (0, 2, 3, 1)).astype(jnp.bfloat16)   # NCHW -> NHWC
    x = conv_bn(x, params["conv1"], 7, 7, 2, 3, relu=True)          # (N,112,112,64)
    x = maxpool_3x3_s2_p1(x)                                        # (N, 56, 56,64)
    for stage in params["layers"]:
        for blk in stage:
            x = bottleneck(x, blk)                                  # ... (N,7,7,2048)
    x = global_avg_pool(x)                                          # (N, 2048)
    # nn.Flatten(1, -1) on (N, 2048, 1, 1) is a no-op after the pool; cast to
    # fp16 to match the .half() module output dtype.
    return x.astype(jnp.float16)


# ---------------------------------------------------------------------------
# Deterministic synthetic parameters (BatchNorm folded into scale/bias)
# ---------------------------------------------------------------------------
# TODO(synk): torchvision pretrained weights cannot be loaded here; parameters
# are synthetic (He-init convs, folded eval-mode BN) with matching shapes.

class _KeyGen:
    def __init__(self, seed):
        self._key = jax.random.PRNGKey(seed)

    def __call__(self):
        self._key, sub = jax.random.split(self._key)
        return sub


def _conv_bn_params(kg, kh, kw, cin, cout, bn_scale):
    fan_in = kh * kw * cin
    w = jax.random.normal(kg(), (kh, kw, cin, cout), jnp.float32) * np.sqrt(2.0 / fan_in)
    scale = bn_scale * (1.0 + 0.05 * jax.random.normal(kg(), (cout,), jnp.float32))
    bias = 0.05 * jax.random.normal(kg(), (cout,), jnp.float32)
    # Pre-cast / pre-shape once so no per-forward pad/cast ops are emitted.
    return {"w": w.reshape(kh * kw * cin, cout).astype(jnp.bfloat16),
            "scale": scale.reshape(1, cout).astype(jnp.float32),
            "bias": bias.reshape(1, cout).astype(jnp.float32)}


def _bottleneck_params(kg, cin, width, stride):
    blk = {
        "stride": stride,
        "conv1": _conv_bn_params(kg, 1, 1, cin, width, 1.0),
        "conv2": _conv_bn_params(kg, 3, 3, width, width, 1.0),
        # small folded-BN scale on the last conv keeps the residual stream bounded
        "conv3": _conv_bn_params(kg, 1, 1, width, width * 4, 0.25),
    }
    if stride != 1 or cin != width * 4:
        blk["downsample"] = _conv_bn_params(kg, 1, 1, cin, width * 4, 0.25)
    return blk


def make_resnet50_params(seed=0):
    kg = _KeyGen(seed)
    params = {"conv1": _conv_bn_params(kg, 7, 7, 3, 64, 1.0), "layers": []}
    cin = 64
    for (nblocks, width, stride) in [(3, 64, 1), (4, 128, 2), (6, 256, 2), (3, 512, 2)]:
        stage = []
        for b in range(nblocks):
            stage.append(_bottleneck_params(kg, cin, width, stride if b == 0 else 1))
            cin = width * 4
        params["layers"].append(stage)
    return params


# ---------------------------------------------------------------------------

if __name__ == "__main__":
    params = make_resnet50_params(seed=0)
    key = jax.random.PRNGKey(0)
    x = jax.random.normal(key, (2, 3, 224, 224), dtype=jnp.float32).astype(jnp.float16)

    out = feature_extractor_forward(params, x)
    out = jax.block_until_ready(out)

    assert out.shape == (2, 2048), out.shape
    assert out.dtype == jnp.float16, out.dtype
    assert bool(jnp.all(jnp.isfinite(out.astype(jnp.float32))))
    print("KERNEL_OK")
</pallas_src>

<mosaic_0001>
module attributes {stable_mosaic.version = 11 : i64} {
  func.func @_mm_bn_kernel(%arg0: i32, %arg1: i32, %arg2: i32, %arg3: memref<896x147xbf16, #tpu.memory_space<vmem>>, %arg4: memref<147x64xbf16, #tpu.memory_space<vmem>>, %arg5: memref<1x64xf32, #tpu.memory_space<vmem>>, %arg6: memref<1x64xf32, #tpu.memory_space<vmem>>, %arg7: memref<896x64xbf16, #tpu.memory_space<vmem>>, %arg8: memref<896x64xf32, #tpu.memory_space<vmem>>) attributes {dimension_semantics = [#tpu.dimension_semantics<parallel>, #tpu.dimension_semantics<parallel>, #tpu.dimension_semantics<arbitrary>], iteration_bounds = array<i64: 28, 1, 1>, scalar_prefetch = 0 : i64, scratch_operands = 1 : i64, tpu.core_type = #tpu.core_type<tc>, window_params = [{transform_indices = @transform_0, window_bounds = array<i64: 896, 147>}, {transform_indices = @transform_1, window_bounds = array<i64: 147, 64>}, {transform_indices = @transform_2, window_bounds = array<i64: 1, 64>}, {transform_indices = @transform_3, window_bounds = array<i64: 1, 64>}, {transform_indices = @transform_4, window_bounds = array<i64: 896, 64>}]} {
    %c0_i32 = arith.constant 0 : i32
    %0 = arith.cmpi eq, %arg2, %c0_i32 : i32
    %1 = arith.extui %0 : i1 to i32
    %c0_i32_0 = arith.constant 0 : i32
    %2 = arith.cmpi ne, %1, %c0_i32_0 : i32
    scf.if %2 {
      %cst_10 = arith.constant 0.000000e+00 : f32
      %12 = vector.broadcast %cst_10 : f32 to vector<896x64xf32>
      %c0_11 = arith.constant 0 : index
      %c0_12 = arith.constant 0 : index
      %13 = vector.load %arg8[%c0_11, %c0_12] : memref<896x64xf32, #tpu.memory_space<vmem>>, vector<896x64xf32>
      tpu.vector_store %arg8[%c0_11, %c0_12], %12 {strides = array<i32>} : memref<896x64xf32, #tpu.memory_space<vmem>>, vector<896x64xf32>,
    } else {
    }
    %c0 = arith.constant 0 : index
    %c0_1 = arith.constant 0 : index
    %3 = vector.load %arg8[%c0, %c0_1] : memref<896x64xf32, #tpu.memory_space<vmem>>, vector<896x64xf32>
    %c0_2 = arith.constant 0 : index
    %c0_3 = arith.constant 0 : index
    %4 = vector.load %arg3[%c0_2, %c0_3] : memref<896x147xbf16, #tpu.memory_space<vmem>>, vector<896x147xbf16>
    %c0_4 = arith.constant 0 : index
    %c0_5 = arith.constant 0 : index
    %5 = vector.load %arg4[%c0_4, %c0_5] : memref<147x64xbf16, #tpu.memory_space<vmem>>, vector<147x64xbf16>
    %cst = arith.constant dense<0.000000e+00> : vector<896x64xf32>
    %6 = tpu.matmul %4, %5, %cst {dimension_numbers = #tpu.dot_dimension_numbers<[1], [0], [0], [1], [0, 0, 1, 1], [], []>} : vector<896x147xbf16>, vector<147x64xbf16>, vector<896x64xf32> -> vector<896x64xf32>
    %7 = arith.addf %3, %6 : vector<896x64xf32>
    %c0_6 = arith.constant 0 : index
    %c0_7 = arith.constant 0 : index
    %8 = vector.load %arg8[%c0_6, %c0_7] : memref<896x64xf32, #tpu.memory_space<vmem>>, vector<896x64xf32>
    tpu.vector_store %arg8[%c0_6, %c0_7], %7 {strides = array<i32>} : memref<896x64xf32, #tpu.memory_space<vmem>>, vector<896x64xf32>,
    %c0_i32_8 = arith.constant 0 : i32
    %9 = arith.cmpi eq, %arg2, %c0_i32_8 : i32
    %10 = arith.extui %9 : i1 to i32
    %c0_i32_9 = arith.constant 0 : i32
    %11 = arith.cmpi ne, %10, %c0_i32_9 : i32
    scf.if %11 {
      %c0_10 = arith.constant 0 : index
      %c0_11 = arith.constant 0 : index
      %12 = vector.load %arg8[%c0_10, %c0_11] : memref<896x64xf32, #tpu.memory_space<vmem>>, vector<896x64xf32>
      %c0_12 = arith.constant 0 : index
      %c0_13 = arith.constant 0 : index
      %13 = vector.load %arg5[%c0_12, %c0_13] : memref<1x64xf32, #tpu.memory_space<vmem>>, vector<1x64xf32>
      %14 = vector.broadcast %13 : vector<1x64xf32> to vector<896x64xf32>
      %15 = arith.mulf %12, %14 : vector<896x64xf32>
      %c0_14 = arith.constant 0 : index
      %c0_15 = arith.constant 0 : index
      %16 = vector.load %arg6[%c0_14, %c0_15] : memref<1x64xf32, #tpu.memory_space<vmem>>, vector<1x64xf32>
      %17 = vector.broadcast %16 : vector<1x64xf32> to vector<896x64xf32>
      %18 = arith.addf %15, %17 : vector<896x64xf32>
      %cst_16 = arith.constant 0.000000e+00 : f32
      %19 = vector.broadcast %cst_16 : f32 to vector<896x64xf32>
      %20 = arith.maximumf %18, %19 : vector<896x64xf32>
      %21 = arith.truncf %20 : vector<896x64xf32> to vector<896x64xbf16>
      %c0_17 = arith.constant 0 : index
      %c0_18 = arith.constant 0 : index
      %22 = vector.load %arg7[%c0_17, %c0_18] : memref<896x64xbf16, #tpu.memory_space<vmem>>, vector<896x64xbf16>
      tpu.vector_store %arg7[%c0_17, %c0_18], %21 {strides = array<i32>} : memref<896x64xbf16, #tpu.memory_space<vmem>>, vector<896x64xbf16>,
    } else {
    }
    return
  }
  func.func @transform_0(%arg0: i32, %arg1: i32, %arg2: i32) -> (i32, i32) {
    %c0_i32 = arith.constant 0 : i32
    return %arg0, %arg2 : i32, i32
  }
  func.func @transform_1(%arg0: i32, %arg1: i32, %arg2: i32) -> (i32, i32) {
    %c0_i32 = arith.constant 0 : i32
    return %arg2, %arg1 : i32, i32
  }
  func.func @transform_2(%arg0: i32, %arg1: i32, %arg2: i32) -> (i32, i32) {
    %c0_i32 = arith.constant 0 : i32
    %c0_i32_0 = arith.constant 0 : i32
    return %c0_i32, %arg1 : i32, i32
  }
  func.func @transform_3(%arg0: i32, %arg1: i32, %arg2: i32) -> (i32, i32) {
    %c0_i32 = arith.constant 0 : i32
    %c0_i32_0 = arith.constant 0 : i32
    return %c0_i32, %arg1 : i32, i32
  }
  func.func @transform_4(%arg0: i32, %arg1: i32, %arg2: i32) -> (i32, i32) {
    %c0_i32 = arith.constant 0 : i32
    return %arg0, %arg1 : i32, i32
  }
}

</mosaic_0001>

<llo_original>
// kernel: tpu_custom_call.1
$region0: #{tpu_custom_call.1}
  #allocation0 [shape = 'u32[]', space=smem, size = 0x4, offset = 0x4, fixed_abs, tag = 'smem constant byte address 0x4 - core index']
  #allocation1 [shape = 'u32[144,128]{1,0:T(1,128)}', space=vmem, size = 0x12000, scoped, tag = 'internal scratch']
  #allocation2 [shape = 'f32[896,64]{1,0:T(8,128)}', space=vmem, size = 0x70000, scoped, tag = 'scratch operand']
  %s0 = inlined_call_operand.vmem [shape: bf16[25088,147], index: 0, kind: input, shape index: {}]
  %s1 = inlined_call_operand.vmem [shape: bf16[147,64], index: 1, kind: input, shape index: {}]
  %s2 = inlined_call_operand.vmem [shape: f32[1,64], index: 2, kind: input, shape index: {}]
  %s3 = inlined_call_operand.vmem [shape: f32[1,64], index: 3, kind: input, shape index: {}]
  %s4 = inlined_call_operand.vmem [shape: bf16[25088,64], index: 4, kind: output, shape index: {}]
  %s5 = sld [smem:[#allocation0]]
  $region57: #{tpu_custom_call.1} parent=0
    _
  %s7 = ssub.s32 1, %s5
  %s8 = scalar_select 0, %s7, %s5
  loop: start=0, step=1, limit=30
  $region2: #{tpu_custom_call.1} parent=0 // loop_pre_header
    _
  $region3: #{tpu_custom_call.1} parent=0 // loop_header
    %s10 = sphi 0, %s14
    %p11 = scmp.ge.s32.totalorder %s10, 30
    %s17 = sphi 0, %s36
    %s18 = sphi 0, %s32
    %s19 = sphi 0, %s28
    %s20 = sphi 0, %s17
    %s21 = sphi 0, %s18
    %s22 = sphi 0, %s19
    %s23 = sphi 0, %s20
    %s24 = sphi 0, %s21
    %s25 = sphi 0, %s22
    %s41 = sphi 0, %s43
    %s44 = sphi 0, %s41
    %s45 = sphi 0, %s44
    %s61 = sphi 0, %s45
    %s69 = sphi 0, %s71
    %s72 = sphi 0, %s69
    %s73 = sphi 0, %s72
    %s89 = sphi 0, %s73
    %s95 = sphi 0, %s97
    %s98 = sphi 0, %s95
    %s99 = sphi 0, %s98
    %s115 = sphi 0, %s99
    %s121 = sphi 0, %s123
    %s124 = sphi 0, %s121
    %s125 = sphi 0, %s124
    %s141 = sphi 0, %s125
    %s149 = sphi 0, %s151
    %s152 = sphi 0, %s149
    %s153 = sphi 0, %s152
    %s169 = sphi 0, %s153
  $region4: #{tpu_custom_call.1} parent=0 // loop_header_branch
    %13 = sbr.rel (%p11) target = $region8
  $region5: #{tpu_custom_call.1} parent=0 // loop_body
    %s15 = ssub.s32 %s10, 1
    %s16 = ssub.s32 %s10, 2
    %s26 = sadd.s32 1, %s19
    %p27 = scmp.ge.s32.totalorder %s26, 1
    %s28 = scalar_select %p27, 0, %s26
    %s29 = sadd.s32 1, %s18
    %s30 = scalar_select %p27, %s29, %s18
    %p31 = scmp.ge.s32.totalorder %s30, 1
    %s32 = scalar_select %p31, 0, %s30
    %s33 = sadd.s32 1, %s17
    %s34 = scalar_select %p31, %s33, %s17
    %p35 = scmp.ge.s32.totalorder %s34, 28
    %s36 = scalar_select %p35, 0, %s34
    %s37 = ssub.s32 %s17, %s36
    %s38 = ssub.s32 %s19, %s28
    %s39 = sor.u32 %s37, %s38
    %p40 = scmp.eq.s32.totalorder %s39, 0
    %s42 = sadd.s32 %s41, 1
    %s43 = scalar_select %p40, %s41, %s42
    %p46 = pneg %p40
    %p47 = scmp.eq.s32.totalorder %s10, 27
    %p48 = por %p46, %p47
    %p49 = scmp.ne.s32.totalorder %s41, %s44
    %p50 = scmp.eq.s32.totalorder %s10, 0
    %p51 = por %p49, %p50
    %p52 = scmp.ne.s32.totalorder %s41, %s44
    %p53 = scmp.eq.s32.totalorder %s15, 27
    %p54 = por %p52, %p53
    %p55 = scmp.ne.s32.totalorder %s44, %s45
    %p56 = scmp.eq.s32.totalorder %s15, 0
    %p57 = por %p55, %p56
    %p58 = scmp.ne.s32.totalorder %s44, %s45
    %p59 = scmp.eq.s32.totalorder %s16, 27
    %p60 = por %p58, %p59
    %p62 = scmp.ne.s32.totalorder %s45, %s61
    %p63 = scmp.eq.s32.totalorder %s16, 0
    %p64 = por %p62, %p63
    %s65 = ssub.s32 %s19, %s28
    %s66 = ssub.s32 %s18, %s32
    %s67 = sor.u32 %s65, %s66
    %p68 = scmp.eq.s32.totalorder %s67, 0
    %s70 = sadd.s32 %s69, 1
    %s71 = scalar_select %p68, %s69, %s70
    %p74 = pneg %p68
    %p75 = scmp.eq.s32.totalorder %s10, 27
    %p76 = por %p74, %p75
    %p77 = scmp.ne.s32.totalorder %s69, %s72
    %p78 = scmp.eq.s32.totalorder %s10, 0
    %p79 = por %p77, %p78
    %p80 = scmp.ne.s32.totalorder %s69, %s72
    %p81 = scmp.eq.s32.totalorder %s15, 27
    %p82 = por %p80, %p81
    %p83 = scmp.ne.s32.totalorder %s72, %s73
    %p84 = scmp.eq.s32.totalorder %s15, 0
    %p85 = por %p83, %p84
    %p86 = scmp.ne.s32.totalorder %s72, %s73
    %p87 = scmp.eq.s32.totalorder %s16, 27
    %p88 = por %p86, %p87
    %p90 = scmp.ne.s32.totalorder %s73, %s89
    %p91 = scmp.eq.s32.totalorder %s16, 0
    %p92 = por %p90, %p91
    %s93 = ssub.s32 %s18, %s32
    %p94 = scmp.eq.s32.totalorder %s93, 0
    %s96 = sadd.s32 %s95, 1
    %s97 = scalar_select %p94, %s95, %s96
    %p100 = pneg %p94
    %p101 = scmp.eq.s32.totalorder %s10, 27
    %p102 = por %p100, %p101
    %p103 = scmp.ne.s32.totalorder %s95, %s98
    %p104 = scmp.eq.s32.totalorder %s10, 0
    %p105 = por %p103, %p104
    %p106 = scmp.ne.s32.totalorder %s95, %s98
    %p107 = scmp.eq.s32.totalorder %s15, 27
    %p108 = por %p106, %p107
    %p109 = scmp.ne.s32.totalorder %s98, %s99
    %p110 = scmp.eq.s32.totalorder %s15, 0
    %p111 = por %p109, %p110
    %p112 = scmp.ne.s32.totalorder %s98, %s99
    %p113 = scmp.eq.s32.totalorder %s16, 27
    %p114 = por %p112, %p113
    %p116 = scmp.ne.s32.totalorder %s99, %s115
    %p117 = scmp.eq.s32.totalorder %s16, 0
    %p118 = por %p116, %p117
    %s119 = ssub.s32 %s18, %s32
    %p120 = scmp.eq.s32.totalorder %s119, 0
    %s122 = sadd.s32 %s121, 1
    %s123 = scalar_select %p120, %s121, %s122
    %p126 = pneg %p120
    %p127 = scmp.eq.s32.totalorder %s10, 27
    %p128 = por %p126, %p127
    %p129 = scmp.ne.s32.totalorder %s121, %s124
    %p130 = scmp.eq.s32.totalorder %s10, 0
    %p131 = por %p129, %p130
    %p132 = scmp.ne.s32.totalorder %s121, %s124
    %p133 = scmp.eq.s32.totalorder %s15, 27
    %p134 = por %p132, %p133
    %p135 = scmp.ne.s32.totalorder %s124, %s125
    %p136 = scmp.eq.s32.totalorder %s15, 0
    %p137 = por %p135, %p136
    %p138 = scmp.ne.s32.totalorder %s124, %s125
    %p139 = scmp.eq.s32.totalorder %s16, 27
    %p140 = por %p138, %p139
    %p142 = scmp.ne.s32.totalorder %s125, %s141
    %p143 = scmp.eq.s32.totalorder %s16, 0
    %p144 = por %p142, %p143
    %s145 = ssub.s32 %s17, %s36
    %s146 = ssub.s32 %s18, %s32
    %s147 = sor.u32 %s145, %s146
    %p148 = scmp.eq.s32.totalorder %s147, 0
    %s150 = sadd.s32 %s149, 1
    %s151 = scalar_select %p148, %s149, %s150
    %p154 = pneg %p148
    %p155 = scmp.eq.s32.totalorder %s10, 27
    %p156 = por %p154, %p155
    %p157 = scmp.ne.s32.totalorder %s149, %s152
    %p158 = scmp.eq.s32.totalorder %s10, 0
    %p159 = por %p157, %p158
    %p160 = scmp.ne.s32.totalorder %s149, %s152
    %p161 = scmp.eq.s32.totalorder %s15, 27
    %p162 = por %p160, %p161
    %p163 = scmp.ne.s32.totalorder %s152, %s153
    %p164 = scmp.eq.s32.totalorder %s15, 0
    %p165 = por %p163, %p164
    %p166 = scmp.ne.s32.totalorder %s152, %s153
    %p167 = scmp.eq.s32.totalorder %s16, 27
    %p168 = por %p166, %p167
    %p170 = scmp.ne.s32.totalorder %s153, %s169
    %p171 = scmp.eq.s32.totalorder %s16, 0
    %p172 = por %p170, %p171
    %p173 = scmp.le.s32.totalorder 1, %s10
    %p174 = scmp.lt.s32.totalorder %s10, 29
    %p175 = pnand %p173, %p174
    %p176 = pneg %p175
    // Predicated region
    $region9: #{tpu_custom_call.1} parent=5 // pred_check
      _
    $region10: #{tpu_custom_call.1} parent=5 // pred_check_branch
      %178 = sbr.rel (%p175) target = $region12
    $region11: #{tpu_custom_call.1} parent=5 // pred_region
      %s179 = ssub.s32 %s10, 1
      // Predicated region
      $region13: #{tpu_custom_call.1} parent=11 // pred_check
        %p180 = pneg %p85
      $region14: #{tpu_custom_call.1} parent=11 // pred_check_branch
        %182 = sbr.rel (%p180) target = $region16
      $region15: #{tpu_custom_call.1} parent=11 // pred_region
        %s183 = smul.u32 19, %s22
        %p184 = scmp.lt.s32.totalorder %s183, 18
        %s185 = scalar_select %p184, %s183, 18
        %p186 = scmp.lt.s32.totalorder %s21, 0
        %s187 = scalar_select %p186, %s21, 0
        %s188 = sadd.s32 %s187, %s185
        %s189 = smul.addr %s188, 4
        %s190 = scalar_lea.vmem %s1, %s189
        %s191 = smul.u32 19, %s22
      $region16: #{tpu_custom_call.1} parent=11 // pred_fallthru
        _
      // Predicated region
      $region17: #{tpu_custom_call.1} parent=11 // pred_check
        %p192 = pneg %p111
      $region18: #{tpu_custom_call.1} parent=11 // pred_check_branch
        %194 = sbr.rel (%p192) target = $region20
      $region19: #{tpu_custom_call.1} parent=11 // pred_region
        %p195 = scmp.lt.s32.totalorder %s21, 0
        %s196 = scalar_select %p195, %s21, 0
        %s197 = scalar_lea.vmem %s2, %s196
      $region20: #{tpu_custom_call.1} parent=11 // pred_fallthru
        _
      // Predicated region
      $region21: #{tpu_custom_call.1} parent=11 // pred_check
        %p198 = pneg %p137
      $region22: #{tpu_custom_call.1} parent=11 // pred_check_branch
        %200 = sbr.rel (%p198) target = $region24
      $region23: #{tpu_custom_call.1} parent=11 // pred_region
        %p201 = scmp.lt.s32.totalorder %s21, 0
        %s202 = scalar_select %p201, %s21, 0
        %s203 = scalar_lea.vmem %s3, %s202
      $region24: #{tpu_custom_call.1} parent=11 // pred_fallthru
        _
    $region12: #{tpu_custom_call.1} parent=5 // pred_fallthru
      _
    %p204 = scmp.lt.s32.totalorder %s10, 28
    // Predicated region
    $region25: #{tpu_custom_call.1} parent=5 // pred_check
      %p205 = pneg %p204
    $region26: #{tpu_custom_call.1} parent=5 // pred_check_branch
      %207 = sbr.rel (%p205) target = $region28
    $region27: #{tpu_custom_call.1} parent=5 // pred_region
      // Predicated region
      $region29: #{tpu_custom_call.1} parent=27 // pred_check
        %p208 = pneg %p51
      $region30: #{tpu_custom_call.1} parent=27 // pred_check_branch
        %210 = sbr.rel (%p208) target = $region32
      $region31: #{tpu_custom_call.1} parent=27 // pred_region
        %s211 = smul.u32 112, %s17
        %s212 = smul.u32 2, %s19
        %p213 = scmp.lt.s32.totalorder %s211, 3135
        %s214 = scalar_select %p213, %s211, 3135
        %p215 = scmp.lt.s32.totalorder %s212, 1
        %s216 = scalar_select %p215, %s212, 1
        %s217 = smul.addr %s214, 2
        %s218 = sadd.s32 %s216, %s217
        %s219 = smul.addr %s218, 4
        %s220 = scalar_lea.vmem %s0, %s219
        %s221 = smul.u32 112, %s17
        %s222 = smul.u32 2, %s19
      $region32: #{tpu_custom_call.1} parent=27 // pred_fallthru
        _
    $region28: #{tpu_custom_call.1} parent=5 // pred_fallthru
      _
    %p223 = scmp.le.s32.totalorder 1, %s10
    %p224 = scmp.lt.s32.totalorder %s10, 29
    %p225 = pnand %p223, %p224
    %p226 = pneg %p225
    // Predicated region
    $region33: #{tpu_custom_call.1} parent=5 // pred_check
      _
    $region34: #{tpu_custom_call.1} parent=5 // pred_check_branch
      %228 = sbr.rel (%p225) target = $region36
    $region35: #{tpu_custom_call.1} parent=5 // pred_region
      %s229 = ssub.s32 %s10, 1
      %s230 = smul.u32 112, %s20
      %s231 = smul.u32 2, %s22
      %p232 = scmp.lt.s32.totalorder %s230, 3135
      %s233 = scalar_select %p232, %s230, 3135
      %p234 = scmp.lt.s32.totalorder %s231, 1
      %s235 = scalar_select %p234, %s231, 1
      %s236 = smul.addr %s233, 2
      %s237 = sadd.s32 %s235, %s236
      %s238 = smul.addr %s237, 4
      %s239 = scalar_lea.vmem %s0, %s238
      %p240 = pneg %p57
      %p241 = pneg %p54
      %s242 = smul.u32 19, %s22
      %p243 = scmp.lt.s32.totalorder %s242, 18
      %s244 = scalar_select %p243, %s242, 18
      %p245 = scmp.lt.s32.totalorder %s21, 0
      %s246 = scalar_select %p245, %s21, 0
      %s247 = sadd.s32 %s246, %s244
      %s248 = smul.addr %s247, 4
      %s249 = scalar_lea.vmem %s1, %s248
      %p250 = pneg %p85
      %p251 = pneg %p82
      %p252 = scmp.lt.s32.totalorder %s21, 0
      %s253 = scalar_select %p252, %s21, 0
      %s254 = scalar_lea.vmem %s2, %s253
      %p255 = pneg %p111
      %p256 = pneg %p108
      %p257 = scmp.lt.s32.totalorder %s21, 0
      %s258 = scalar_select %p257, %s21, 0
      %s259 = scalar_lea.vmem %s3, %s258
      %p260 = pneg %p137
      %p261 = pneg %p134
      %p262 = pneg %p165
      %p263 = pneg %p162
      %s264 = smul.u32 112, %s20
      %p265 = scmp.lt.s32.totalorder %s264, 3135
      %s266 = scalar_select %p265, %s264, 3135
      %p267 = scmp.lt.s32.totalorder %s21, 0
      %s268 = scalar_select %p267, %s21, 0
      %s269 = sadd.s32 %s268, %s266
      %s270 = smul.addr %s269, 4
      %s271 = scalar_lea.vmem %s4, %s270
      %s272 = smul.u32 112, %s20
      %s273 = smul.u32 2, %s22
      %p274 = scmp.lt.s32.totalorder %s272, 3135
      %s275 = scalar_select %p274, %s272, 3135
      %p276 = scmp.lt.s32.totalorder %s273, 1
      %s277 = scalar_select %p276, %s273, 1
      %s278 = smul.addr %s275, 2
      %s279 = sadd.s32 %s277, %s278
      %s280 = smul.addr %s279, 4
      %s281 = scalar_lea.vmem %s0, %s280
      %s282 = smul.u32 112, %s20
      %s283 = smul.u32 2, %s22
      %s284 = smul.u32 19, %s22
      %p285 = scmp.lt.s32.totalorder %s284, 18
      %s286 = scalar_select %p285, %s284, 18
      %p287 = scmp.lt.s32.totalorder %s21, 0
      %s288 = scalar_select %p287, %s21, 0
      %s289 = sadd.s32 %s288, %s286
      %s290 = smul.addr %s289, 4
      %s291 = scalar_lea.vmem %s1, %s290
      %s292 = smul.u32 19, %s22
      %p293 = scmp.lt.s32.totalorder %s21, 0
      %s294 = scalar_select %p293, %s21, 0
      %s295 = scalar_lea.vmem %s2, %s294
      %p296 = scmp.lt.s32.totalorder %s21, 0
      %s297 = scalar_select %p296, %s21, 0
      %s298 = scalar_lea.vmem %s3, %s297
      %s299 = smul.u32 112, %s20
      %p300 = scmp.lt.s32.totalorder %s299, 3135
      %s301 = scalar_select %p300, %s299, 3135
      %p302 = scmp.lt.s32.totalorder %s21, 0
      %s303 = scalar_select %p302, %s21, 0
      %s304 = sadd.s32 %s303, %s301
      %s305 = smul.addr %s304, 4
      %s306 = scalar_lea.vmem %s4, %s305
      %s307 = smul.u32 112, %s20
      %p309 = scmp.eq.s32.totalorder %s22, 0
      // Predicated region
      $region37: #{tpu_custom_call.1} parent=35 // pred_check
        %p310 = pneg %p309
      $region38: #{tpu_custom_call.1} parent=35 // pred_check_branch
        %312 = sbr.rel (%p310) target = $region40
      $region39: #{tpu_custom_call.1} parent=35 // pred_region
        %vm313 = vcmask 523264
        %314 = vst.msk [vmem:[#allocation2] sm:$0xff] %vm313, 0.0
        %315 = vst.msk [vmem:[#allocation2 + $0x8] sm:$0xff] %vm313, 0.0
        %316 = vst.msk [vmem:[#allocation2 + $0x10] sm:$0xff] %vm313, 0.0
        %317 = vst.msk [vmem:[#allocation2 + $0x18] sm:$0xff] %vm313, 0.0
        %318 = vst.msk [vmem:[#allocation2 + $0x20] sm:$0xff] %vm313, 0.0
        %319 = vst.msk [vmem:[#allocation2 + $0x28] sm:$0xff] %vm313, 0.0
        %320 = vst.msk [vmem:[#allocation2 + $0x30] sm:$0xff] %vm313, 0.0
        %321 = vst.msk [vmem:[#allocation2 + $0x38] sm:$0xff] %vm313, 0.0
        %322 = vst.msk [vmem:[#allocation2 + $0x40] sm:$0xff] %vm313, 0.0
        %323 = vst.msk [vmem:[#allocation2 + $0x48] sm:$0xff] %vm313, 0.0
        %324 = vst.msk [vmem:[#allocation2 + $0x50] sm:$0xff] %vm313, 0.0
        %325 = vst.msk [vmem:[#allocation2 + $0x58] sm:$0xff] %vm313, 0.0
        %326 = vst.msk [vmem:[#allocation2 + $0x60] sm:$0xff] %vm313, 0.0
        %327 = vst.msk [vmem:[#allocation2 + $0x68] sm:$0xff] %vm313, 0.0
        %328 = vst.msk [vmem:[#allocation2 + $0x70] sm:$0xff] %vm313, 0.0
        %329 = vst.msk [vmem:[#allocation2 + $0x78] sm:$0xff] %vm313, 0.0
        %330 = vst.msk [vmem:[#allocation2 + $0x80] sm:$0xff] %vm313, 0.0
        %331 = vst.msk [vmem:[#allocation2 + $0x88] sm:$0xff] %vm313, 0.0
        %332 = vst.msk [vmem:[#allocation2 + $0x90] sm:$0xff] %vm313, 0.0
        %333 = vst.msk [vmem:[#allocation2 + $0x98] sm:$0xff] %vm313, 0.0
        %334 = vst.msk [vmem:[#allocation2 + $0xa0] sm:$0xff] %vm313, 0.0
        %335 = vst.msk [vmem:[#allocation2 + $0xa8] sm:$0xff] %vm313, 0.0
        %336 = vst.msk [vmem:[#allocation2 + $0xb0] sm:$0xff] %vm313, 0.0
        %337 = vst.msk [vmem:[#allocation2 + $0xb8] sm:$0xff] %vm313, 0.0
        %338 = vst.msk [vmem:[#allocation2 + $0xc0] sm:$0xff] %vm313, 0.0
        %339 = vst.msk [vmem:[#allocation2 + $0xc8] sm:$0xff] %vm313, 0.0
        %340 = vst.msk [vmem:[#allocation2 + $0xd0] sm:$0xff] %vm313, 0.0
        %341 = vst.msk [vmem:[#allocation2 + $0xd8] sm:$0xff] %vm313, 0.0
        %342 = vst.msk [vmem:[#allocation2 + $0xe0] sm:$0xff] %vm313, 0.0
        %343 = vst.msk [vmem:[#allocation2 + $0xe8] sm:$0xff] %vm313, 0.0
        %344 = vst.msk [vmem:[#allocation2 + $0xf0] sm:$0xff] %vm313, 0.0
        %345 = vst.msk [vmem:[#allocation2 + $0xf8] sm:$0xff] %vm313, 0.0
        %346 = vst.msk [vmem:[#allocation2 + $0x100] sm:$0xff] %vm313, 0.0
        %347 = vst.msk [vmem:[#allocation2 + $0x108] sm:$0xff] %vm313, 0.0
        %348 = vst.msk [vmem:[#allocation2 + $0x110] sm:$0xff] %vm313, 0.0
        %349 = vst.msk [vmem:[#allocation2 + $0x118] sm:$0xff] %vm313, 0.0
        %350 = vst.msk [vmem:[#allocation2 + $0x120] sm:$0xff] %vm313, 0.0
        %351 = vst.msk [vmem:[#allocation2 + $0x128] sm:$0xff] %vm313, 0.0
        %352 = vst.msk [vmem:[#allocation2 + $0x130] sm:$0xff] %vm313, 0.0
        %353 = vst.msk [vmem:[#allocation2 + $0x138] sm:$0xff] %vm313, 0.0
        %354 = vst.msk [vmem:[#allocation2 + $0x140] sm:$0xff] %vm313, 0.0
        %355 = vst.msk [vmem:[#allocation2 + $0x148] sm:$0xff] %vm313, 0.0
        %356 = vst.msk [vmem:[#allocation2 + $0x150] sm:$0xff] %vm313, 0.0
        %357 = vst.msk [vmem:[#allocation2 + $0x158] sm:$0xff] %vm313, 0.0
        %358 = vst.msk [vmem:[#allocation2 + $0x160] sm:$0xff] %vm313, 0.0
        %359 = vst.msk [vmem:[#allocation2 + $0x168] sm:$0xff] %vm313, 0.0
        %360 = vst.msk [vmem:[#allocation2 + $0x170] sm:$0xff] %vm313, 0.0
        %361 = vst.msk [vmem:[#allocation2 + $0x178] sm:$0xff] %vm313, 0.0
        %362 = vst.msk [vmem:[#allocation2 + $0x180] sm:$0xff] %vm313, 0.0
        %363 = vst.msk [vmem:[#allocation2 + $0x188] sm:$0xff] %vm313, 0.0
        %364 = vst.msk [vmem:[#allocation2 + $0x190] sm:$0xff] %vm313, 0.0
        %365 = vst.msk [vmem:[#allocation2 + $0x198] sm:$0xff] %vm313, 0.0
        %366 = vst.msk [vmem:[#allocation2 + $0x1a0] sm:$0xff] %vm313, 0.0
        %367 = vst.msk [vmem:[#allocation2 + $0x1a8] sm:$0xff] %vm313, 0.0
        %368 = vst.msk [vmem:[#allocation2 + $0x1b0] sm:$0xff] %vm313, 0.0
        %369 = vst.msk [vmem:[#allocation2 + $0x1b8] sm:$0xff] %vm313, 0.0
        %370 = vst.msk [vmem:[#allocation2 + $0x1c0] sm:$0xff] %vm313, 0.0
        %371 = vst.msk [vmem:[#allocation2 + $0x1c8] sm:$0xff] %vm313, 0.0
        %372 = vst.msk [vmem:[#allocation2 + $0x1d0] sm:$0xff] %vm313, 0.0
        %373 = vst.msk [vmem:[#allocation2 + $0x1d8] sm:$0xff] %vm313, 0.0
        %374 = vst.msk [vmem:[#allocation2 + $0x1e0] sm:$0xff] %vm313, 0.0
        %375 = vst.msk [vmem:[#allocation2 + $0x1e8] sm:$0xff] %vm313, 0.0
        %376 = vst.msk [vmem:[#allocation2 + $0x1f0] sm:$0xff] %vm313, 0.0
        %377 = vst.msk [vmem:[#allocation2 + $0x1f8] sm:$0xff] %vm313, 0.0
        %378 = vst.msk [vmem:[#allocation2 + $0x200] sm:$0xff] %vm313, 0.0
        %379 = vst.msk [vmem:[#allocation2 + $0x208] sm:$0xff] %vm313, 0.0
        %380 = vst.msk [vmem:[#allocation2 + $0x210] sm:$0xff] %vm313, 0.0
        %381 = vst.msk [vmem:[#allocation2 + $0x218] sm:$0xff] %vm313, 0.0
        %382 = vst.msk [vmem:[#allocation2 + $0x220] sm:$0xff] %vm313, 0.0
        %383 = vst.msk [vmem:[#allocation2 + $0x228] sm:$0xff] %vm313, 0.0
        %384 = vst.msk [vmem:[#allocation2 + $0x230] sm:$0xff] %vm313, 0.0
        %385 = vst.msk [vmem:[#allocation2 + $0x238] sm:$0xff] %vm313, 0.0
        %386 = vst.msk [vmem:[#allocation2 + $0x240] sm:$0xff] %vm313, 0.0
        %387 = vst.msk [vmem:[#allocation2 + $0x248] sm:$0xff] %vm313, 0.0
        %388 = vst.msk [vmem:[#allocation2 + $0x250] sm:$0xff] %vm313, 0.0
        %389 = vst.msk [vmem:[#allocation2 + $0x258] sm:$0xff] %vm313, 0.0
        %390 = vst.msk [vmem:[#allocation2 + $0x260] sm:$0xff] %vm313, 0.0
        %391 = vst.msk [vmem:[#allocation2 + $0x268] sm:$0xff] %vm313, 0.0
        %392 = vst.msk [vmem:[#allocation2 + $0x270] sm:$0xff] %vm313, 0.0
        %393 = vst.msk [vmem:[#allocation2 + $0x278] sm:$0xff] %vm313, 0.0
        %394 = vst.msk [vmem:[#allocation2 + $0x280] sm:$0xff] %vm313, 0.0
        %395 = vst.msk [vmem:[#allocation2 + $0x288] sm:$0xff] %vm313, 0.0
        %396 = vst.msk [vmem:[#allocation2 + $0x290] sm:$0xff] %vm313, 0.0
        %397 = vst.msk [vmem:[#allocation2 + $0x298] sm:$0xff] %vm313, 0.0
        %398 = vst.msk [vmem:[#allocation2 + $0x2a0] sm:$0xff] %vm313, 0.0
        %399 = vst.msk [vmem:[#allocation2 + $0x2a8] sm:$0xff] %vm313, 0.0
        %400 = vst.msk [vmem:[#allocation2 + $0x2b0] sm:$0xff] %vm313, 0.0
        %401 = vst.msk [vmem:[#allocation2 + $0x2b8] sm:$0xff] %vm313, 0.0
        %402 = vst.msk [vmem:[#allocation2 + $0x2c0] sm:$0xff] %vm313, 0.0
        %403 = vst.msk [vmem:[#allocation2 + $0x2c8] sm:$0xff] %vm313, 0.0
        %404 = vst.msk [vmem:[#allocation2 + $0x2d0] sm:$0xff] %vm313, 0.0
        %405 = vst.msk [vmem:[#allocation2 + $0x2d8] sm:$0xff] %vm313, 0.0
        %406 = vst.msk [vmem:[#allocation2 + $0x2e0] sm:$0xff] %vm313, 0.0
        %407 = vst.msk [vmem:[#allocation2 + $0x2e8] sm:$0xff] %vm313, 0.0
        %408 = vst.msk [vmem:[#allocation2 + $0x2f0] sm:$0xff] %vm313, 0.0
        %409 = vst.msk [vmem:[#allocation2 + $0x2f8] sm:$0xff] %vm313, 0.0
        %410 = vst.msk [vmem:[#allocation2 + $0x300] sm:$0xff] %vm313, 0.0
        %411 = vst.msk [vmem:[#allocation2 + $0x308] sm:$0xff] %vm313, 0.0
        %412 = vst.msk [vmem:[#allocation2 + $0x310] sm:$0xff] %vm313, 0.0
        %413 = vst.msk [vmem:[#allocation2 + $0x318] sm:$0xff] %vm313, 0.0
        %414 = vst.msk [vmem:[#allocation2 + $0x320] sm:$0xff] %vm313, 0.0
        %415 = vst.msk [vmem:[#allocation2 + $0x328] sm:$0xff] %vm313, 0.0
        %416 = vst.msk [vmem:[#allocation2 + $0x330] sm:$0xff] %vm313, 0.0
        %417 = vst.msk [vmem:[#allocation2 + $0x338] sm:$0xff] %vm313, 0.0
        %418 = vst.msk [vmem:[#allocation2 + $0x340] sm:$0xff] %vm313, 0.0
        %419 = vst.msk [vmem:[#allocation2 + $0x348] sm:$0xff] %vm313, 0.0
        %420 = vst.msk [vmem:[#allocation2 + $0x350] sm:$0xff] %vm313, 0.0
        %421 = vst.msk [vmem:[#allocation2 + $0x358] sm:$0xff] %vm313, 0.0
        %422 = vst.msk [vmem:[#allocation2 + $0x360] sm:$0xff] %vm313, 0.0
        %423 = vst.msk [vmem:[#allocation2 + $0x368] sm:$0xff] %vm313, 0.0
        %424 = vst.msk [vmem:[#allocation2 + $0x370] sm:$0xff] %vm313, 0.0
        %425 = vst.msk [vmem:[#allocation2 + $0x378] sm:$0xff] %vm313, 0.0
      $region40: #{tpu_custom_call.1} parent=35 // pred_fallthru
        _
      %v426 = vld [vmem:[#allocation2] sm:$0xff]
      %v427 = vld [vmem:[#allocation2 + $0x8] sm:$0xff]
      %v428 = vld [vmem:[#allocation2 + $0x10] sm:$0xff]
      %v429 = vld [vmem:[#allocation2 + $0x18] sm:$0xff]
      %v430 = vld [vmem:[#allocation2 + $0x20] sm:$0xff]
      %v431 = vld [vmem:[#allocation2 + $0x28] sm:$0xff]
      %v432 = vld [vmem:[#allocation2 + $0x30] sm:$0xff]
      %v433 = vld [vmem:[#allocation2 + $0x38] sm:$0xff]
      %v434 = vld [vmem:[#allocation2 + $0x40] sm:$0xff]
      %v435 = vld [vmem:[#allocation2 + $0x48] sm:$0xff]
      %v436 = vld [vmem:[#allocation2 + $0x50] sm:$0xff]
      %v437 = vld [vmem:[#allocation2 + $0x58] sm:$0xff]
      %v438 = vld [vmem:[#allocation2 + $0x60] sm:$0xff]
      %v439 = vld [vmem:[#allocation2 + $0x68] sm:$0xff]
      %v440 = vld [vmem:[#allocation2 + $0x70] sm:$0xff]
      %v441 = vld [vmem:[#allocation2 + $0x78] sm:$0xff]
      %v442 = vld [vmem:[#allocation2 + $0x80] sm:$0xff]
      %v443 = vld [vmem:[#allocation2 + $0x88] sm:$0xff]
      %v444 = vld [vmem:[#allocation2 + $0x90] sm:$0xff]
      %v445 = vld [vmem:[#allocation2 + $0x98] sm:$0xff]
      %v446 = vld [vmem:[#allocation2 + $0xa0] sm:$0xff]
      %v447 = vld [vmem:[#allocation2 + $0xa8] sm:$0xff]
      %v448 = vld [vmem:[#allocation2 + $0xb0] sm:$0xff]
      %v449 = vld [vmem:[#allocation2 + $0xb8] sm:$0xff]
      %v450 = vld [vmem:[#allocation2 + $0xc0] sm:$0xff]
      %v451 = vld [vmem:[#allocation2 + $0xc8] sm:$0xff]
      %v452 = vld [vmem:[#allocation2 + $0xd0] sm:$0xff]
      %v453 = vld [vmem:[#allocation2 + $0xd8] sm:$0xff]
      %v454 = vld [vmem:[#allocation2 + $0xe0] sm:$0xff]
      %v455 = vld [vmem:[#allocation2 + $0xe8] sm:$0xff]
      %v456 = vld [vmem:[#allocation2 + $0xf0] sm:$0xff]
      %v457 = vld [vmem:[#allocation2 + $0xf8] sm:$0xff]
      %v458 = vld [vmem:[#allocation2 + $0x100] sm:$0xff]
      %v459 = vld [vmem:[#allocation2 + $0x108] sm:$0xff]
      %v460 = vld [vmem:[#allocation2 + $0x110] sm:$0xff]
      %v461 = vld [vmem:[#allocation2 + $0x118] sm:$0xff]
      %v462 = vld [vmem:[#allocation2 + $0x120] sm:$0xff]
      %v463 = vld [vmem:[#allocation2 + $0x128] sm:$0xff]
      %v464 = vld [vmem:[#allocation2 + $0x130] sm:$0xff]
      %v465 = vld [vmem:[#allocation2 + $0x138] sm:$0xff]
      %v466 = vld [vmem:[#allocation2 + $0x140] sm:$0xff]
      %v467 = vld [vmem:[#allocation2 + $0x148] sm:$0xff]
      %v468 = vld [vmem:[#allocation2 + $0x150] sm:$0xff]
      %v469 = vld [vmem:[#allocation2 + $0x158] sm:$0xff]
      %v470 = vld [vmem:[#allocation2 + $0x160] sm:$0xff]
      %v471 = vld [vmem:[#allocation2 + $0x168] sm:$0xff]
      %v472 = vld [vmem:[#allocation2 + $0x170] sm:$0xff]
      %v473 = vld [vmem:[#allocation2 + $0x178] sm:$0xff]
      %v474 = vld [vmem:[#allocation2 + $0x180] sm:$0xff]
      %v475 = vld [vmem:[#allocation2 + $0x188] sm:$0xff]
      %v476 = vld [vmem:[#allocation2 + $0x190] sm:$0xff]
      %v477 = vld [vmem:[#allocation2 + $0x198] sm:$0xff]
      %v478 = vld [vmem:[#allocation2 + $0x1a0] sm:$0xff]
      %v479 = vld [vmem:[#allocation2 + $0x1a8] sm:$0xff]
      %v480 = vld [vmem:[#allocation2 + $0x1b0] sm:$0xff]
      %v481 = vld [vmem:[#allocation2 + $0x1b8] sm:$0xff]
      %v482 = vld [vmem:[#allocation2 + $0x1c0] sm:$0xff]
      %v483 = vld [vmem:[#allocation2 + $0x1c8] sm:$0xff]
      %v484 = vld [vmem:[#allocation2 + $0x1d0] sm:$0xff]
      %v485 = vld [vmem:[#allocation2 + $0x1d8] sm:$0xff]
      %v486 = vld [vmem:[#allocation2 + $0x1e0] sm:$0xff]
      %v487 = vld [vmem:[#allocation2 + $0x1e8] sm:$0xff]
      %v488 = vld [vmem:[#allocation2 + $0x1f0] sm:$0xff]
      %v489 = vld [vmem:[#allocation2 + $0x1f8] sm:$0xff]
      %v490 = vld [vmem:[#allocation2 + $0x200] sm:$0xff]
      %v491 = vld [vmem:[#allocation2 + $0x208] sm:$0xff]
      %v492 = vld [vmem:[#allocation2 + $0x210] sm:$0xff]
      %v493 = vld [vmem:[#allocation2 + $0x218] sm:$0xff]
      %v494 = vld [vmem:[#allocation2 + $0x220] sm:$0xff]
      %v495 = vld [vmem:[#allocation2 + $0x228] sm:$0xff]
      %v496 = vld [vmem:[#allocation2 + $0x230] sm:$0xff]
      %v497 = vld [vmem:[#allocation2 + $0x238] sm:$0xff]
      %v498 = vld [vmem:[#allocation2 + $0x240] sm:$0xff]
      %v499 = vld [vmem:[#allocation2 + $0x248] sm:$0xff]
      %v500 = vld [vmem:[#allocation2 + $0x250] sm:$0xff]
      %v501 = vld [vmem:[#allocation2 + $0x258] sm:$0xff]
      %v502 = vld [vmem:[#allocation2 + $0x260] sm:$0xff]
      %v503 = vld [vmem:[#allocation2 + $0x268] sm:$0xff]
      %v504 = vld [vmem:[#allocation2 + $0x270] sm:$0xff]
      %v505 = vld [vmem:[#allocation2 + $0x278] sm:$0xff]
      %v506 = vld [vmem:[#allocation2 + $0x280] sm:$0xff]
      %v507 = vld [vmem:[#allocation2 + $0x288] sm:$0xff]
      %v508 = vld [vmem:[#allocation2 + $0x290] sm:$0xff]
      %v509 = vld [vmem:[#allocation2 + $0x298] sm:$0xff]
      %v510 = vld [vmem:[#allocation2 + $0x2a0] sm:$0xff]
      %v511 = vld [vmem:[#allocation2 + $0x2a8] sm:$0xff]
      %v512 = vld [vmem:[#allocation2 + $0x2b0] sm:$0xff]
      %v513 = vld [vmem:[#allocation2 + $0x2b8] sm:$0xff]
      %v514 = vld [vmem:[#allocation2 + $0x2c0] sm:$0xff]
      %v515 = vld [vmem:[#allocation2 + $0x2c8] sm:$0xff]
      %v516 = vld [vmem:[#allocation2 + $0x2d0] sm:$0xff]
      %v517 = vld [vmem:[#allocation2 + $0x2d8] sm:$0xff]
      %v518 = vld [vmem:[#allocation2 + $0x2e0] sm:$0xff]
      %v519 = vld [vmem:[#allocation2 + $0x2e8] sm:$0xff]
      %v520 = vld [vmem:[#allocation2 + $0x2f0] sm:$0xff]
      %v521 = vld [vmem:[#allocation2 + $0x2f8] sm:$0xff]
      %v522 = vld [vmem:[#allocation2 + $0x300] sm:$0xff]
      %v523 = vld [vmem:[#allocation2 + $0x308] sm:$0xff]
      %v524 = vld [vmem:[#allocation2 + $0x310] sm:$0xff]
      %v525 = vld [vmem:[#allocation2 + $0x318] sm:$0xff]
      %v526 = vld [vmem:[#allocation2 + $0x320] sm:$0xff]
      %v527 = vld [vmem:[#allocation2 + $0x328] sm:$0xff]
      %v528 = vld [vmem:[#allocation2 + $0x330] sm:$0xff]
      %v529 = vld [vmem:[#allocation2 + $0x338] sm:$0xff]
      %v530 = vld [vmem:[#allocation2 + $0x340] sm:$0xff]
      %v531 = vld [vmem:[#allocation2 + $0x348] sm:$0xff]
      %v532 = vld [vmem:[#allocation2 + $0x350] sm:$0xff]
      %v533 = vld [vmem:[#allocation2 + $0x358] sm:$0xff]
      %v534 = vld [vmem:[#allocation2 + $0x360] sm:$0xff]
      %v535 = vld [vmem:[#allocation2 + $0x368] sm:$0xff]
      %v536 = vld [vmem:[#allocation2 + $0x370] sm:$0xff]
      %v537 = vld [vmem:[#allocation2 + $0x378] sm:$0xff]
      %v538 = vld [vmem:[%s281] sm:$0xff]
      %v539 = vld [vmem:[%s281 + $0x8] sm:$0xff]
      %v540 = vld [vmem:[%s281 + $0x10] sm:$0xff]
      %v541 = vld [vmem:[%s281 + $0x18] sm:$0xff]
      %v542 = vld [vmem:[%s281 + $0x20] sm:$0xff]
      %v543 = vld [vmem:[%s281 + $0x28] sm:$0xff]
      %v544 = vld [vmem:[%s281 + $0x30] sm:$0xff]
      %v545 = vld [vmem:[%s281 + $0x38] sm:$0xff]
      %v546 = vld [vmem:[%s281 + $0x40] sm:$0xff]
      %v547 = vld [vmem:[%s281 + $0x48] sm:$0xff]
      %v548 = vld [vmem:[%s281 + $0x50] sm:$0xff]
      %v549 = vld [vmem:[%s281 + $0x58] sm:$0xff]
      %v550 = vld [vmem:[%s281 + $0x60] sm:$0xff]
      %v551 = vld [vmem:[%s281 + $0x68] sm:$0xff]
      %v552 = vld [vmem:[%s281 + $0x70] sm:$0xff]
      %v553 = vld [vmem:[%s281 + $0x78] sm:$0xff]
      %v554 = vld [vmem:[%s281 + $0x80] sm:$0xff]
      %v555 = vld [vmem:[%s281 + $0x88] sm:$0xff]
      %v556 = vld [vmem:[%s281 + $0x90] sm:$0xff]
      %v557 = vld [vmem:[%s281 + $0x98] sm:$0xff]
      %v558 = vld [vmem:[%s281 + $0xa0] sm:$0xff]
      %v559 = vld [vmem:[%s281 + $0xa8] sm:$0xff]
      %v560 = vld [vmem:[%s281 + $0xb0] sm:$0xff]
      %v561 = vld [vmem:[%s281 + $0xb8] sm:$0xff]
      %v562 = vld [vmem:[%s281 + $0xc0] sm:$0xff]
      %v563 = vld [vmem:[%s281 + $0xc8] sm:$0xff]
      %v564 = vld [vmem:[%s281 + $0xd0] sm:$0xff]
      %v565 = vld [vmem:[%s281 + $0xd8] sm:$0xff]
      %v566 = vld [vmem:[%s281 + $0xe0] sm:$0xff]
      %v567 = vld [vmem:[%s281 + $0xe8] sm:$0xff]
      %v568 = vld [vmem:[%s281 + $0xf0] sm:$0xff]
      %v569 = vld [vmem:[%s281 + $0xf8] sm:$0xff]
      %v570 = vld [vmem:[%s281 + $0x100] sm:$0xff]
      %v571 = vld [vmem:[%s281 + $0x108] sm:$0xff]
      %v572 = vld [vmem:[%s281 + $0x110] sm:$0xff]
      %v573 = vld [vmem:[%s281 + $0x118] sm:$0xff]
      %v574 = vld [vmem:[%s281 + $0x120] sm:$0xff]
      %v575 = vld [vmem:[%s281 + $0x128] sm:$0xff]
      %v576 = vld [vmem:[%s281 + $0x130] sm:$0xff]
      %v577 = vld [vmem:[%s281 + $0x138] sm:$0xff]
      %v578 = vld [vmem:[%s281 + $0x140] sm:$0xff]
      %v579 = vld [vmem:[%s281 + $0x148] sm:$0xff]
      %v580 = vld [vmem:[%s281 + $0x150] sm:$0xff]
      %v581 = vld [vmem:[%s281 + $0x158] sm:$0xff]
      %v582 = vld [vmem:[%s281 + $0x160] sm:$0xff]
      %v583 = vld [vmem:[%s281 + $0x168] sm:$0xff]
      %v584 = vld [vmem:[%s281 + $0x170] sm:$0xff]
      %v585 = vld [vmem:[%s281 + $0x178] sm:$0xff]
      %v586 = vld [vmem:[%s281 + $0x180] sm:$0xff]
      %v587 = vld [vmem:[%s281 + $0x188] sm:$0xff]
      %v588 = vld [vmem:[%s281 + $0x190] sm:$0xff]
      %v589 = vld [vmem:[%s281 + $0x198] sm:$0xff]
      %v590 = vld [vmem:[%s281 + $0x1a0] sm:$0xff]
      %v591 = vld [vmem:[%s281 + $0x1a8] sm:$0xff]
      %v592 = vld [vmem:[%s281 + $0x1b0] sm:$0xff]
      %v593 = vld [vmem:[%s281 + $0x1b8] sm:$0xff]
      %v594 = vld [vmem:[%s281 + $0x1c0] sm:$0xff]
      %v595 = vld [vmem:[%s281 + $0x1c8] sm:$0xff]
      %v596 = vld [vmem:[%s281 + $0x1d0] sm:$0xff]
      %v597 = vld [vmem:[%s281 + $0x1d8] sm:$0xff]
      %v598 = vld [vmem:[%s281 + $0x1e0] sm:$0xff]
      %v599 = vld [vmem:[%s281 + $0x1e8] sm:$0xff]
      %v600 = vld [vmem:[%s281 + $0x1f0] sm:$0xff]
      %v601 = vld [vmem:[%s281 + $0x1f8] sm:$0xff]
      %v602 = vld [vmem:[%s281 + $0x200] sm:$0xff]
      %v603 = vld [vmem:[%s281 + $0x208] sm:$0xff]
      %v604 = vld [vmem:[%s281 + $0x210] sm:$0xff]
      %v605 = vld [vmem:[%s281 + $0x218] sm:$0xff]
      %v606 = vld [vmem:[%s281 + $0x220] sm:$0xff]
      %v607 = vld [vmem:[%s281 + $0x228] sm:$0xff]
      %v608 = vld [vmem:[%s281 + $0x230] sm:$0xff]
      %v609 = vld [vmem:[%s281 + $0x238] sm:$0xff]
      %v610 = vld [vmem:[%s281 + $0x240] sm:$0xff]
      %v611 = vld [vmem:[%s281 + $0x248] sm:$0xff]
      %v612 = vld [vmem:[%s281 + $0x250] sm:$0xff]
      %v613 = vld [vmem:[%s281 + $0x258] sm:$0xff]
      %v614 = vld [vmem:[%s281 + $0x260] sm:$0xff]
      %v615 = vld [vmem:[%s281 + $0x268] sm:$0xff]
      %v616 = vld [vmem:[%s281 + $0x270] sm:$0xff]
      %v617 = vld [vmem:[%s281 + $0x278] sm:$0xff]
      %v618 = vld [vmem:[%s281 + $0x280] sm:$0xff]
      %v619 = vld [vmem:[%s281 + $0x288] sm:$0xff]
      %v620 = vld [vmem:[%s281 + $0x290] sm:$0xff]
      %v621 = vld [vmem:[%s281 + $0x298] sm:$0xff]
      %v622 = vld [vmem:[%s281 + $0x2a0] sm:$0xff]
      %v623 = vld [vmem:[%s281 + $0x2a8] sm:$0xff]
      %v624 = vld [vmem:[%s281 + $0x2b0] sm:$0xff]
      %v625 = vld [vmem:[%s281 + $0x2b8] sm:$0xff]
      %v626 = vld [vmem:[%s281 + $0x2c0] sm:$0xff]
      %v627 = vld [vmem:[%s281 + $0x2c8] sm:$0xff]
      %v628 = vld [vmem:[%s281 + $0x2d0] sm:$0xff]
      %v629 = vld [vmem:[%s281 + $0x2d8] sm:$0xff]
      %v630 = vld [vmem:[%s281 + $0x2e0] sm:$0xff]
      %v631 = vld [vmem:[%s281 + $0x2e8] sm:$0xff]
      %v632 = vld [vmem:[%s281 + $0x2f0] sm:$0xff]
      %v633 = vld [vmem:[%s281 + $0x2f8] sm:$0xff]
      %v634 = vld [vmem:[%s281 + $0x300] sm:$0xff]
      %v635 = vld [vmem:[%s281 + $0x308] sm:$0xff]
      %v636 = vld [vmem:[%s281 + $0x310] sm:$0xff]
      %v637 = vld [vmem:[%s281 + $0x318] sm:$0xff]
      %v638 = vld [vmem:[%s281 + $0x320] sm:$0xff]
      %v639 = vld [vmem:[%s281 + $0x328] sm:$0xff]
      %v640 = vld [vmem:[%s281 + $0x330] sm:$0xff]
      %v641 = vld [vmem:[%s281 + $0x338] sm:$0xff]
      %v642 = vld [vmem:[%s281 + $0x340] sm:$0xff]
      %v643 = vld [vmem:[%s281 + $0x348] sm:$0xff]
      %v644 = vld [vmem:[%s281 + $0x350] sm:$0xff]
      %v645 = vld [vmem:[%s281 + $0x358] sm:$0xff]
      %v646 = vld [vmem:[%s281 + $0x360] sm:$0xff]
      %v647 = vld [vmem:[%s281 + $0x368] sm:$0xff]
      %v648 = vld [vmem:[%s281 + $0x370] sm:$0xff]
      %v649 = vld [vmem:[%s281 + $0x378] sm:$0xff]
      %v650 = vld [vmem:[%s291] sm:$0xf]
      %v651 = vld [vmem:[%s291 + $0x4] sm:$0xf]
      %v652 = vld [vmem:[%s291 + $0x8] sm:$0xf]
      %v653 = vld [vmem:[%s291 + $0xc] sm:$0xf]
      %v654 = vld [vmem:[%s291 + $0x10] sm:$0xf]
      %v655 = vld [vmem:[%s291 + $0x14] sm:$0xf]
      %v656 = vld [vmem:[%s291 + $0x18] sm:$0xf]
      %v657 = vld [vmem:[%s291 + $0x1c] sm:$0xf]
      %v658 = vld [vmem:[%s291 + $0x20] sm:$0xf]
      %v659 = vld [vmem:[%s291 + $0x24] sm:$0xf]
      %v660 = vld [vmem:[%s291 + $0x28] sm:$0xf]
      %v661 = vld [vmem:[%s291 + $0x2c] sm:$0xf]
      %v662 = vld [vmem:[%s291 + $0x30] sm:$0xf]
      %v663 = vld [vmem:[%s291 + $0x34] sm:$0xf]
      %v664 = vld [vmem:[%s291 + $0x38] sm:$0xf]
      %v665 = vld [vmem:[%s291 + $0x3c] sm:$0xf]
      %v666 = vld [vmem:[%s291 + $0x40] sm:$0xf]
      %v667 = vld [vmem:[%s291 + $0x44] sm:$0xf]
      %v668 = vld [vmem:[%s291 + $0x48] sm:$0x3]
      %v781 = vunpack.c.l.b16 %v538
      %v782 = vunpack.c.h.b16 %v538
      %v783 = vunpack.c.l.b16 %v539
      %v784 = vunpack.c.h.b16 %v539
      %v785 = vunpack.c.l.b16 %v540
      %v786 = vunpack.c.h.b16 %v540
      %v787 = vunpack.c.l.b16 %v541
      %v788 = vunpack.c.h.b16 %v541
      %v789 = vunpack.c.l.b16 %v542
      %v790 = vunpack.c.h.b16 %v542
      %v791 = vunpack.c.l.b16 %v543
      %v792 = vunpack.c.h.b16 %v543
      %v793 = vunpack.c.l.b16 %v544
      %v794 = vunpack.c.h.b16 %v544
      %v795 = vunpack.c.l.b16 %v545
      %v796 = vunpack.c.h.b16 %v545
      %v797 = vunpack.c.l.b16 %v546
      %v798 = vunpack.c.h.b16 %v546
      %v799 = vunpack.c.l.b16 %v547
      %v800 = vunpack.c.h.b16 %v547
      %v801 = vunpack.c.l.b16 %v548
      %v802 = vunpack.c.h.b16 %v548
      %v803 = vunpack.c.l.b16 %v549
      %v804 = vunpack.c.h.b16 %v549
      %v805 = vunpack.c.l.b16 %v550
      %v806 = vunpack.c.h.b16 %v550
      %v807 = vunpack.c.l.b16 %v551
      %v808 = vunpack.c.h.b16 %v551
      %v809 = vunpack.c.l.b16 %v552
      %v810 = vunpack.c.h.b16 %v552
      %v811 = vunpack.c.l.b16 %v553
      %v812 = vunpack.c.h.b16 %v553
      %v813 = vunpack.c.l.b16 %v554
      %v814 = vunpack.c.h.b16 %v554
      %v815 = vunpack.c.l.b16 %v555
      %v816 = vunpack.c.h.b16 %v555
      %v817 = vunpack.c.l.b16 %v556
      %v818 = vunpack.c.h.b16 %v556
      %v819 = vunpack.c.l.b16 %v557
      %v820 = vunpack.c.h.b16 %v557
      %v821 = vunpack.c.l.b16 %v558
      %v822 = vunpack.c.h.b16 %v558
      %v823 = vunpack.c.l.b16 %v559
      %v824 = vunpack.c.h.b16 %v559
      %v825 = vunpack.c.l.b16 %v560
      %v826 = vunpack.c.h.b16 %v560
      %v827 = vunpack.c.l.b16 %v561
      %v828 = vunpack.c.h.b16 %v561
      %v829 = vunpack.c.l.b16 %v562
      %v830 = vunpack.c.h.b16 %v562
      %v831 = vunpack.c.l.b16 %v563
      %v832 = vunpack.c.h.b16 %v563
      %v833 = vunpack.c.l.b16 %v564
      %v834 = vunpack.c.h.b16 %v564
      %v835 = vunpack.c.l.b16 %v565
      %v836 = vunpack.c.h.b16 %v565
      %v837 = vunpack.c.l.b16 %v566
      %v838 = vunpack.c.h.b16 %v566
      %v839 = vunpack.c.l.b16 %v567
      %v840 = vunpack.c.h.b16 %v567
      %v841 = vunpack.c.l.b16 %v568
      %v842 = vunpack.c.h.b16 %v568
      %v843 = vunpack.c.l.b16 %v569
      %v844 = vunpack.c.h.b16 %v569
      %v845 = vunpack.c.l.b16 %v570
      %v846 = vunpack.c.h.b16 %v570
      %v847 = vunpack.c.l.b16 %v571
      %v848 = vunpack.c.h.b16 %v571
      %v849 = vunpack.c.l.b16 %v572
      %v850 = vunpack.c.h.b16 %v572
      %v851 = vunpack.c.l.b16 %v573
      %v852 = vunpack.c.h.b16 %v573
      %v853 = vunpack.c.l.b16 %v574
      %v854 = vunpack.c.h.b16 %v574
      %v855 = vunpack.c.l.b16 %v575
      %v856 = vunpack.c.h.b16 %v575
      %v857 = vunpack.c.l.b16 %v576
      %v858 = vunpack.c.h.b16 %v576
      %v859 = vunpack.c.l.b16 %v577
      %v860 = vunpack.c.h.b16 %v577
      %v861 = vunpack.c.l.b16 %v578
      %v862 = vunpack.c.h.b16 %v578
      %v863 = vunpack.c.l.b16 %v579
      %v864 = vunpack.c.h.b16 %v579
      %v865 = vunpack.c.l.b16 %v580
      %v866 = vunpack.c.h.b16 %v580
      %v867 = vunpack.c.l.b16 %v581
      %v868 = vunpack.c.h.b16 %v581
      %v869 = vunpack.c.l.b16 %v582
      %v870 = vunpack.c.h.b16 %v582
      %v871 = vunpack.c.l.b16 %v583
      %v872 = vunpack.c.h.b16 %v583
      %v873 = vunpack.c.l.b16 %v584
      %v874 = vunpack.c.h.b16 %v584
      %v875 = vunpack.c.l.b16 %v585
      %v876 = vunpack.c.h.b16 %v585
      %v877 = vunpack.c.l.b16 %v586
      %v878 = vunpack.c.h.b16 %v586
      %v879 = vunpack.c.l.b16 %v587
      %v880 = vunpack.c.h.b16 %v587
      %v881 = vunpack.c.l.b16 %v588
      %v882 = vunpack.c.h.b16 %v588
      %v883 = vunpack.c.l.b16 %v589
      %v884 = vunpack.c.h.b16 %v589
      %v885 = vunpack.c.l.b16 %v590
      %v886 = vunpack.c.h.b16 %v590
      %v887 = vunpack.c.l.b16 %v591
      %v888 = vunpack.c.h.b16 %v591
      %v889 = vunpack.c.l.b16 %v592
      %v890 = vunpack.c.h.b16 %v592
      %v891 = vunpack.c.l.b16 %v593
      %v892 = vunpack.c.h.b16 %v593
      %v893 = vunpack.c.l.b16 %v594
      %v894 = vunpack.c.h.b16 %v594
      %v895 = vunpack.c.l.b16 %v595
      %v896 = vunpack.c.h.b16 %v595
      %v897 = vunpack.c.l.b16 %v596
      %v898 = vunpack.c.h.b16 %v596
      %v899 = vunpack.c.l.b16 %v597
      %v900 = vunpack.c.h.b16 %v597
      %v901 = vunpack.c.l.b16 %v598
      %v902 = vunpack.c.h.b16 %v598
      %v903 = vunpack.c.l.b16 %v599
      %v904 = vunpack.c.h.b16 %v599
      %v905 = vunpack.c.l.b16 %v600
      %v906 = vunpack.c.h.b16 %v600
      %v907 = vunpack.c.l.b16 %v601
      %v908 = vunpack.c.h.b16 %v601
      %v909 = vunpack.c.l.b16 %v602
      %v910 = vunpack.c.h.b16 %v602
      %v911 = vunpack.c.l.b16 %v603
      %v912 = vunpack.c.h.b16 %v603
      %v913 = vunpack.c.l.b16 %v604
      %v914 = vunpack.c.h.b16 %v604
      %v915 = vunpack.c.l.b16 %v605
      %v916 = vunpack.c.h.b16 %v605
      %v917 = vunpack.c.l.b16 %v606
      %v918 = vunpack.c.h.b16 %v606
      %v919 = vunpack.c.l.b16 %v607
      %v920 = vunpack.c.h.b16 %v607
      %v921 = vunpack.c.l.b16 %v608
      %v922 = vunpack.c.h.b16 %v608
      %v923 = vunpack.c.l.b16 %v609
      %v924 = vunpack.c.h.b16 %v609
      %v925 = vunpack.c.l.b16 %v610
      %v926 = vunpack.c.h.b16 %v610
      %v927 = vunpack.c.l.b16 %v611
      %v928 = vunpack.c.h.b16 %v611
      %v929 = vunpack.c.l.b16 %v612
      %v930 = vunpack.c.h.b16 %v612
      %v931 = vunpack.c.l.b16 %v613
      %v932 = vunpack.c.h.b16 %v613
      %v933 = vunpack.c.l.b16 %v614
      %v934 = vunpack.c.h.b16 %v614
      %v935 = vunpack.c.l.b16 %v615
      %v936 = vunpack.c.h.b16 %v615
      %v937 = vunpack.c.l.b16 %v616
      %v938 = vunpack.c.h.b16 %v616
      %v939 = vunpack.c.l.b16 %v617
      %v940 = vunpack.c.h.b16 %v617
      %v941 = vunpack.c.l.b16 %v618
      %v942 = vunpack.c.h.b16 %v618
      %v943 = vunpack.c.l.b16 %v619
      %v944 = vunpack.c.h.b16 %v619
      %v945 = vunpack.c.l.b16 %v620
      %v946 = vunpack.c.h.b16 %v620
      %v947 = vunpack.c.l.b16 %v621
      %v948 = vunpack.c.h.b16 %v621
      %v949 = vunpack.c.l.b16 %v622
      %v950 = vunpack.c.h.b16 %v622
      %v951 = vunpack.c.l.b16 %v623
      %v952 = vunpack.c.h.b16 %v623
      %v953 = vunpack.c.l.b16 %v624
      %v954 = vunpack.c.h.b16 %v624
      %v955 = vunpack.c.l.b16 %v625
      %v956 = vunpack.c.h.b16 %v625
      %v957 = vunpack.c.l.b16 %v626
      %v958 = vunpack.c.h.b16 %v626
      %v959 = vunpack.c.l.b16 %v627
      %v960 = vunpack.c.h.b16 %v627
      %v961 = vunpack.c.l.b16 %v628
      %v962 = vunpack.c.h.b16 %v628
      %v963 = vunpack.c.l.b16 %v629
      %v964 = vunpack.c.h.b16 %v629
      %v965 = vunpack.c.l.b16 %v630
      %v966 = vunpack.c.h.b16 %v630
      %v967 = vunpack.c.l.b16 %v631
      %v968 = vunpack.c.h.b16 %v631
      %v969 = vunpack.c.l.b16 %v632
      %v970 = vunpack.c.h.b16 %v632
      %v971 = vunpack.c.l.b16 %v633
      %v972 = vunpack.c.h.b16 %v633
      %v973 = vunpack.c.l.b16 %v634
      %v974 = vunpack.c.h.b16 %v634
      %v975 = vunpack.c.l.b16 %v635
      %v976 = vunpack.c.h.b16 %v635
      %v977 = vunpack.c.l.b16 %v636
      %v978 = vunpack.c.h.b16 %v636
      %v979 = vunpack.c.l.b16 %v637
      %v980 = vunpack.c.h.b16 %v637
      %v981 = vunpack.c.l.b16 %v638
      %v982 = vunpack.c.h.b16 %v638
      %v983 = vunpack.c.l.b16 %v639
      %v984 = vunpack.c.h.b16 %v639
      %v985 = vunpack.c.l.b16 %v640
      %v986 = vunpack.c.h.b16 %v640
      %v987 = vunpack.c.l.b16 %v641
      %v988 = vunpack.c.h.b16 %v641
      %v989 = vunpack.c.l.b16 %v642
      %v990 = vunpack.c.h.b16 %v642
      %v991 = vunpack.c.l.b16 %v643
      %v992 = vunpack.c.h.b16 %v643
      %v993 = vunpack.c.l.b16 %v644
      %v994 = vunpack.c.h.b16 %v644
      %v995 = vunpack.c.l.b16 %v645
      %v996 = vunpack.c.h.b16 %v645
      %v997 = vunpack.c.l.b16 %v646
      %v998 = vunpack.c.h.b16 %v646
      %v999 = vunpack.c.l.b16 %v647
      %v1000 = vunpack.c.h.b16 %v647
      %v1001 = vunpack.c.l.b16 %v648
      %v1002 = vunpack.c.h.b16 %v648
      %v1003 = vunpack.c.l.b16 %v649
      %v1004 = vunpack.c.h.b16 %v649
      %v1005 = vpack.c.b16 %v783, %v781
      %v1006 = vpack.c.b16 %v784, %v782
      %v1007 = vpack.c.b16 %v787, %v785
      %v1008 = vpack.c.b16 %v788, %v786
      %v1009 = vpack.c.b16 %v791, %v789
      %v1010 = vpack.c.b16 %v792, %v790
      %v1011 = vpack.c.b16 %v795, %v793
      %v1012 = vpack.c.b16 %v796, %v794
      %v1013 = vpack.c.b16 %v799, %v797
      %v1014 = vpack.c.b16 %v800, %v798
      %v1015 = vpack.c.b16 %v803, %v801
      %v1016 = vpack.c.b16 %v804, %v802
      %v1017 = vpack.c.b16 %v807, %v805
      %v1018 = vpack.c.b16 %v808, %v806
      %v1019 = vpack.c.b16 %v811, %v809
      %v1020 = vpack.c.b16 %v812, %v810
      %v1021 = vpack.c.b16 %v815, %v813
      %v1022 = vpack.c.b16 %v816, %v814
      %v1023 = vpack.c.b16 %v819, %v817
      %v1024 = vpack.c.b16 %v820, %v818
      %v1025 = vpack.c.b16 %v823, %v821
      %v1026 = vpack.c.b16 %v824, %v822
      %v1027 = vpack.c.b16 %v827, %v825
      %v1028 = vpack.c.b16 %v828, %v826
      %v1029 = vpack.c.b16 %v831, %v829
      %v1030 = vpack.c.b16 %v832, %v830
      %v1031 = vpack.c.b16 %v835, %v833
      %v1032 = vpack.c.b16 %v836, %v834
      %v1033 = vpack.c.b16 %v839, %v837
      %v1034 = vpack.c.b16 %v840, %v838
      %v1035 = vpack.c.b16 %v843, %v841
      %v1036 = vpack.c.b16 %v844, %v842
      %v1037 = vpack.c.b16 %v847, %v845
      %v1038 = vpack.c.b16 %v848, %v846
      %v1039 = vpack.c.b16 %v851, %v849
      %v1040 = vpack.c.b16 %v852, %v850
      %v1041 = vpack.c.b16 %v855, %v853
      %v1042 = vpack.c.b16 %v856, %v854
      %v1043 = vpack.c.b16 %v859, %v857
      %v1044 = vpack.c.b16 %v860, %v858
      %v1045 = vpack.c.b16 %v863, %v861
      %v1046 = vpack.c.b16 %v864, %v862
      %v1047 = vpack.c.b16 %v867, %v865
      %v1048 = vpack.c.b16 %v868, %v866
      %v1049 = vpack.c.b16 %v871, %v869
      %v1050 = vpack.c.b16 %v872, %v870
      %v1051 = vpack.c.b16 %v875, %v873
      %v1052 = vpack.c.b16 %v876, %v874
      %v1053 = vpack.c.b16 %v879, %v877
      %v1054 = vpack.c.b16 %v880, %v878
      %v1055 = vpack.c.b16 %v883, %v881
      %v1056 = vpack.c.b16 %v884, %v882
      %v1057 = vpack.c.b16 %v887, %v885
      %v1058 = vpack.c.b16 %v888, %v886
      %v1059 = vpack.c.b16 %v891, %v889
      %v1060 = vpack.c.b16 %v892, %v890
      %v1061 = vpack.c.b16 %v895, %v893
      %v1062 = vpack.c.b16 %v896, %v894
      %v1063 = vpack.c.b16 %v899, %v897
      %v1064 = vpack.c.b16 %v900, %v898
      %v1065 = vpack.c.b16 %v903, %v901
      %v1066 = vpack.c.b16 %v904, %v902
      %v1067 = vpack.c.b16 %v907, %v905
      %v1068 = vpack.c.b16 %v908, %v906
      %v1069 = vpack.c.b16 %v911, %v909
      %v1070 = vpack.c.b16 %v912, %v910
      %v1071 = vpack.c.b16 %v915, %v913
      %v1072 = vpack.c.b16 %v916, %v914
      %v1073 = vpack.c.b16 %v919, %v917
      %v1074 = vpack.c.b16 %v920, %v918
      %v1075 = vpack.c.b16 %v923, %v921
      %v1076 = vpack.c.b16 %v924, %v922
      %v1077 = vpack.c.b16 %v927, %v925
      %v1078 = vpack.c.b16 %v928, %v926
      %v1079 = vpack.c.b16 %v931, %v929
      %v1080 = vpack.c.b16 %v932, %v930
      %v1081 = vpack.c.b16 %v935, %v933
      %v1082 = vpack.c.b16 %v936, %v934
      %v1083 = vpack.c.b16 %v939, %v937
      %v1084 = vpack.c.b16 %v940, %v938
      %v1085 = vpack.c.b16 %v943, %v941
      %v1086 = vpack.c.b16 %v944, %v942
      %v1087 = vpack.c.b16 %v947, %v945
      %v1088 = vpack.c.b16 %v948, %v946
      %v1089 = vpack.c.b16 %v951, %v949
      %v1090 = vpack.c.b16 %v952, %v950
      %v1091 = vpack.c.b16 %v955, %v953
      %v1092 = vpack.c.b16 %v956, %v954
      %v1093 = vpack.c.b16 %v959, %v957
      %v1094 = vpack.c.b16 %v960, %v958
      %v1095 = vpack.c.b16 %v963, %v961
      %v1096 = vpack.c.b16 %v964, %v962
      %v1097 = vpack.c.b16 %v967, %v965
      %v1098 = vpack.c.b16 %v968, %v966
      %v1099 = vpack.c.b16 %v971, %v969
      %v1100 = vpack.c.b16 %v972, %v970
      %v1101 = vpack.c.b16 %v975, %v973
      %v1102 = vpack.c.b16 %v976, %v974
      %v1103 = vpack.c.b16 %v979, %v977
      %v1104 = vpack.c.b16 %v980, %v978
      %v1105 = vpack.c.b16 %v983, %v981
      %v1106 = vpack.c.b16 %v984, %v982
      %v1107 = vpack.c.b16 %v987, %v985
      %v1108 = vpack.c.b16 %v988, %v986
      %v1109 = vpack.c.b16 %v991, %v989
      %v1110 = vpack.c.b16 %v992, %v990
      %v1111 = vpack.c.b16 %v995, %v993
      %v1112 = vpack.c.b16 %v996, %v994
      %v1113 = vpack.c.b16 %v999, %v997
      %v1114 = vpack.c.b16 %v1000, %v998
      %v1115 = vpack.c.b16 %v1003, %v1001
      %v1116 = vpack.c.b16 %v1004, %v1002
      %v1192 = vunpack.c.l.b16 %v650
      %v1193 = vunpack.c.l.b16 %v651
      %v1194 = vunpack.c.l.b16 %v652
      %v1195 = vunpack.c.l.b16 %v653
      %v1196 = vunpack.c.l.b16 %v654
      %v1197 = vunpack.c.l.b16 %v655
      %v1198 = vunpack.c.l.b16 %v656
      %v1199 = vunpack.c.l.b16 %v657
      %v1200 = vunpack.c.l.b16 %v658
      %v1201 = vunpack.c.l.b16 %v659
      %v1202 = vunpack.c.l.b16 %v660
      %v1203 = vunpack.c.l.b16 %v661
      %v1204 = vunpack.c.l.b16 %v662
      %v1205 = vunpack.c.l.b16 %v663
      %v1206 = vunpack.c.l.b16 %v664
      %v1207 = vunpack.c.l.b16 %v665
      %v1208 = vunpack.c.l.b16 %v666
      %v1209 = vunpack.c.l.b16 %v667
      %v1210 = vunpack.c.l.b16 %v668
      %v1211 = vpack.c.b16 %v1193, %v1192
      %v1212 = vpack.c.b16 %v1195, %v1194
      %v1213 = vpack.c.b16 %v1197, %v1196
      %v1214 = vpack.c.b16 %v1199, %v1198
      %v1215 = vpack.c.b16 %v1201, %v1200
      %v1216 = vpack.c.b16 %v1203, %v1202
      %v1217 = vpack.c.b16 %v1205, %v1204
      %v1218 = vpack.c.b16 %v1207, %v1206
      %v1219 = vpack.c.b16 %v1209, %v1208
      %v1220 = vpack.c.b16 %v1210, %v1210
      %vm1230 = vcmask 154624
      %v1232 = vsel %vm1230, %v1006, 0
      %v1235 = vsel %vm1230, %v1008, 0
      %v1238 = vsel %vm1230, %v1010, 0
      %v1241 = vsel %vm1230, %v1012, 0
      %v1244 = vsel %vm1230, %v1014, 0
      %v1247 = vsel %vm1230, %v1016, 0
      %v1250 = vsel %vm1230, %v1018, 0
      %v1253 = vsel %vm1230, %v1020, 0
      %v1256 = vsel %vm1230, %v1022, 0
      %v1259 = vsel %vm1230, %v1024, 0
      %v1262 = vsel %vm1230, %v1026, 0
      %v1265 = vsel %vm1230, %v1028, 0
      %v1268 = vsel %vm1230, %v1030, 0
      %v1271 = vsel %vm1230, %v1032, 0
      %v1274 = vsel %vm1230, %v1034, 0
      %v1277 = vsel %vm1230, %v1036, 0
      %v1280 = vsel %vm1230, %v1038, 0
      %v1283 = vsel %vm1230, %v1040, 0
      %v1286 = vsel %vm1230, %v1042, 0
      %v1289 = vsel %vm1230, %v1044, 0
      %v1292 = vsel %vm1230, %v1046, 0
      %v1295 = vsel %vm1230, %v1048, 0
      %v1298 = vsel %vm1230, %v1050, 0
      %v1301 = vsel %vm1230, %v1052, 0
      %v1304 = vsel %vm1230, %v1054, 0
      %v1307 = vsel %vm1230, %v1056, 0
      %v1310 = vsel %vm1230, %v1058, 0
      %v1313 = vsel %vm1230, %v1060, 0
      %v1316 = vsel %vm1230, %v1062, 0
      %v1319 = vsel %vm1230, %v1064, 0
      %v1322 = vsel %vm1230, %v1066, 0
      %v1325 = vsel %vm1230, %v1068, 0
      %v1328 = vsel %vm1230, %v1070, 0
      %v1331 = vsel %vm1230, %v1072, 0
      %v1334 = vsel %vm1230, %v1074, 0
      %v1337 = vsel %vm1230, %v1076, 0
      %v1340 = vsel %vm1230, %v1078, 0
      %v1343 = vsel %vm1230, %v1080, 0
      %v1346 = vsel %vm1230, %v1082, 0
      %v1349 = vsel %vm1230, %v1084, 0
      %v1352 = vsel %vm1230, %v1086, 0
      %v1355 = vsel %vm1230, %v1088, 0
      %v1358 = vsel %vm1230, %v1090, 0
      %v1361 = vsel %vm1230, %v1092, 0
      %v1364 = vsel %vm1230, %v1094, 0
      %v1367 = vsel %vm1230, %v1096, 0
      %v1370 = vsel %vm1230, %v1098, 0
      %v1373 = vsel %vm1230, %v1100, 0
      %v1376 = vsel %vm1230, %v1102, 0
      %v1379 = vsel %vm1230, %v1104, 0
      %v1382 = vsel %vm1230, %v1106, 0
      %v1385 = vsel %vm1230, %v1108, 0
      %v1388 = vsel %vm1230, %v1110, 0
      %v1391 = vsel %vm1230, %v1112, 0
      %v1394 = vsel %vm1230, %v1114, 0
      %v1397 = vsel %vm1230, %v1116, 0
      %vm1399 = vcmask 1040384
      %vm1400 = vcmask 1041408
      %v1401 = vsel %vm1399, 4294967295, 65535
      %v1402 = vsel %vm1400, %v1401, 0
      %v1404 = vand.u32 %v1220, %v1402
      %1406 = vmatprep.subr.bf16.mxu0 0
      %1407 = vmatpush1.bf16.msra.mxu0 %v1218
      %1408 = vmatprep.subr.bf16.mxu0 0
      %1409 = vmatpush1.bf16.msra.mxu0 %v1217
      %1410 = vmatprep.subr.bf16.mxu0 0
      %1411 = vmatpush1.bf16.msra.mxu0 %v1216
      %1412 = vmatprep.subr.bf16.mxu0 0
      %1413 = vmatpush1.bf16.msra.mxu0 %v1215
      %1414 = vmatprep.subr.bf16.mxu0 0
      %1415 = vmatpush1.bf16.msra.mxu0 %v1214
      %1416 = vmatprep.subr.bf16.mxu0 0
      %1417 = vmatpush1.bf16.msra.mxu0 %v1213
      %1418 = vmatprep.subr.bf16.mxu0 0
      %1419 = vmatpush1.bf16.msra.mxu0 %v1212
      %1420 = vmatprep.subr.bf16.mxu0 0
      %1421 = vmatpush1.bf16.msra.mxu0 %v1211
      %1422 = vmatprep.subr.bf16.mxu0 0
      %1423 = vmatpush2.bf16.msra.mxu0 0
      %1424 = vmatprep.subr.bf16.mxu0 0
      %1425 = vmatpush2.bf16.msra.mxu0 0
      %1426 = vmatprep.subr.bf16.mxu0 0
      %1427 = vmatpush2.bf16.msra.mxu0 0
      %1428 = vmatprep.subr.bf16.mxu0 0
      %1429 = vmatpush2.bf16.msra.mxu0 0
      %1430 = vmatprep.subr.bf16.mxu0 0
      %1431 = vmatpush2.bf16.msra.mxu0 0
      %1432 = vmatprep.subr.bf16.mxu0 0
      %1433 = vmatpush2.bf16.msra.mxu0 0
      %1434 = vmatprep.subr.bf16.mxu0 0
      %1435 = vmatpush2.bf16.msra.mxu0 %v1404
      %1436 = vmatprep.subr.bf16.mxu0 0
      %1437 = vmatpush2.bf16.msra.mxu0 %v1219
      %1438 = vmatprep.mubr.bf16.mxu0 %v1232
      %1439 = vmatmul.mubr.bf16.gmra.mxu0 %v1005
      %v1440 = vpop.f32.mrf.mxu0
      %v1441 = vadd.f32 0.0, %v1440
      %v1442 = vpop.f32.mrf.mxu0
      %v1443 = vpop.f32.mrf.mxu0
      %v1444 = vadd.f32 0.0, %v1443
      %v1445 = vpop.f32.mrf.mxu0
      %1446 = vmatprep.mubr.bf16.mxu0 %v1235
      %1447 = vmatmul.mubr.bf16.gmra.mxu0 %v1007
      %v1448 = vpop.f32.mrf.mxu0
      %v1449 = vadd.f32 0.0, %v1448
      %v1450 = vpop.f32.mrf.mxu0
      %v1451 = vpop.f32.mrf.mxu0
      %v1452 = vadd.f32 0.0, %v1451
      %v1453 = vpop.f32.mrf.mxu0
      %1454 = vmatprep.mubr.bf16.mxu0 %v1238
      %1455 = vmatmul.mubr.bf16.gmra.mxu0 %v1009
      %v1456 = vpop.f32.mrf.mxu0
      %v1457 = vadd.f32 0.0, %v1456
      %v1458 = vpop.f32.mrf.mxu0
      %v1459 = vpop.f32.mrf.mxu0
      %v1460 = vadd.f32 0.0, %v1459
      %v1461 = vpop.f32.mrf.mxu0
      %1462 = vmatprep.mubr.bf16.mxu0 %v1241
      %1463 = vmatmul.mubr.bf16.gmra.mxu0 %v1011
      %v1464 = vpop.f32.mrf.mxu0
      %v1465 = vadd.f32 0.0, %v1464
      %v1466 = vpop.f32.mrf.mxu0
      %v1467 = vpop.f32.mrf.mxu0
      %v1468 = vadd.f32 0.0, %v1467
      %v1469 = vpop.f32.mrf.mxu0
      %1470 = vmatprep.mubr.bf16.mxu0 %v1244
      %1471 = vmatmul.mubr.bf16.gmra.mxu0 %v1013
      %v1472 = vpop.f32.mrf.mxu0
      %v1473 = vadd.f32 0.0, %v1472
      %v1474 = vpop.f32.mrf.mxu0
      %v1475 = vpop.f32.mrf.mxu0
      %v1476 = vadd.f32 0.0, %v1475
      %v1477 = vpop.f32.mrf.mxu0
      %1478 = vmatprep.mubr.bf16.mxu0 %v1247
      %1479 = vmatmul.mubr.bf16.gmra.mxu0 %v1015
      %v1480 = vpop.f32.mrf.mxu0
      %v1481 = vadd.f32 0.0, %v1480
      %v1482 = vpop.f32.mrf.mxu0
      %v1483 = vpop.f32.mrf.mxu0
      %v1484 = vadd.f32 0.0, %v1483
      %v1485 = vpop.f32.mrf.mxu0
      %1486 = vmatprep.mubr.bf16.mxu0 %v1250
      %1487 = vmatmul.mubr.bf16.gmra.mxu0 %v1017
      %v1488 = vpop.f32.mrf.mxu0
      %v1489 = vadd.f32 0.0, %v1488
      %v1490 = vpop.f32.mrf.mxu0
      %v1491 = vpop.f32.mrf.mxu0
      %v1492 = vadd.f32 0.0, %v1491
      %v1493 = vpop.f32.mrf.mxu0
      %1494 = vmatprep.mubr.bf16.mxu0 %v1253
      %1495 = vmatmul.mubr.bf16.gmra.mxu0 %v1019
      %v1496 = vpop.f32.mrf.mxu0
      %v1497 = vadd.f32 0.0, %v1496
      %v1498 = vpop.f32.mrf.mxu0
      %v1499 = vpop.f32.mrf.mxu0
      %v1500 = vadd.f32 0.0, %v1499
      %v1501 = vpop.f32.mrf.mxu0
      %1502 = vmatprep.mubr.bf16.mxu0 %v1256
      %1503 = vmatmul.mubr.bf16.gmra.mxu0 %v1021
      %v1504 = vpop.f32.mrf.mxu0
      %v1505 = vadd.f32 0.0, %v1504
      %v1506 = vpop.f32.mrf.mxu0
      %v1507 = vpop.f32.mrf.mxu0
      %v1508 = vadd.f32 0.0, %v1507
      %v1509 = vpop.f32.mrf.mxu0
      %1510 = vmatprep.mubr.bf16.mxu0 %v1259
      %1511 = vmatmul.mubr.bf16.gmra.mxu0 %v1023
      %v1512 = vpop.f32.mrf.mxu0
      %v1513 = vadd.f32 0.0, %v1512
      %v1514 = vpop.f32.mrf.mxu0
      %v1515 = vpop.f32.mrf.mxu0
      %v1516 = vadd.f32 0.0, %v1515
      %v1517 = vpop.f32.mrf.mxu0
      %1518 = vmatprep.mubr.bf16.mxu0 %v1262
      %1519 = vmatmul.mubr.bf16.gmra.mxu0 %v1025
      %v1520 = vpop.f32.mrf.mxu0
      %v1521 = vadd.f32 0.0, %v1520
      %v1522 = vpop.f32.mrf.mxu0
      %v1523 = vpop.f32.mrf.mxu0
      %v1524 = vadd.f32 0.0, %v1523
      %v1525 = vpop.f32.mrf.mxu0
      %1526 = vmatprep.mubr.bf16.mxu0 %v1265
      %1527 = vmatmul.mubr.bf16.gmra.mxu0 %v1027
      %v1528 = vpop.f32.mrf.mxu0
      %v1529 = vadd.f32 0.0, %v1528
      %v1530 = vpop.f32.mrf.mxu0
      %v1531 = vpop.f32.mrf.mxu0
      %v1532 = vadd.f32 0.0, %v1531
      %v1533 = vpop.f32.mrf.mxu0
      %1534 = vmatprep.mubr.bf16.mxu0 %v1268
      %1535 = vmatmul.mubr.bf16.gmra.mxu0 %v1029
      %v1536 = vpop.f32.mrf.mxu0
      %v1537 = vadd.f32 0.0, %v1536
      %v1538 = vpop.f32.mrf.mxu0
      %v1539 = vpop.f32.mrf.mxu0
      %v1540 = vadd.f32 0.0, %v1539
      %v1541 = vpop.f32.mrf.mxu0
      %1542 = vmatprep.mubr.bf16.mxu0 %v1271
      %1543 = vmatmul.mubr.bf16.gmra.mxu0 %v1031
      %v1544 = vpop.f32.mrf.mxu0
      %v1545 = vadd.f32 0.0, %v1544
      %v1546 = vpop.f32.mrf.mxu0
      %v1547 = vpop.f32.mrf.mxu0
      %v1548 = vadd.f32 0.0, %v1547
      %v1549 = vpop.f32.mrf.mxu0
      %1550 = vmatprep.mubr.bf16.mxu0 %v1274
      %1551 = vmatmul.mubr.bf16.gmra.mxu0 %v1033
      %v1552 = vpop.f32.mrf.mxu0
      %v1553 = vadd.f32 0.0, %v1552
      %v1554 = vpop.f32.mrf.mxu0
      %v1555 = vpop.f32.mrf.mxu0
      %v1556 = vadd.f32 0.0, %v1555
      %v1557 = vpop.f32.mrf.mxu0
      %1558 = vmatprep.mubr.bf16.mxu0 %v1277
      %1559 = vmatmul.mubr.bf16.gmra.mxu0 %v1035
      %v1560 = vpop.f32.mrf.mxu0
      %v1561 = vadd.f32 0.0, %v1560
      %v1562 = vpop.f32.mrf.mxu0
      %v1563 = vpop.f32.mrf.mxu0
      %v1564 = vadd.f32 0.0, %v1563
      %v1565 = vpop.f32.mrf.mxu0
      %1566 = vmatprep.mubr.bf16.mxu0 %v1280
      %1567 = vmatmul.mubr.bf16.gmra.mxu0 %v1037
      %v1568 = vpop.f32.mrf.mxu0
      %v1569 = vadd.f32 0.0, %v1568
      %v1570 = vpop.f32.mrf.mxu0
      %v1571 = vpop.f32.mrf.mxu0
      %v1572 = vadd.f32 0.0, %v1571
      %v1573 = vpop.f32.mrf.mxu0
      %1574 = vmatprep.mubr.bf16.mxu0 %v1283
      %1575 = vmatmul.mubr.bf16.gmra.mxu0 %v1039
      %v1576 = vpop.f32.mrf.mxu0
      %v1577 = vadd.f32 0.0, %v1576
      %v1578 = vpop.f32.mrf.mxu0
      %v1579 = vpop.f32.mrf.mxu0
      %v1580 = vadd.f32 0.0, %v1579
      %v1581 = vpop.f32.mrf.mxu0
      %1582 = vmatprep.mubr.bf16.mxu0 %v1286
      %1583 = vmatmul.mubr.bf16.gmra.mxu0 %v1041
      %v1584 = vpop.f32.mrf.mxu0
      %v1585 = vadd.f32 0.0, %v1584
      %v1586 = vpop.f32.mrf.mxu0
      %v1587 = vpop.f32.mrf.mxu0
      %v1588 = vadd.f32 0.0, %v1587
      %v1589 = vpop.f32.mrf.mxu0
      %1590 = vmatprep.mubr.bf16.mxu0 %v1289
      %1591 = vmatmul.mubr.bf16.gmra.mxu0 %v1043
      %v1592 = vpop.f32.mrf.mxu0
      %v1593 = vadd.f32 0.0, %v1592
      %v1594 = vpop.f32.mrf.mxu0
      %v1595 = vpop.f32.mrf.mxu0
      %v1596 = vadd.f32 0.0, %v1595
      %v1597 = vpop.f32.mrf.mxu0
      %1598 = vmatprep.mubr.bf16.mxu0 %v1292
      %1599 = vmatmul.mubr.bf16.gmra.mxu0 %v1045
      %v1600 = vpop.f32.mrf.mxu0
      %v1601 = vadd.f32 0.0, %v1600
      %v1602 = vpop.f32.mrf.mxu0
      %v1603 = vpop.f32.mrf.mxu0
      %v1604 = vadd.f32 0.0, %v1603
      %v1605 = vpop.f32.mrf.mxu0
      %1606 = vmatprep.mubr.bf16.mxu0 %v1295
      %1607 = vmatmul.mubr.bf16.gmra.mxu0 %v1047
      %v1608 = vpop.f32.mrf.mxu0
      %v1609 = vadd.f32 0.0, %v1608
      %v1610 = vpop.f32.mrf.mxu0
      %v1611 = vpop.f32.mrf.mxu0
      %v1612 = vadd.f32 0.0, %v1611
      %v1613 = vpop.f32.mrf.mxu0
      %1614 = vmatprep.mubr.bf16.mxu0 %v1298
      %1615 = vmatmul.mubr.bf16.gmra.mxu0 %v1049
      %v1616 = vpop.f32.mrf.mxu0
      %v1617 = vadd.f32 0.0, %v1616
      %v1618 = vpop.f32.mrf.mxu0
      %v1619 = vpop.f32.mrf.mxu0
      %v1620 = vadd.f32 0.0, %v1619
      %v1621 = vpop.f32.mrf.mxu0
      %1622 = vmatprep.mubr.bf16.mxu0 %v1301
      %1623 = vmatmul.mubr.bf16.gmra.mxu0 %v1051
      %v1624 = vpop.f32.mrf.mxu0
      %v1625 = vadd.f32 0.0, %v1624
      %v1626 = vpop.f32.mrf.mxu0
      %v1627 = vpop.f32.mrf.mxu0
      %v1628 = vadd.f32 0.0, %v1627
      %v1629 = vpop.f32.mrf.mxu0
      %1630 = vmatprep.mubr.bf16.mxu0 %v1304
      %1631 = vmatmul.mubr.bf16.gmra.mxu0 %v1053
      %v1632 = vpop.f32.mrf.mxu0
      %v1633 = vadd.f32 0.0, %v1632
      %v1634 = vpop.f32.mrf.mxu0
      %v1635 = vpop.f32.mrf.mxu0
      %v1636 = vadd.f32 0.0, %v1635
      %v1637 = vpop.f32.mrf.mxu0
      %1638 = vmatprep.mubr.bf16.mxu0 %v1307
      %1639 = vmatmul.mubr.bf16.gmra.mxu0 %v1055
      %v1640 = vpop.f32.mrf.mxu0
      %v1641 = vadd.f32 0.0, %v1640
      %v1642 = vpop.f32.mrf.mxu0
      %v1643 = vpop.f32.mrf.mxu0
      %v1644 = vadd.f32 0.0, %v1643
      %v1645 = vpop.f32.mrf.mxu0
      %1646 = vmatprep.mubr.bf16.mxu0 %v1310
      %1647 = vmatmul.mubr.bf16.gmra.mxu0 %v1057
      %v1648 = vpop.f32.mrf.mxu0
      %v1649 = vadd.f32 0.0, %v1648
      %v1650 = vpop.f32.mrf.mxu0
      %v1651 = vpop.f32.mrf.mxu0
      %v1652 = vadd.f32 0.0, %v1651
      %v1653 = vpop.f32.mrf.mxu0
      %1654 = vmatprep.mubr.bf16.mxu0 %v1313
      %1655 = vmatmul.mubr.bf16.gmra.mxu0 %v1059
      %v1656 = vpop.f32.mrf.mxu0
      %v1657 = vadd.f32 0.0, %v1656
      %v1658 = vpop.f32.mrf.mxu0
      %v1659 = vpop.f32.mrf.mxu0
      %v1660 = vadd.f32 0.0, %v1659
      %v1661 = vpop.f32.mrf.mxu0
      %1662 = vmatprep.mubr.bf16.mxu0 %v1316
      %1663 = vmatmul.mubr.bf16.gmra.mxu0 %v1061
      %v1664 = vpop.f32.mrf.mxu0
      %v1665 = vadd.f32 0.0, %v1664
      %v1666 = vpop.f32.mrf.mxu0
      %v1667 = vpop.f32.mrf.mxu0
      %v1668 = vadd.f32 0.0, %v1667
      %v1669 = vpop.f32.mrf.mxu0
      %1670 = vmatprep.mubr.bf16.mxu0 %v1319
      %1671 = vmatmul.mubr.bf16.gmra.mxu0 %v1063
      %v1672 = vpop.f32.mrf.mxu0
      %v1673 = vadd.f32 0.0, %v1672
      %v1674 = vpop.f32.mrf.mxu0
      %v1675 = vpop.f32.mrf.mxu0
      %v1676 = vadd.f32 0.0, %v1675
      %v1677 = vpop.f32.mrf.mxu0
      %1678 = vmatprep.mubr.bf16.mxu0 %v1322
      %1679 = vmatmul.mubr.bf16.gmra.mxu0 %v1065
      %v1680 = vpop.f32.mrf.mxu0
      %v1681 = vadd.f32 0.0, %v1680
      %v1682 = vpop.f32.mrf.mxu0
      %v1683 = vpop.f32.mrf.mxu0
      %v1684 = vadd.f32 0.0, %v1683
      %v1685 = vpop.f32.mrf.mxu0
      %1686 = vmatprep.mubr.bf16.mxu0 %v1325
      %1687 = vmatmul.mubr.bf16.gmra.mxu0 %v1067
      %v1688 = vpop.f32.mrf.mxu0
      %v1689 = vadd.f32 0.0, %v1688
      %v1690 = vpop.f32.mrf.mxu0
      %v1691 = vpop.f32.mrf.mxu0
      %v1692 = vadd.f32 0.0, %v1691
      %v1693 = vpop.f32.mrf.mxu0
      %1694 = vmatprep.mubr.bf16.mxu0 %v1328
      %1695 = vmatmul.mubr.bf16.gmra.mxu0 %v1069
      %v1696 = vpop.f32.mrf.mxu0
      %v1697 = vadd.f32 0.0, %v1696
      %v1698 = vpop.f32.mrf.mxu0
      %v1699 = vpop.f32.mrf.mxu0
      %v1700 = vadd.f32 0.0, %v1699
      %v1701 = vpop.f32.mrf.mxu0
      %1702 = vmatprep.mubr.bf16.mxu0 %v1331
      %1703 = vmatmul.mubr.bf16.gmra.mxu0 %v1071
      %v1704 = vpop.f32.mrf.mxu0
      %v1705 = vadd.f32 0.0, %v1704
      %v1706 = vpop.f32.mrf.mxu0
      %v1707 = vpop.f32.mrf.mxu0
      %v1708 = vadd.f32 0.0, %v1707
      %v1709 = vpop.f32.mrf.mxu0
      %1710 = vmatprep.mubr.bf16.mxu0 %v1334
      %1711 = vmatmul.mubr.bf16.gmra.mxu0 %v1073
      %v1712 = vpop.f32.mrf.mxu0
      %v1713 = vadd.f32 0.0, %v1712
      %v1714 = vpop.f32.mrf.mxu0
      %v1715 = vpop.f32.mrf.mxu0
      %v1716 = vadd.f32 0.0, %v1715
      %v1717 = vpop.f32.mrf.mxu0
      %1718 = vmatprep.mubr.bf16.mxu0 %v1337
      %1719 = vmatmul.mubr.bf16.gmra.mxu0 %v1075
      %v1720 = vpop.f32.mrf.mxu0
      %v1721 = vadd.f32 0.0, %v1720
      %v1722 = vpop.f32.mrf.mxu0
      %v1723 = vpop.f32.mrf.mxu0
      %v1724 = vadd.f32 0.0, %v1723
      %v1725 = vpop.f32.mrf.mxu0
      %1726 = vmatprep.mubr.bf16.mxu0 %v1340
      %1727 = vmatmul.mubr.bf16.gmra.mxu0 %v1077
      %v1728 = vpop.f32.mrf.mxu0
      %v1729 = vadd.f32 0.0, %v1728
      %v1730 = vpop.f32.mrf.mxu0
      %v1731 = vpop.f32.mrf.mxu0
      %v1732 = vadd.f32 0.0, %v1731
      %v1733 = vpop.f32.mrf.mxu0
      %1734 = vmatprep.mubr.bf16.mxu0 %v1343
      %1735 = vmatmul.mubr.bf16.gmra.mxu0 %v1079
      %v1736 = vpop.f32.mrf.mxu0
      %v1737 = vadd.f32 0.0, %v1736
      %v1738 = vpop.f32.mrf.mxu0
      %v1739 = vpop.f32.mrf.mxu0
      %v1740 = vadd.f32 0.0, %v1739
      %v1741 = vpop.f32.mrf.mxu0
      %1742 = vmatprep.mubr.bf16.mxu0 %v1346
      %1743 = vmatmul.mubr.bf16.gmra.mxu0 %v1081
      %v1744 = vpop.f32.mrf.mxu0
      %v1745 = vadd.f32 0.0, %v1744
      %v1746 = vpop.f32.mrf.mxu0
      %v1747 = vpop.f32.mrf.mxu0
      %v1748 = vadd.f32 0.0, %v1747
      %v1749 = vpop.f32.mrf.mxu0
      %1750 = vmatprep.mubr.bf16.mxu0 %v1349
      %1751 = vmatmul.mubr.bf16.gmra.mxu0 %v1083
      %v1752 = vpop.f32.mrf.mxu0
      %v1753 = vadd.f32 0.0, %v1752
      %v1754 = vpop.f32.mrf.mxu0
      %v1755 = vpop.f32.mrf.mxu0
      %v1756 = vadd.f32 0.0, %v1755
      %v1757 = vpop.f32.mrf.mxu0
      %1758 = vmatprep.mubr.bf16.mxu0 %v1352
      %1759 = vmatmul.mubr.bf16.gmra.mxu0 %v1085
      %v1760 = vpop.f32.mrf.mxu0
      %v1761 = vadd.f32 0.0, %v1760
      %v1762 = vpop.f32.mrf.mxu0
      %v1763 = vpop.f32.mrf.mxu0
      %v1764 = vadd.f32 0.0, %v1763
      %v1765 = vpop.f32.mrf.mxu0
      %1766 = vmatprep.mubr.bf16.mxu0 %v1355
      %1767 = vmatmul.mubr.bf16.gmra.mxu0 %v1087
      %v1768 = vpop.f32.mrf.mxu0
      %v1769 = vadd.f32 0.0, %v1768
      %v1770 = vpop.f32.mrf.mxu0
      %v1771 = vpop.f32.mrf.mxu0
      %v1772 = vadd.f32 0.0, %v1771
      %v1773 = vpop.f32.mrf.mxu0
      %1774 = vmatprep.mubr.bf16.mxu0 %v1358
      %1775 = vmatmul.mubr.bf16.gmra.mxu0 %v1089
      %v1776 = vpop.f32.mrf.mxu0
      %v1777 = vadd.f32 0.0, %v1776
      %v1778 = vpop.f32.mrf.mxu0
      %v1779 = vpop.f32.mrf.mxu0
      %v1780 = vadd.f32 0.0, %v1779
      %v1781 = vpop.f32.mrf.mxu0
      %1782 = vmatprep.mubr.bf16.mxu0 %v1361
      %1783 = vmatmul.mubr.bf16.gmra.mxu0 %v1091
      %v1784 = vpop.f32.mrf.mxu0
      %v1785 = vadd.f32 0.0, %v1784
      %v1786 = vpop.f32.mrf.mxu0
      %v1787 = vpop.f32.mrf.mxu0
      %v1788 = vadd.f32 0.0, %v1787
      %v1789 = vpop.f32.mrf.mxu0
      %1790 = vmatprep.mubr.bf16.mxu0 %v1364
      %1791 = vmatmul.mubr.bf16.gmra.mxu0 %v1093
      %v1792 = vpop.f32.mrf.mxu0
      %v1793 = vadd.f32 0.0, %v1792
      %v1794 = vpop.f32.mrf.mxu0
      %v1795 = vpop.f32.mrf.mxu0
      %v1796 = vadd.f32 0.0, %v1795
      %v1797 = vpop.f32.mrf.mxu0
      %1798 = vmatprep.mubr.bf16.mxu0 %v1367
      %1799 = vmatmul.mubr.bf16.gmra.mxu0 %v1095
      %v1800 = vpop.f32.mrf.mxu0
      %v1801 = vadd.f32 0.0, %v1800
      %v1802 = vpop.f32.mrf.mxu0
      %v1803 = vpop.f32.mrf.mxu0
      %v1804 = vadd.f32 0.0, %v1803
      %v1805 = vpop.f32.mrf.mxu0
      %1806 = vmatprep.mubr.bf16.mxu0 %v1370
      %1807 = vmatmul.mubr.bf16.gmra.mxu0 %v1097
      %v1808 = vpop.f32.mrf.mxu0
      %v1809 = vadd.f32 0.0, %v1808
      %v1810 = vpop.f32.mrf.mxu0
      %v1811 = vpop.f32.mrf.mxu0
      %v1812 = vadd.f32 0.0, %v1811
      %v1813 = vpop.f32.mrf.mxu0
      %1814 = vmatprep.mubr.bf16.mxu0 %v1373
      %1815 = vmatmul.mubr.bf16.gmra.mxu0 %v1099
      %v1816 = vpop.f32.mrf.mxu0
      %v1817 = vadd.f32 0.0, %v1816
      %v1818 = vpop.f32.mrf.mxu0
      %v1819 = vpop.f32.mrf.mxu0
      %v1820 = vadd.f32 0.0, %v1819
      %v1821 = vpop.f32.mrf.mxu0
      %1822 = vmatprep.mubr.bf16.mxu0 %v1376
      %1823 = vmatmul.mubr.bf16.gmra.mxu0 %v1101
      %v1824 = vpop.f32.mrf.mxu0
      %v1825 = vadd.f32 0.0, %v1824
      %v1826 = vpop.f32.mrf.mxu0
      %v1827 = vpop.f32.mrf.mxu0
      %v1828 = vadd.f32 0.0, %v1827
      %v1829 = vpop.f32.mrf.mxu0
      %1830 = vmatprep.mubr.bf16.mxu0 %v1379
      %1831 = vmatmul.mubr.bf16.gmra.mxu0 %v1103
      %v1832 = vpop.f32.mrf.mxu0
      %v1833 = vadd.f32 0.0, %v1832
      %v1834 = vpop.f32.mrf.mxu0
      %v1835 = vpop.f32.mrf.mxu0
      %v1836 = vadd.f32 0.0, %v1835
      %v1837 = vpop.f32.mrf.mxu0
      %1838 = vmatprep.mubr.bf16.mxu0 %v1382
      %1839 = vmatmul.mubr.bf16.gmra.mxu0 %v1105
      %v1840 = vpop.f32.mrf.mxu0
      %v1841 = vadd.f32 0.0, %v1840
      %v1842 = vpop.f32.mrf.mxu0
      %v1843 = vpop.f32.mrf.mxu0
      %v1844 = vadd.f32 0.0, %v1843
      %v1845 = vpop.f32.mrf.mxu0
      %1846 = vmatprep.mubr.bf16.mxu0 %v1385
      %1847 = vmatmul.mubr.bf16.gmra.mxu0 %v1107
      %v1848 = vpop.f32.mrf.mxu0
      %v1849 = vadd.f32 0.0, %v1848
      %v1850 = vpop.f32.mrf.mxu0
      %v1851 = vpop.f32.mrf.mxu0
      %v1852 = vadd.f32 0.0, %v1851
      %v1853 = vpop.f32.mrf.mxu0
      %1854 = vmatprep.mubr.bf16.mxu0 %v1388
      %1855 = vmatmul.mubr.bf16.gmra.mxu0 %v1109
      %v1856 = vpop.f32.mrf.mxu0
      %v1857 = vadd.f32 0.0, %v1856
      %v1858 = vpop.f32.mrf.mxu0
      %v1859 = vpop.f32.mrf.mxu0
      %v1860 = vadd.f32 0.0, %v1859
      %v1861 = vpop.f32.mrf.mxu0
      %1862 = vmatprep.mubr.bf16.mxu0 %v1391
      %1863 = vmatmul.mubr.bf16.gmra.mxu0 %v1111
      %v1864 = vpop.f32.mrf.mxu0
      %v1865 = vadd.f32 0.0, %v1864
      %v1866 = vpop.f32.mrf.mxu0
      %v1867 = vpop.f32.mrf.mxu0
      %v1868 = vadd.f32 0.0, %v1867
      %v1869 = vpop.f32.mrf.mxu0
      %1870 = vmatprep.mubr.bf16.mxu0 %v1394
      %1871 = vmatmul.mubr.bf16.gmra.mxu0 %v1113
      %v1872 = vpop.f32.mrf.mxu0
      %v1873 = vadd.f32 0.0, %v1872
      %v1874 = vpop.f32.mrf.mxu0
      %v1875 = vpop.f32.mrf.mxu0
      %v1876 = vadd.f32 0.0, %v1875
      %v1877 = vpop.f32.mrf.mxu0
      %1878 = vmatprep.mubr.bf16.mxu0 %v1397
      %1879 = vmatmul.mubr.bf16.gmra.mxu0 %v1115
      %v1880 = vpop.f32.mrf.mxu0
      %v1881 = vadd.f32 0.0, %v1880
      %v1882 = vpop.f32.mrf.mxu0
      %v1883 = vpop.f32.mrf.mxu0
      %v1884 = vadd.f32 0.0, %v1883
      %v1885 = vpop.f32.mrf.mxu0
      %1886 = vdwg.mxu0
      %v1887 = vadd.f32 %v426, %v1441
      %v1888 = vadd.f32 %v427, %v1444
      %v1889 = vadd.f32 %v428, %v1449
      %v1890 = vadd.f32 %v429, %v1452
      %v1891 = vadd.f32 %v430, %v1457
      %v1892 = vadd.f32 %v431, %v1460
      %v1893 = vadd.f32 %v432, %v1465
      %v1894 = vadd.f32 %v433, %v1468
      %v1895 = vadd.f32 %v434, %v1473
      %v1896 = vadd.f32 %v435, %v1476
      %v1897 = vadd.f32 %v436, %v1481
      %v1898 = vadd.f32 %v437, %v1484
      %v1899 = vadd.f32 %v438, %v1489
      %v1900 = vadd.f32 %v439, %v1492
      %v1901 = vadd.f32 %v440, %v1497
      %v1902 = vadd.f32 %v441, %v1500
      %v1903 = vadd.f32 %v442, %v1505
      %v1904 = vadd.f32 %v443, %v1508
      %v1905 = vadd.f32 %v444, %v1513
      %v1906 = vadd.f32 %v445, %v1516
      %v1907 = vadd.f32 %v446, %v1521
      %v1908 = vadd.f32 %v447, %v1524
      %v1909 = vadd.f32 %v448, %v1529
      %v1910 = vadd.f32 %v449, %v1532
      %v1911 = vadd.f32 %v450, %v1537
      %v1912 = vadd.f32 %v451, %v1540
      %v1913 = vadd.f32 %v452, %v1545
      %v1914 = vadd.f32 %v453, %v1548
      %v1915 = vadd.f32 %v454, %v1553
      %v1916 = vadd.f32 %v455, %v1556
      %v1917 = vadd.f32 %v456, %v1561
      %v1918 = vadd.f32 %v457, %v1564
      %v1919 = vadd.f32 %v458, %v1569
      %v1920 = vadd.f32 %v459, %v1572
      %v1921 = vadd.f32 %v460, %v1577
      %v1922 = vadd.f32 %v461, %v1580
      %v1923 = vadd.f32 %v462, %v1585
      %v1924 = vadd.f32 %v463, %v1588
      %v1925 = vadd.f32 %v464, %v1593
      %v1926 = vadd.f32 %v465, %v1596
      %v1927 = vadd.f32 %v466, %v1601
      %v1928 = vadd.f32 %v467, %v1604
      %v1929 = vadd.f32 %v468, %v1609
      %v1930 = vadd.f32 %v469, %v1612
      %v1931 = vadd.f32 %v470, %v1617
      %v1932 = vadd.f32 %v471, %v1620
      %v1933 = vadd.f32 %v472, %v1625
      %v1934 = vadd.f32 %v473, %v1628
      %v1935 = vadd.f32 %v474, %v1633
      %v1936 = vadd.f32 %v475, %v1636
      %v1937 = vadd.f32 %v476, %v1641
      %v1938 = vadd.f32 %v477, %v1644
      %v1939 = vadd.f32 %v478, %v1649
      %v1940 = vadd.f32 %v479, %v1652
      %v1941 = vadd.f32 %v480, %v1657
      %v1942 = vadd.f32 %v481, %v1660
      %v1943 = vadd.f32 %v482, %v1665
      %v1944 = vadd.f32 %v483, %v1668
      %v1945 = vadd.f32 %v484, %v1673
      %v1946 = vadd.f32 %v485, %v1676
      %v1947 = vadd.f32 %v486, %v1681
      %v1948 = vadd.f32 %v487, %v1684
      %v1949 = vadd.f32 %v488, %v1689
      %v1950 = vadd.f32 %v489, %v1692
      %v1951 = vadd.f32 %v490, %v1697
      %v1952 = vadd.f32 %v491, %v1700
      %v1953 = vadd.f32 %v492, %v1705
      %v1954 = vadd.f32 %v493, %v1708
      %v1955 = vadd.f32 %v494, %v1713
      %v1956 = vadd.f32 %v495, %v1716
      %v1957 = vadd.f32 %v496, %v1721
      %v1958 = vadd.f32 %v497, %v1724
      %v1959 = vadd.f32 %v498, %v1729
      %v1960 = vadd.f32 %v499, %v1732
      %v1961 = vadd.f32 %v500, %v1737
      %v1962 = vadd.f32 %v501, %v1740
      %v1963 = vadd.f32 %v502, %v1745
      %v1964 = vadd.f32 %v503, %v1748
      %v1965 = vadd.f32 %v504, %v1753
      %v1966 = vadd.f32 %v505, %v1756
      %v1967 = vadd.f32 %v506, %v1761
      %v1968 = vadd.f32 %v507, %v1764
      %v1969 = vadd.f32 %v508, %v1769
      %v1970 = vadd.f32 %v509, %v1772
      %v1971 = vadd.f32 %v510, %v1777
      %v1972 = vadd.f32 %v511, %v1780
      %v1973 = vadd.f32 %v512, %v1785
      %v1974 = vadd.f32 %v513, %v1788
      %v1975 = vadd.f32 %v514, %v1793
      %v1976 = vadd.f32 %v515, %v1796
      %v1977 = vadd.f32 %v516, %v1801
      %v1978 = vadd.f32 %v517, %v1804
      %v1979 = vadd.f32 %v518, %v1809
      %v1980 = vadd.f32 %v519, %v1812
      %v1981 = vadd.f32 %v520, %v1817
      %v1982 = vadd.f32 %v521, %v1820
      %v1983 = vadd.f32 %v522, %v1825
      %v1984 = vadd.f32 %v523, %v1828
      %v1985 = vadd.f32 %v524, %v1833
      %v1986 = vadd.f32 %v525, %v1836
      %v1987 = vadd.f32 %v526, %v1841
      %v1988 = vadd.f32 %v527, %v1844
      %v1989 = vadd.f32 %v528, %v1849
      %v1990 = vadd.f32 %v529, %v1852
      %v1991 = vadd.f32 %v530, %v1857
      %v1992 = vadd.f32 %v531, %v1860
      %v1993 = vadd.f32 %v532, %v1865
      %v1994 = vadd.f32 %v533, %v1868
      %v1995 = vadd.f32 %v534, %v1873
      %v1996 = vadd.f32 %v535, %v1876
      %v1997 = vadd.f32 %v536, %v1881
      %v1998 = vadd.f32 %v537, %v1884
      %vm1999 = vcmask 523264
      %2000 = vst.msk [vmem:[#allocation2] sm:$0xff] %vm1999, %v1887
      %2001 = vst.msk [vmem:[#allocation2 + $0x8] sm:$0xff] %vm1999, %v1888
      %2002 = vst.msk [vmem:[#allocation2 + $0x10] sm:$0xff] %vm1999, %v1889
      %2003 = vst.msk [vmem:[#allocation2 + $0x18] sm:$0xff] %vm1999, %v1890
      %2004 = vst.msk [vmem:[#allocation2 + $0x20] sm:$0xff] %vm1999, %v1891
      %2005 = vst.msk [vmem:[#allocation2 + $0x28] sm:$0xff] %vm1999, %v1892
      %2006 = vst.msk [vmem:[#allocation2 + $0x30] sm:$0xff] %vm1999, %v1893
      %2007 = vst.msk [vmem:[#allocation2 + $0x38] sm:$0xff] %vm1999, %v1894
      %2008 = vst.msk [vmem:[#allocation2 + $0x40] sm:$0xff] %vm1999, %v1895
      %2009 = vst.msk [vmem:[#allocation2 + $0x48] sm:$0xff] %vm1999, %v1896
      %2010 = vst.msk [vmem:[#allocation2 + $0x50] sm:$0xff] %vm1999, %v1897
      %2011 = vst.msk [vmem:[#allocation2 + $0x58] sm:$0xff] %vm1999, %v1898
      %2012 = vst.msk [vmem:[#allocation2 + $0x60] sm:$0xff] %vm1999, %v1899
      %2013 = vst.msk [vmem:[#allocation2 + $0x68] sm:$0xff] %vm1999, %v1900
      %2014 = vst.msk [vmem:[#allocation2 + $0x70] sm:$0xff] %vm1999, %v1901
      %2015 = vst.msk [vmem:[#allocation2 + $0x78] sm:$0xff] %vm1999, %v1902
      %2016 = vst.msk [vmem:[#allocation2 + $0x80] sm:$0xff] %vm1999, %v1903
      %2017 = vst.msk [vmem:[#allocation2 + $0x88] sm:$0xff] %vm1999, %v1904
      %2018 = vst.msk [vmem:[#allocation2 + $0x90] sm:$0xff] %vm1999, %v1905
      %2019 = vst.msk [vmem:[#allocation2 + $0x98] sm:$0xff] %vm1999, %v1906
      %2020 = vst.msk [vmem:[#allocation2 + $0xa0] sm:$0xff] %vm1999, %v1907
      %2021 = vst.msk [vmem:[#allocation2 + $0xa8] sm:$0xff] %vm1999, %v1908
      %2022 = vst.msk [vmem:[#allocation2 + $0xb0] sm:$0xff] %vm1999, %v1909
      %2023 = vst.msk [vmem:[#allocation2 + $0xb8] sm:$0xff] %vm1999, %v1910
      %2024 = vst.msk [vmem:[#allocation2 + $0xc0] sm:$0xff] %vm1999, %v1911
      %2025 = vst.msk [vmem:[#allocation2 + $0xc8] sm:$0xff] %vm1999, %v1912
      %2026 = vst.msk [vmem:[#allocation2 + $0xd0] sm:$0xff] %vm1999, %v1913
      %2027 = vst.msk [vmem:[#allocation2 + $0xd8] sm:$0xff] %vm1999, %v1914
      %2028 = vst.msk [vmem:[#allocation2 + $0xe0] sm:$0xff] %vm1999, %v1915
      %2029 = vst.msk [vmem:[#allocation2 + $0xe8] sm:$0xff] %vm1999, %v1916
      %2030 = vst.msk [vmem:[#allocation2 + $0xf0] sm:$0xff] %vm1999, %v1917
      %2031 = vst.msk [vmem:[#allocation2 + $0xf8] sm:$0xff] %vm1999, %v1918
      %2032 = vst.msk [vmem:[#allocation2 + $0x100] sm:$0xff] %vm1999, %v1919
      %2033 = vst.msk [vmem:[#allocation2 + $0x108] sm:$0xff] %vm1999, %v1920
      %2034 = vst.msk [vmem:[#allocation2 + $0x110] sm:$0xff] %vm1999, %v1921
      %2035 = vst.msk [vmem:[#allocation2 + $0x118] sm:$0xff] %vm1999, %v1922
      %2036 = vst.msk [vmem:[#allocation2 + $0x120] sm:$0xff] %vm1999, %v1923
      %2037 = vst.msk [vmem:[#allocation2 + $0x128] sm:$0xff] %vm1999, %v1924
      %2038 = vst.msk [vmem:[#allocation2 + $0x130] sm:$0xff] %vm1999, %v1925
      %2039 = vst.msk [vmem:[#allocation2 + $0x138] sm:$0xff] %vm1999, %v1926
      %2040 = vst.msk [vmem:[#allocation2 + $0x140] sm:$0xff] %vm1999, %v1927
      %2041 = vst.msk [vmem:[#allocation2 + $0x148] sm:$0xff] %vm1999, %v1928
      %2042 = vst.msk [vmem:[#allocation2 + $0x150] sm:$0xff] %vm1999, %v1929
      %2043 = vst.msk [vmem:[#allocation2 + $0x158] sm:$0xff] %vm1999, %v1930
      %2044 = vst.msk [vmem:[#allocation2 + $0x160] sm:$0xff] %vm1999, %v1931
      %2045 = vst.msk [vmem:[#allocation2 + $0x168] sm:$0xff] %vm1999, %v1932
      %2046 = vst.msk [vmem:[#allocation2 + $0x170] sm:$0xff] %vm1999, %v1933
      %2047 = vst.msk [vmem:[#allocation2 + $0x178] sm:$0xff] %vm1999, %v1934
      %2048 = vst.msk [vmem:[#allocation2 + $0x180] sm:$0xff] %vm1999, %v1935
      %2049 = vst.msk [vmem:[#allocation2 + $0x188] sm:$0xff] %vm1999, %v1936
      %2050 = vst.msk [vmem:[#allocation2 + $0x190] sm:$0xff] %vm1999, %v1937
      %2051 = vst.msk [vmem:[#allocation2 + $0x198] sm:$0xff] %vm1999, %v1938
      %2052 = vst.msk [vmem:[#allocation2 + $0x1a0] sm:$0xff] %vm1999, %v1939
      %2053 = vst.msk [vmem:[#allocation2 + $0x1a8] sm:$0xff] %vm1999, %v1940
      %2054 = vst.msk [vmem:[#allocation2 + $0x1b0] sm:$0xff] %vm1999, %v1941
      %2055 = vst.msk [vmem:[#allocation2 + $0x1b8] sm:$0xff] %vm1999, %v1942
      %2056 = vst.msk [vmem:[#allocation2 + $0x1c0] sm:$0xff] %vm1999, %v1943
      %2057 = vst.msk [vmem:[#allocation2 + $0x1c8] sm:$0xff] %vm1999, %v1944
      %2058 = vst.msk [vmem:[#allocation2 + $0x1d0] sm:$0xff] %vm1999, %v1945
      %2059 = vst.msk [vmem:[#allocation2 + $0x1d8] sm:$0xff] %vm1999, %v1946
      %2060 = vst.msk [vmem:[#allocation2 + $0x1e0] sm:$0xff] %vm1999, %v1947
      %2061 = vst.msk [vmem:[#allocation2 + $0x1e8] sm:$0xff] %vm1999, %v1948
      %2062 = vst.msk [vmem:[#allocation2 + $0x1f0] sm:$0xff] %vm1999, %v1949
      %2063 = vst.msk [vmem:[#allocation2 + $0x1f8] sm:$0xff] %vm1999, %v1950
      %2064 = vst.msk [vmem:[#allocation2 + $0x200] sm:$0xff] %vm1999, %v1951
      %2065 = vst.msk [vmem:[#allocation2 + $0x208] sm:$0xff] %vm1999, %v1952
      %2066 = vst.msk [vmem:[#allocation2 + $0x210] sm:$0xff] %vm1999, %v1953
      %2067 = vst.msk [vmem:[#allocation2 + $0x218] sm:$0xff] %vm1999, %v1954
      %2068 = vst.msk [vmem:[#allocation2 + $0x220] sm:$0xff] %vm1999, %v1955
      %2069 = vst.msk [vmem:[#allocation2 + $0x228] sm:$0xff] %vm1999, %v1956
      %2070 = vst.msk [vmem:[#allocation2 + $0x230] sm:$0xff] %vm1999, %v1957
      %2071 = vst.msk [vmem:[#allocation2 + $0x238] sm:$0xff] %vm1999, %v1958
      %2072 = vst.msk [vmem:[#allocation2 + $0x240] sm:$0xff] %vm1999, %v1959
      %2073 = vst.msk [vmem:[#allocation2 + $0x248] sm:$0xff] %vm1999, %v1960
      %2074 = vst.msk [vmem:[#allocation2 + $0x250] sm:$0xff] %vm1999, %v1961
      %2075 = vst.msk [vmem:[#allocation2 + $0x258] sm:$0xff] %vm1999, %v1962
      %2076 = vst.msk [vmem:[#allocation2 + $0x260] sm:$0xff] %vm1999, %v1963
      %2077 = vst.msk [vmem:[#allocation2 + $0x268] sm:$0xff] %vm1999, %v1964
      %2078 = vst.msk [vmem:[#allocation2 + $0x270] sm:$0xff] %vm1999, %v1965
      %2079 = vst.msk [vmem:[#allocation2 + $0x278] sm:$0xff] %vm1999, %v1966
      %2080 = vst.msk [vmem:[#allocation2 + $0x280] sm:$0xff] %vm1999, %v1967
      %2081 = vst.msk [vmem:[#allocation2 + $0x288] sm:$0xff] %vm1999, %v1968
      %2082 = vst.msk [vmem:[#allocation2 + $0x290] sm:$0xff] %vm1999, %v1969
      %2083 = vst.msk [vmem:[#allocation2 + $0x298] sm:$0xff] %vm1999, %v1970
      %2084 = vst.msk [vmem:[#allocation2 + $0x2a0] sm:$0xff] %vm1999, %v1971
      %2085 = vst.msk [vmem:[#allocation2 + $0x2a8] sm:$0xff] %vm1999, %v1972
      %2086 = vst.msk [vmem:[#allocation2 + $0x2b0] sm:$0xff] %vm1999, %v1973
      %2087 = vst.msk [vmem:[#allocation2 + $0x2b8] sm:$0xff] %vm1999, %v1974
      %2088 = vst.msk [vmem:[#allocation2 + $0x2c0] sm:$0xff] %vm1999, %v1975
      %2089 = vst.msk [vmem:[#allocation2 + $0x2c8] sm:$0xff] %vm1999, %v1976
      %2090 = vst.msk [vmem:[#allocation2 + $0x2d0] sm:$0xff] %vm1999, %v1977
      %2091 = vst.msk [vmem:[#allocation2 + $0x2d8] sm:$0xff] %vm1999, %v1978
      %2092 = vst.msk [vmem:[#allocation2 + $0x2e0] sm:$0xff] %vm1999, %v1979
      %2093 = vst.msk [vmem:[#allocation2 + $0x2e8] sm:$0xff] %vm1999, %v1980
      %2094 = vst.msk [vmem:[#allocation2 + $0x2f0] sm:$0xff] %vm1999, %v1981
      %2095 = vst.msk [vmem:[#allocation2 + $0x2f8] sm:$0xff] %vm1999, %v1982
      %2096 = vst.msk [vmem:[#allocation2 + $0x300] sm:$0xff] %vm1999, %v1983
      %2097 = vst.msk [vmem:[#allocation2 + $0x308] sm:$0xff] %vm1999, %v1984
      %2098 = vst.msk [vmem:[#allocation2 + $0x310] sm:$0xff] %vm1999, %v1985
      %2099 = vst.msk [vmem:[#allocation2 + $0x318] sm:$0xff] %vm1999, %v1986
      %2100 = vst.msk [vmem:[#allocation2 + $0x320] sm:$0xff] %vm1999, %v1987
      %2101 = vst.msk [vmem:[#allocation2 + $0x328] sm:$0xff] %vm1999, %v1988
      %2102 = vst.msk [vmem:[#allocation2 + $0x330] sm:$0xff] %vm1999, %v1989
      %2103 = vst.msk [vmem:[#allocation2 + $0x338] sm:$0xff] %vm1999, %v1990
      %2104 = vst.msk [vmem:[#allocation2 + $0x340] sm:$0xff] %vm1999, %v1991
      %2105 = vst.msk [vmem:[#allocation2 + $0x348] sm:$0xff] %vm1999, %v1992
      %2106 = vst.msk [vmem:[#allocation2 + $0x350] sm:$0xff] %vm1999, %v1993
      %2107 = vst.msk [vmem:[#allocation2 + $0x358] sm:$0xff] %vm1999, %v1994
      %2108 = vst.msk [vmem:[#allocation2 + $0x360] sm:$0xff] %vm1999, %v1995
      %2109 = vst.msk [vmem:[#allocation2 + $0x368] sm:$0xff] %vm1999, %v1996
      %2110 = vst.msk [vmem:[#allocation2 + $0x370] sm:$0xff] %vm1999, %v1997
      %2111 = vst.msk [vmem:[#allocation2 + $0x378] sm:$0xff] %vm1999, %v1998
      // Predicated region
      $region41: #{tpu_custom_call.1} parent=35 // pred_check
        %p2112 = pneg %p309
      $region42: #{tpu_custom_call.1} parent=35 // pred_check_branch
        %2114 = sbr.rel (%p2112) target = $region44
      $region43: #{tpu_custom_call.1} parent=35 // pred_region
        %v2115 = vld [vmem:[#allocation2] sm:$0xff]
        %v2116 = vld [vmem:[#allocation2 + $0x8] sm:$0xff]
        %v2117 = vld [vmem:[#allocation2 + $0x10] sm:$0xff]
        %v2118 = vld [vmem:[#allocation2 + $0x18] sm:$0xff]
        %v2119 = vld [vmem:[#allocation2 + $0x20] sm:$0xff]
        %v2120 = vld [vmem:[#allocation2 + $0x28] sm:$0xff]
        %v2121 = vld [vmem:[#allocation2 + $0x30] sm:$0xff]
        %v2122 = vld [vmem:[#allocation2 + $0x38] sm:$0xff]
        %v2123 = vld [vmem:[#allocation2 + $0x40] sm:$0xff]
        %v2124 = vld [vmem:[#allocation2 + $0x48] sm:$0xff]
        %v2125 = vld [vmem:[#allocation2 + $0x50] sm:$0xff]
        %v2126 = vld [vmem:[#allocation2 + $0x58] sm:$0xff]
        %v2127 = vld [vmem:[#allocation2 + $0x60] sm:$0xff]
        %v2128 = vld [vmem:[#allocation2 + $0x68] sm:$0xff]
        %v2129 = vld [vmem:[#allocation2 + $0x70] sm:$0xff]
        %v2130 = vld [vmem:[#allocation2 + $0x78] sm:$0xff]
        %v2131 = vld [vmem:[#allocation2 + $0x80] sm:$0xff]
        %v2132 = vld [vmem:[#allocation2 + $0x88] sm:$0xff]
        %v2133 = vld [vmem:[#allocation2 + $0x90] sm:$0xff]
        %v2134 = vld [vmem:[#allocation2 + $0x98] sm:$0xff]
        %v2135 = vld [vmem:[#allocation2 + $0xa0] sm:$0xff]
        %v2136 = vld [vmem:[#allocation2 + $0xa8] sm:$0xff]
        %v2137 = vld [vmem:[#allocation2 + $0xb0] sm:$0xff]
        %v2138 = vld [vmem:[#allocation2 + $0xb8] sm:$0xff]
        %v2139 = vld [vmem:[#allocation2 + $0xc0] sm:$0xff]
        %v2140 = vld [vmem:[#allocation2 + $0xc8] sm:$0xff]
        %v2141 = vld [vmem:[#allocation2 + $0xd0] sm:$0xff]
        %v2142 = vld [vmem:[#allocation2 + $0xd8] sm:$0xff]
        %v2143 = vld [vmem:[#allocation2 + $0xe0] sm:$0xff]
        %v2144 = vld [vmem:[#allocation2 + $0xe8] sm:$0xff]
        %v2145 = vld [vmem:[#allocation2 + $0xf0] sm:$0xff]
        %v2146 = vld [vmem:[#allocation2 + $0xf8] sm:$0xff]
        %v2147 = vld [vmem:[#allocation2 + $0x100] sm:$0xff]
        %v2148 = vld [vmem:[#allocation2 + $0x108] sm:$0xff]
        %v2149 = vld [vmem:[#allocation2 + $0x110] sm:$0xff]
        %v2150 = vld [vmem:[#allocation2 + $0x118] sm:$0xff]
        %v2151 = vld [vmem:[#allocation2 + $0x120] sm:$0xff]
        %v2152 = vld [vmem:[#allocation2 + $0x128] sm:$0xff]
        %v2153 = vld [vmem:[#allocation2 + $0x130] sm:$0xff]
        %v2154 = vld [vmem:[#allocation2 + $0x138] sm:$0xff]
        %v2155 = vld [vmem:[#allocation2 + $0x140] sm:$0xff]
        %v2156 = vld [vmem:[#allocation2 + $0x148] sm:$0xff]
        %v2157 = vld [vmem:[#allocation2 + $0x150] sm:$0xff]
        %v2158 = vld [vmem:[#allocation2 + $0x158] sm:$0xff]
        %v2159 = vld [vmem:[#allocation2 + $0x160] sm:$0xff]
        %v2160 = vld [vmem:[#allocation2 + $0x168] sm:$0xff]
        %v2161 = vld [vmem:[#allocation2 + $0x170] sm:$0xff]
        %v2162 = vld [vmem:[#allocation2 + $0x178] sm:$0xff]
        %v2163 = vld [vmem:[#allocation2 + $0x180] sm:$0xff]
        %v2164 = vld [vmem:[#allocation2 + $0x188] sm:$0xff]
        %v2165 = vld [vmem:[#allocation2 + $0x190] sm:$0xff]
        %v2166 = vld [vmem:[#allocation2 + $0x198] sm:$0xff]
        %v2167 = vld [vmem:[#allocation2 + $0x1a0] sm:$0xff]
        %v2168 = vld [vmem:[#allocation2 + $0x1a8] sm:$0xff]
        %v2169 = vld [vmem:[#allocation2 + $0x1b0] sm:$0xff]
        %v2170 = vld [vmem:[#allocation2 + $0x1b8] sm:$0xff]
        %v2171 = vld [vmem:[#allocation2 + $0x1c0] sm:$0xff]
        %v2172 = vld [vmem:[#allocation2 + $0x1c8] sm:$0xff]
        %v2173 = vld [vmem:[#allocation2 + $0x1d0] sm:$0xff]
        %v2174 = vld [vmem:[#allocation2 + $0x1d8] sm:$0xff]
        %v2175 = vld [vmem:[#allocation2 + $0x1e0] sm:$0xff]
        %v2176 = vld [vmem:[#allocation2 + $0x1e8] sm:$0xff]
        %v2177 = vld [vmem:[#allocation2 + $0x1f0] sm:$0xff]
        %v2178 = vld [vmem:[#allocation2 + $0x1f8] sm:$0xff]
        %v2179 = vld [vmem:[#allocation2 + $0x200] sm:$0xff]
        %v2180 = vld [vmem:[#allocation2 + $0x208] sm:$0xff]
        %v2181 = vld [vmem:[#allocation2 + $0x210] sm:$0xff]
        %v2182 = vld [vmem:[#allocation2 + $0x218] sm:$0xff]
        %v2183 = vld [vmem:[#allocation2 + $0x220] sm:$0xff]
        %v2184 = vld [vmem:[#allocation2 + $0x228] sm:$0xff]
        %v2185 = vld [vmem:[#allocation2 + $0x230] sm:$0xff]
        %v2186 = vld [vmem:[#allocation2 + $0x238] sm:$0xff]
        %v2187 = vld [vmem:[#allocation2 + $0x240] sm:$0xff]
        %v2188 = vld [vmem:[#allocation2 + $0x248] sm:$0xff]
        %v2189 = vld [vmem:[#allocation2 + $0x250] sm:$0xff]
        %v2190 = vld [vmem:[#allocation2 + $0x258] sm:$0xff]
        %v2191 = vld [vmem:[#allocation2 + $0x260] sm:$0xff]
        %v2192 = vld [vmem:[#allocation2 + $0x268] sm:$0xff]
        %v2193 = vld [vmem:[#allocation2 + $0x270] sm:$0xff]
        %v2194 = vld [vmem:[#allocation2 + $0x278] sm:$0xff]
        %v2195 = vld [vmem:[#allocation2 + $0x280] sm:$0xff]
        %v2196 = vld [vmem:[#allocation2 + $0x288] sm:$0xff]
        %v2197 = vld [vmem:[#allocation2 + $0x290] sm:$0xff]
        %v2198 = vld [vmem:[#allocation2 + $0x298] sm:$0xff]
        %v2199 = vld [vmem:[#allocation2 + $0x2a0] sm:$0xff]
        %v2200 = vld [vmem:[#allocation2 + $0x2a8] sm:$0xff]
        %v2201 = vld [vmem:[#allocation2 + $0x2b0] sm:$0xff]
        %v2202 = vld [vmem:[#allocation2 + $0x2b8] sm:$0xff]
        %v2203 = vld [vmem:[#allocation2 + $0x2c0] sm:$0xff]
        %v2204 = vld [vmem:[#allocation2 + $0x2c8] sm:$0xff]
        %v2205 = vld [vmem:[#allocation2 + $0x2d0] sm:$0xff]
        %v2206 = vld [vmem:[#allocation2 + $0x2d8] sm:$0xff]
        %v2207 = vld [vmem:[#allocation2 + $0x2e0] sm:$0xff]
        %v2208 = vld [vmem:[#allocation2 + $0x2e8] sm:$0xff]
        %v2209 = vld [vmem:[#allocation2 + $0x2f0] sm:$0xff]
        %v2210 = vld [vmem:[#allocation2 + $0x2f8] sm:$0xff]
        %v2211 = vld [vmem:[#allocation2 + $0x300] sm:$0xff]
        %v2212 = vld [vmem:[#allocation2 + $0x308] sm:$0xff]
        %v2213 = vld [vmem:[#allocation2 + $0x310] sm:$0xff]
        %v2214 = vld [vmem:[#allocation2 + $0x318] sm:$0xff]
        %v2215 = vld [vmem:[#allocation2 + $0x320] sm:$0xff]
        %v2216 = vld [vmem:[#allocation2 + $0x328] sm:$0xff]
        %v2217 = vld [vmem:[#allocation2 + $0x330] sm:$0xff]
        %v2218 = vld [vmem:[#allocation2 + $0x338] sm:$0xff]
        %v2219 = vld [vmem:[#allocation2 + $0x340] sm:$0xff]
        %v2220 = vld [vmem:[#allocation2 + $0x348] sm:$0xff]
        %v2221 = vld [vmem:[#allocation2 + $0x350] sm:$0xff]
        %v2222 = vld [vmem:[#allocation2 + $0x358] sm:$0xff]
        %v2223 = vld [vmem:[#allocation2 + $0x360] sm:$0xff]
        %v2224 = vld [vmem:[#allocation2 + $0x368] sm:$0xff]
        %v2225 = vld [vmem:[#allocation2 + $0x370] sm:$0xff]
        %v2226 = vld [vmem:[#allocation2 + $0x378] sm:$0xff]
        %v2227 = vld [vmem:[%s295] sm:$0x1]
        %v2229 = vlaneseq
        %v2230 = vshrl.u32 %v2229, 7
        %v2231 = vsub.s32 0, %v2230
        %v2232 = vrot.slane %v2227, %v2231
        %v2234 = vmul.f32 %v2115, %v2232
        %v2235 = vmul.f32 %v2116, %v2232
        %v2236 = vmul.f32 %v2117, %v2232
        %v2237 = vmul.f32 %v2118, %v2232
        %v2238 = vmul.f32 %v2119, %v2232
        %v2239 = vmul.f32 %v2120, %v2232
        %v2240 = vmul.f32 %v2121, %v2232
        %v2241 = vmul.f32 %v2122, %v2232
        %v2242 = vmul.f32 %v2123, %v2232
        %v2243 = vmul.f32 %v2124, %v2232
        %v2244 = vmul.f32 %v2125, %v2232
        %v2245 = vmul.f32 %v2126, %v2232
        %v2246 = vmul.f32 %v2127, %v2232
        %v2247 = vmul.f32 %v2128, %v2232
        %v2248 = vmul.f32 %v2129, %v2232
        %v2249 = vmul.f32 %v2130, %v2232
        %v2250 = vmul.f32 %v2131, %v2232
        %v2251 = vmul.f32 %v2132, %v2232
        %v2252 = vmul.f32 %v2133, %v2232
        %v2253 = vmul.f32 %v2134, %v2232
        %v2254 = vmul.f32 %v2135, %v2232
        %v2255 = vmul.f32 %v2136, %v2232
        %v2256 = vmul.f32 %v2137, %v2232
        %v2257 = vmul.f32 %v2138, %v2232
        %v2258 = vmul.f32 %v2139, %v2232
        %v2259 = vmul.f32 %v2140, %v2232
        %v2260 = vmul.f32 %v2141, %v2232
        %v2261 = vmul.f32 %v2142, %v2232
        %v2262 = vmul.f32 %v2143, %v2232
        %v2263 = vmul.f32 %v2144, %v2232
        %v2264 = vmul.f32 %v2145, %v2232
        %v2265 = vmul.f32 %v2146, %v2232
        %v2266 = vmul.f32 %v2147, %v2232
        %v2267 = vmul.f32 %v2148, %v2232
        %v2268 = vmul.f32 %v2149, %v2232
        %v2269 = vmul.f32 %v2150, %v2232
        %v2270 = vmul.f32 %v2151, %v2232
        %v2271 = vmul.f32 %v2152, %v2232
        %v2272 = vmul.f32 %v2153, %v2232
        %v2273 = vmul.f32 %v2154, %v2232
        %v2274 = vmul.f32 %v2155, %v2232
        %v2275 = vmul.f32 %v2156, %v2232
        %v2276 = vmul.f32 %v2157, %v2232
        %v2277 = vmul.f32 %v2158, %v2232
        %v2278 = vmul.f32 %v2159, %v2232
        %v2279 = vmul.f32 %v2160, %v2232
        %v2280 = vmul.f32 %v2161, %v2232
        %v2281 = vmul.f32 %v2162, %v2232
        %v2282 = vmul.f32 %v2163, %v2232
        %v2283 = vmul.f32 %v2164, %v2232
        %v2284 = vmul.f32 %v2165, %v2232
        %v2285 = vmul.f32 %v2166, %v2232
        %v2286 = vmul.f32 %v2167, %v2232
        %v2287 = vmul.f32 %v2168, %v2232
        %v2288 = vmul.f32 %v2169, %v2232
        %v2289 = vmul.f32 %v2170, %v2232
        %v2290 = vmul.f32 %v2171, %v2232
        %v2291 = vmul.f32 %v2172, %v2232
        %v2292 = vmul.f32 %v2173, %v2232
        %v2293 = vmul.f32 %v2174, %v2232
        %v2294 = vmul.f32 %v2175, %v2232
        %v2295 = vmul.f32 %v2176, %v2232
        %v2296 = vmul.f32 %v2177, %v2232
        %v2297 = vmul.f32 %v2178, %v2232
        %v2298 = vmul.f32 %v2179, %v2232
        %v2299 = vmul.f32 %v2180, %v2232
        %v2300 = vmul.f32 %v2181, %v2232
        %v2301 = vmul.f32 %v2182, %v2232
        %v2302 = vmul.f32 %v2183, %v2232
        %v2303 = vmul.f32 %v2184, %v2232
        %v2304 = vmul.f32 %v2185, %v2232
        %v2305 = vmul.f32 %v2186, %v2232
        %v2306 = vmul.f32 %v2187, %v2232
        %v2307 = vmul.f32 %v2188, %v2232
        %v2308 = vmul.f32 %v2189, %v2232
        %v2309 = vmul.f32 %v2190, %v2232
        %v2310 = vmul.f32 %v2191, %v2232
        %v2311 = vmul.f32 %v2192, %v2232
        %v2312 = vmul.f32 %v2193, %v2232
        %v2313 = vmul.f32 %v2194, %v2232
        %v2314 = vmul.f32 %v2195, %v2232
        %v2315 = vmul.f32 %v2196, %v2232
        %v2316 = vmul.f32 %v2197, %v2232
        %v2317 = vmul.f32 %v2198, %v2232
        %v2318 = vmul.f32 %v2199, %v2232
        %v2319 = vmul.f32 %v2200, %v2232
        %v2320 = vmul.f32 %v2201, %v2232
        %v2321 = vmul.f32 %v2202, %v2232
        %v2322 = vmul.f32 %v2203, %v2232
        %v2323 = vmul.f32 %v2204, %v2232
        %v2324 = vmul.f32 %v2205, %v2232
        %v2325 = vmul.f32 %v2206, %v2232
        %v2326 = vmul.f32 %v2207, %v2232
        %v2327 = vmul.f32 %v2208, %v2232
        %v2328 = vmul.f32 %v2209, %v2232
        %v2329 = vmul.f32 %v2210, %v2232
        %v2330 = vmul.f32 %v2211, %v2232
        %v2331 = vmul.f32 %v2212, %v2232
        %v2332 = vmul.f32 %v2213, %v2232
        %v2333 = vmul.f32 %v2214, %v2232
        %v2334 = vmul.f32 %v2215, %v2232
        %v2335 = vmul.f32 %v2216, %v2232
        %v2336 = vmul.f32 %v2217, %v2232
        %v2337 = vmul.f32 %v2218, %v2232
        %v2338 = vmul.f32 %v2219, %v2232
        %v2339 = vmul.f32 %v2220, %v2232
        %v2340 = vmul.f32 %v2221, %v2232
        %v2341 = vmul.f32 %v2222, %v2232
        %v2342 = vmul.f32 %v2223, %v2232
        %v2343 = vmul.f32 %v2224, %v2232
        %v2344 = vmul.f32 %v2225, %v2232
        %v2345 = vmul.f32 %v2226, %v2232
        %v2346 = vld [vmem:[%s298] sm:$0x1]
        %v2348 = vlaneseq
        %v2349 = vshrl.u32 %v2348, 7
        %v2350 = vsub.s32 0, %v2349
        %v2351 = vrot.slane %v2346, %v2350
        %v2353 = vadd.f32 %v2234, %v2351
        %v2354 = vadd.f32 %v2235, %v2351
        %v2355 = vadd.f32 %v2236, %v2351
        %v2356 = vadd.f32 %v2237, %v2351
        %v2357 = vadd.f32 %v2238, %v2351
        %v2358 = vadd.f32 %v2239, %v2351
        %v2359 = vadd.f32 %v2240, %v2351
        %v2360 = vadd.f32 %v2241, %v2351
        %v2361 = vadd.f32 %v2242, %v2351
        %v2362 = vadd.f32 %v2243, %v2351
        %v2363 = vadd.f32 %v2244, %v2351
        %v2364 = vadd.f32 %v2245, %v2351
        %v2365 = vadd.f32 %v2246, %v2351
        %v2366 = vadd.f32 %v2247, %v2351
        %v2367 = vadd.f32 %v2248, %v2351
        %v2368 = vadd.f32 %v2249, %v2351
        %v2369 = vadd.f32 %v2250, %v2351
        %v2370 = vadd.f32 %v2251, %v2351
        %v2371 = vadd.f32 %v2252, %v2351
        %v2372 = vadd.f32 %v2253, %v2351
        %v2373 = vadd.f32 %v2254, %v2351
        %v2374 = vadd.f32 %v2255, %v2351
        %v2375 = vadd.f32 %v2256, %v2351
        %v2376 = vadd.f32 %v2257, %v2351
        %v2377 = vadd.f32 %v2258, %v2351
        %v2378 = vadd.f32 %v2259, %v2351
        %v2379 = vadd.f32 %v2260, %v2351
        %v2380 = vadd.f32 %v2261, %v2351
        %v2381 = vadd.f32 %v2262, %v2351
        %v2382 = vadd.f32 %v2263, %v2351
        %v2383 = vadd.f32 %v2264, %v2351
        %v2384 = vadd.f32 %v2265, %v2351
        %v2385 = vadd.f32 %v2266, %v2351
        %v2386 = vadd.f32 %v2267, %v2351
        %v2387 = vadd.f32 %v2268, %v2351
        %v2388 = vadd.f32 %v2269, %v2351
        %v2389 = vadd.f32 %v2270, %v2351
        %v2390 = vadd.f32 %v2271, %v2351
        %v2391 = vadd.f32 %v2272, %v2351
        %v2392 = vadd.f32 %v2273, %v2351
        %v2393 = vadd.f32 %v2274, %v2351
        %v2394 = vadd.f32 %v2275, %v2351
        %v2395 = vadd.f32 %v2276, %v2351
        %v2396 = vadd.f32 %v2277, %v2351
        %v2397 = vadd.f32 %v2278, %v2351
        %v2398 = vadd.f32 %v2279, %v2351
        %v2399 = vadd.f32 %v2280, %v2351
        %v2400 = vadd.f32 %v2281, %v2351
        %v2401 = vadd.f32 %v2282, %v2351
        %v2402 = vadd.f32 %v2283, %v2351
        %v2403 = vadd.f32 %v2284, %v2351
        %v2404 = vadd.f32 %v2285, %v2351
        %v2405 = vadd.f32 %v2286, %v2351
        %v2406 = vadd.f32 %v2287, %v2351
        %v2407 = vadd.f32 %v2288, %v2351
        %v2408 = vadd.f32 %v2289, %v2351
        %v2409 = vadd.f32 %v2290, %v2351
        %v2410 = vadd.f32 %v2291, %v2351
        %v2411 = vadd.f32 %v2292, %v2351
        %v2412 = vadd.f32 %v2293, %v2351
        %v2413 = vadd.f32 %v2294, %v2351
        %v2414 = vadd.f32 %v2295, %v2351
        %v2415 = vadd.f32 %v2296, %v2351
        %v2416 = vadd.f32 %v2297, %v2351
        %v2417 = vadd.f32 %v2298, %v2351
        %v2418 = vadd.f32 %v2299, %v2351
        %v2419 = vadd.f32 %v2300, %v2351
        %v2420 = vadd.f32 %v2301, %v2351
        %v2421 = vadd.f32 %v2302, %v2351
        %v2422 = vadd.f32 %v2303, %v2351
        %v2423 = vadd.f32 %v2304, %v2351
        %v2424 = vadd.f32 %v2305, %v2351
        %v2425 = vadd.f32 %v2306, %v2351
        %v2426 = vadd.f32 %v2307, %v2351
        %v2427 = vadd.f32 %v2308, %v2351
        %v2428 = vadd.f32 %v2309, %v2351
        %v2429 = vadd.f32 %v2310, %v2351
        %v2430 = vadd.f32 %v2311, %v2351
        %v2431 = vadd.f32 %v2312, %v2351
        %v2432 = vadd.f32 %v2313, %v2351
        %v2433 = vadd.f32 %v2314, %v2351
        %v2434 = vadd.f32 %v2315, %v2351
        %v2435 = vadd.f32 %v2316, %v2351
        %v2436 = vadd.f32 %v2317, %v2351
        %v2437 = vadd.f32 %v2318, %v2351
        %v2438 = vadd.f32 %v2319, %v2351
        %v2439 = vadd.f32 %v2320, %v2351
        %v2440 = vadd.f32 %v2321, %v2351
        %v2441 = vadd.f32 %v2322, %v2351
        %v2442 = vadd.f32 %v2323, %v2351
        %v2443 = vadd.f32 %v2324, %v2351
        %v2444 = vadd.f32 %v2325, %v2351
        %v2445 = vadd.f32 %v2326, %v2351
        %v2446 = vadd.f32 %v2327, %v2351
        %v2447 = vadd.f32 %v2328, %v2351
        %v2448 = vadd.f32 %v2329, %v2351
        %v2449 = vadd.f32 %v2330, %v2351
        %v2450 = vadd.f32 %v2331, %v2351
        %v2451 = vadd.f32 %v2332, %v2351
        %v2452 = vadd.f32 %v2333, %v2351
        %v2453 = vadd.f32 %v2334, %v2351
        %v2454 = vadd.f32 %v2335, %v2351
        %v2455 = vadd.f32 %v2336, %v2351
        %v2456 = vadd.f32 %v2337, %v2351
        %v2457 = vadd.f32 %v2338, %v2351
        %v2458 = vadd.f32 %v2339, %v2351
        %v2459 = vadd.f32 %v2340, %v2351
        %v2460 = vadd.f32 %v2341, %v2351
        %v2461 = vadd.f32 %v2342, %v2351
        %v2462 = vadd.f32 %v2343, %v2351
        %v2463 = vadd.f32 %v2344, %v2351
        %v2464 = vadd.f32 %v2345, %v2351
        %v2465 = vmax.f32 %v2353, 0.0
        %v2466 = vmax.f32 %v2354, 0.0
        %v2467 = vmax.f32 %v2355, 0.0
        %v2468 = vmax.f32 %v2356, 0.0
        %v2469 = vmax.f32 %v2357, 0.0
        %v2470 = vmax.f32 %v2358, 0.0
        %v2471 = vmax.f32 %v2359, 0.0
        %v2472 = vmax.f32 %v2360, 0.0
        %v2473 = vmax.f32 %v2361, 0.0
        %v2474 = vmax.f32 %v2362, 0.0
        %v2475 = vmax.f32 %v2363, 0.0
        %v2476 = vmax.f32 %v2364, 0.0
        %v2477 = vmax.f32 %v2365, 0.0
        %v2478 = vmax.f32 %v2366, 0.0
        %v2479 = vmax.f32 %v2367, 0.0
        %v2480 = vmax.f32 %v2368, 0.0
        %v2481 = vmax.f32 %v2369, 0.0
        %v2482 = vmax.f32 %v2370, 0.0
        %v2483 = vmax.f32 %v2371, 0.0
        %v2484 = vmax.f32 %v2372, 0.0
        %v2485 = vmax.f32 %v2373, 0.0
        %v2486 = vmax.f32 %v2374, 0.0
        %v2487 = vmax.f32 %v2375, 0.0
        %v2488 = vmax.f32 %v2376, 0.0
        %v2489 = vmax.f32 %v2377, 0.0
        %v2490 = vmax.f32 %v2378, 0.0
        %v2491 = vmax.f32 %v2379, 0.0
        %v2492 = vmax.f32 %v2380, 0.0
        %v2493 = vmax.f32 %v2381, 0.0
        %v2494 = vmax.f32 %v2382, 0.0
        %v2495 = vmax.f32 %v2383, 0.0
        %v2496 = vmax.f32 %v2384, 0.0
        %v2497 = vmax.f32 %v2385, 0.0
        %v2498 = vmax.f32 %v2386, 0.0
        %v2499 = vmax.f32 %v2387, 0.0
        %v2500 = vmax.f32 %v2388, 0.0
        %v2501 = vmax.f32 %v2389, 0.0
        %v2502 = vmax.f32 %v2390, 0.0
        %v2503 = vmax.f32 %v2391, 0.0
        %v2504 = vmax.f32 %v2392, 0.0
        %v2505 = vmax.f32 %v2393, 0.0
        %v2506 = vmax.f32 %v2394, 0.0
        %v2507 = vmax.f32 %v2395, 0.0
        %v2508 = vmax.f32 %v2396, 0.0
        %v2509 = vmax.f32 %v2397, 0.0
        %v2510 = vmax.f32 %v2398, 0.0
        %v2511 = vmax.f32 %v2399, 0.0
        %v2512 = vmax.f32 %v2400, 0.0
        %v2513 = vmax.f32 %v2401, 0.0
        %v2514 = vmax.f32 %v2402, 0.0
        %v2515 = vmax.f32 %v2403, 0.0
        %v2516 = vmax.f32 %v2404, 0.0
        %v2517 = vmax.f32 %v2405, 0.0
        %v2518 = vmax.f32 %v2406, 0.0
        %v2519 = vmax.f32 %v2407, 0.0
        %v2520 = vmax.f32 %v2408, 0.0
        %v2521 = vmax.f32 %v2409, 0.0
        %v2522 = vmax.f32 %v2410, 0.0
        %v2523 = vmax.f32 %v2411, 0.0
        %v2524 = vmax.f32 %v2412, 0.0
        %v2525 = vmax.f32 %v2413, 0.0
        %v2526 = vmax.f32 %v2414, 0.0
        %v2527 = vmax.f32 %v2415, 0.0
        %v2528 = vmax.f32 %v2416, 0.0
        %v2529 = vmax.f32 %v2417, 0.0
        %v2530 = vmax.f32 %v2418, 0.0
        %v2531 = vmax.f32 %v2419, 0.0
        %v2532 = vmax.f32 %v2420, 0.0
        %v2533 = vmax.f32 %v2421, 0.0
        %v2534 = vmax.f32 %v2422, 0.0
        %v2535 = vmax.f32 %v2423, 0.0
        %v2536 = vmax.f32 %v2424, 0.0
        %v2537 = vmax.f32 %v2425, 0.0
        %v2538 = vmax.f32 %v2426, 0.0
        %v2539 = vmax.f32 %v2427, 0.0
        %v2540 = vmax.f32 %v2428, 0.0
        %v2541 = vmax.f32 %v2429, 0.0
        %v2542 = vmax.f32 %v2430, 0.0
        %v2543 = vmax.f32 %v2431, 0.0
        %v2544 = vmax.f32 %v2432, 0.0
        %v2545 = vmax.f32 %v2433, 0.0
        %v2546 = vmax.f32 %v2434, 0.0
        %v2547 = vmax.f32 %v2435, 0.0
        %v2548 = vmax.f32 %v2436, 0.0
        %v2549 = vmax.f32 %v2437, 0.0
        %v2550 = vmax.f32 %v2438, 0.0
        %v2551 = vmax.f32 %v2439, 0.0
        %v2552 = vmax.f32 %v2440, 0.0
        %v2553 = vmax.f32 %v2441, 0.0
        %v2554 = vmax.f32 %v2442, 0.0
        %v2555 = vmax.f32 %v2443, 0.0
        %v2556 = vmax.f32 %v2444, 0.0
        %v2557 = vmax.f32 %v2445, 0.0
        %v2558 = vmax.f32 %v2446, 0.0
        %v2559 = vmax.f32 %v2447, 0.0
        %v2560 = vmax.f32 %v2448, 0.0
        %v2561 = vmax.f32 %v2449, 0.0
        %v2562 = vmax.f32 %v2450, 0.0
        %v2563 = vmax.f32 %v2451, 0.0
        %v2564 = vmax.f32 %v2452, 0.0
        %v2565 = vmax.f32 %v2453, 0.0
        %v2566 = vmax.f32 %v2454, 0.0
        %v2567 = vmax.f32 %v2455, 0.0
        %v2568 = vmax.f32 %v2456, 0.0
        %v2569 = vmax.f32 %v2457, 0.0
        %v2570 = vmax.f32 %v2458, 0.0
        %v2571 = vmax.f32 %v2459, 0.0
        %v2572 = vmax.f32 %v2460, 0.0
        %v2573 = vmax.f32 %v2461, 0.0
        %v2574 = vmax.f32 %v2462, 0.0
        %v2575 = vmax.f32 %v2463, 0.0
        %v2576 = vmax.f32 %v2464, 0.0
        %v2577 = vpack.c.bf16 %v2466, %v2465
        %v2578 = vpack.c.bf16 %v2468, %v2467
        %v2579 = vpack.c.bf16 %v2470, %v2469
        %v2580 = vpack.c.bf16 %v2472, %v2471
        %v2581 = vpack.c.bf16 %v2474, %v2473
        %v2582 = vpack.c.bf16 %v2476, %v2475
        %v2583 = vpack.c.bf16 %v2478, %v2477
        %v2584 = vpack.c.bf16 %v2480, %v2479
        %v2585 = vpack.c.bf16 %v2482, %v2481
        %v2586 = vpack.c.bf16 %v2484, %v2483
        %v2587 = vpack.c.bf16 %v2486, %v2485
        %v2588 = vpack.c.bf16 %v2488, %v2487
        %v2589 = vpack.c.bf16 %v2490, %v2489
        %v2590 = vpack.c.bf16 %v2492, %v2491
        %v2591 = vpack.c.bf16 %v2494, %v2493
        %v2592 = vpack.c.bf16 %v2496, %v2495
        %v2593 = vpack.c.bf16 %v2498, %v2497
        %v2594 = vpack.c.bf16 %v2500, %v2499
        %v2595 = vpack.c.bf16 %v2502, %v2501
        %v2596 = vpack.c.bf16 %v2504, %v2503
        %v2597 = vpack.c.bf16 %v2506, %v2505
        %v2598 = vpack.c.bf16 %v2508, %v2507
        %v2599 = vpack.c.bf16 %v2510, %v2509
        %v2600 = vpack.c.bf16 %v2512, %v2511
        %v2601 = vpack.c.bf16 %v2514, %v2513
        %v2602 = vpack.c.bf16 %v2516, %v2515
        %v2603 = vpack.c.bf16 %v2518, %v2517
        %v2604 = vpack.c.bf16 %v2520, %v2519
        %v2605 = vpack.c.bf16 %v2522, %v2521
        %v2606 = vpack.c.bf16 %v2524, %v2523
        %v2607 = vpack.c.bf16 %v2526, %v2525
        %v2608 = vpack.c.bf16 %v2528, %v2527
        %v2609 = vpack.c.bf16 %v2530, %v2529
        %v2610 = vpack.c.bf16 %v2532, %v2531
        %v2611 = vpack.c.bf16 %v2534, %v2533
        %v2612 = vpack.c.bf16 %v2536, %v2535
        %v2613 = vpack.c.bf16 %v2538, %v2537
        %v2614 = vpack.c.bf16 %v2540, %v2539
        %v2615 = vpack.c.bf16 %v2542, %v2541
        %v2616 = vpack.c.bf16 %v2544, %v2543
        %v2617 = vpack.c.bf16 %v2546, %v2545
        %v2618 = vpack.c.bf16 %v2548, %v2547
        %v2619 = vpack.c.bf16 %v2550, %v2549
        %v2620 = vpack.c.bf16 %v2552, %v2551
        %v2621 = vpack.c.bf16 %v2554, %v2553
        %v2622 = vpack.c.bf16 %v2556, %v2555
        %v2623 = vpack.c.bf16 %v2558, %v2557
        %v2624 = vpack.c.bf16 %v2560, %v2559
        %v2625 = vpack.c.bf16 %v2562, %v2561
        %v2626 = vpack.c.bf16 %v2564, %v2563
        %v2627 = vpack.c.bf16 %v2566, %v2565
        %v2628 = vpack.c.bf16 %v2568, %v2567
        %v2629 = vpack.c.bf16 %v2570, %v2569
        %v2630 = vpack.c.bf16 %v2572, %v2571
        %v2631 = vpack.c.bf16 %v2574, %v2573
        %v2632 = vpack.c.bf16 %v2576, %v2575
        %v2689 = vunpack.c.l.b16 %v2577
        %v2690 = vunpack.c.h.b16 %v2577
        %v2691 = vunpack.c.l.b16 %v2578
        %v2692 = vunpack.c.h.b16 %v2578
        %v2693 = vunpack.c.l.b16 %v2579
        %v2694 = vunpack.c.h.b16 %v2579
        %v2695 = vunpack.c.l.b16 %v2580
        %v2696 = vunpack.c.h.b16 %v2580
        %v2697 = vunpack.c.l.b16 %v2581
        %v2698 = vunpack.c.h.b16 %v2581
        %v2699 = vunpack.c.l.b16 %v2582
        %v2700 = vunpack.c.h.b16 %v2582
        %v2701 = vunpack.c.l.b16 %v2583
        %v2702 = vunpack.c.h.b16 %v2583
        %v2703 = vunpack.c.l.b16 %v2584
        %v2704 = vunpack.c.h.b16 %v2584
        %v2705 = vunpack.c.l.b16 %v2585
        %v2706 = vunpack.c.h.b16 %v2585
        %v2707 = vunpack.c.l.b16 %v2586
        %v2708 = vunpack.c.h.b16 %v2586
        %v2709 = vunpack.c.l.b16 %v2587
        %v2710 = vunpack.c.h.b16 %v2587
        %v2711 = vunpack.c.l.b16 %v2588
        %v2712 = vunpack.c.h.b16 %v2588
        %v2713 = vunpack.c.l.b16 %v2589
        %v2714 = vunpack.c.h.b16 %v2589
        %v2715 = vunpack.c.l.b16 %v2590
        %v2716 = vunpack.c.h.b16 %v2590
        %v2717 = vunpack.c.l.b16 %v2591
        %v2718 = vunpack.c.h.b16 %v2591
        %v2719 = vunpack.c.l.b16 %v2592
        %v2720 = vunpack.c.h.b16 %v2592
        %v2721 = vunpack.c.l.b16 %v2593
        %v2722 = vunpack.c.h.b16 %v2593
        %v2723 = vunpack.c.l.b16 %v2594
        %v2724 = vunpack.c.h.b16 %v2594
        %v2725 = vunpack.c.l.b16 %v2595
        %v2726 = vunpack.c.h.b16 %v2595
        %v2727 = vunpack.c.l.b16 %v2596
        %v2728 = vunpack.c.h.b16 %v2596
        %v2729 = vunpack.c.l.b16 %v2597
        %v2730 = vunpack.c.h.b16 %v2597
        %v2731 = vunpack.c.l.b16 %v2598
        %v2732 = vunpack.c.h.b16 %v2598
        %v2733 = vunpack.c.l.b16 %v2599
        %v2734 = vunpack.c.h.b16 %v2599
        %v2735 = vunpack.c.l.b16 %v2600
        %v2736 = vunpack.c.h.b16 %v2600
        %v2737 = vunpack.c.l.b16 %v2601
        %v2738 = vunpack.c.h.b16 %v2601
        %v2739 = vunpack.c.l.b16 %v2602
        %v2740 = vunpack.c.h.b16 %v2602
        %v2741 = vunpack.c.l.b16 %v2603
        %v2742 = vunpack.c.h.b16 %v2603
        %v2743 = vunpack.c.l.b16 %v2604
        %v2744 = vunpack.c.h.b16 %v2604
        %v2745 = vunpack.c.l.b16 %v2605
        %v2746 = vunpack.c.h.b16 %v2605
        %v2747 = vunpack.c.l.b16 %v2606
        %v2748 = vunpack.c.h.b16 %v2606
        %v2749 = vunpack.c.l.b16 %v2607
        %v2750 = vunpack.c.h.b16 %v2607
        %v2751 = vunpack.c.l.b16 %v2608
        %v2752 = vunpack.c.h.b16 %v2608
        %v2753 = vunpack.c.l.b16 %v2609
        %v2754 = vunpack.c.h.b16 %v2609
        %v2755 = vunpack.c.l.b16 %v2610
        %v2756 = vunpack.c.h.b16 %v2610
        %v2757 = vunpack.c.l.b16 %v2611
        %v2758 = vunpack.c.h.b16 %v2611
        %v2759 = vunpack.c.l.b16 %v2612
        %v2760 = vunpack.c.h.b16 %v2612
        %v2761 = vunpack.c.l.b16 %v2613
        %v2762 = vunpack.c.h.b16 %v2613
        %v2763 = vunpack.c.l.b16 %v2614
        %v2764 = vunpack.c.h.b16 %v2614
        %v2765 = vunpack.c.l.b16 %v2615
        %v2766 = vunpack.c.h.b16 %v2615
        %v2767 = vunpack.c.l.b16 %v2616
        %v2768 = vunpack.c.h.b16 %v2616
        %v2769 = vunpack.c.l.b16 %v2617
        %v2770 = vunpack.c.h.b16 %v2617
        %v2771 = vunpack.c.l.b16 %v2618
        %v2772 = vunpack.c.h.b16 %v2618
        %v2773 = vunpack.c.l.b16 %v2619
        %v2774 = vunpack.c.h.b16 %v2619
        %v2775 = vunpack.c.l.b16 %v2620
        %v2776 = vunpack.c.h.b16 %v2620
        %v2777 = vunpack.c.l.b16 %v2621
        %v2778 = vunpack.c.h.b16 %v2621
        %v2779 = vunpack.c.l.b16 %v2622
        %v2780 = vunpack.c.h.b16 %v2622
        %v2781 = vunpack.c.l.b16 %v2623
        %v2782 = vunpack.c.h.b16 %v2623
        %v2783 = vunpack.c.l.b16 %v2624
        %v2784 = vunpack.c.h.b16 %v2624
        %v2785 = vunpack.c.l.b16 %v2625
        %v2786 = vunpack.c.h.b16 %v2625
        %v2787 = vunpack.c.l.b16 %v2626
        %v2788 = vunpack.c.h.b16 %v2626
        %v2789 = vunpack.c.l.b16 %v2627
        %v2790 = vunpack.c.h.b16 %v2627
        %v2791 = vunpack.c.l.b16 %v2628
        %v2792 = vunpack.c.h.b16 %v2628
        %v2793 = vunpack.c.l.b16 %v2629
        %v2794 = vunpack.c.h.b16 %v2629
        %v2795 = vunpack.c.l.b16 %v2630
        %v2796 = vunpack.c.h.b16 %v2630
        %v2797 = vunpack.c.l.b16 %v2631
        %v2798 = vunpack.c.h.b16 %v2631
        %v2799 = vunpack.c.l.b16 %v2632
        %v2800 = vunpack.c.h.b16 %v2632
        %v2801 = vpack.c.b16 %v2689, %v2689
        %v2802 = vpack.c.b16 %v2690, %v2690
        %v2803 = vpack.c.b16 %v2691, %v2691
        %v2804 = vpack.c.b16 %v2692, %v2692
        %v2805 = vpack.c.b16 %v2693, %v2693
        %v2806 = vpack.c.b16 %v2694, %v2694
        %v2807 = vpack.c.b16 %v2695, %v2695
        %v2808 = vpack.c.b16 %v2696, %v2696
        %v2809 = vpack.c.b16 %v2697, %v2697
        %v2810 = vpack.c.b16 %v2698, %v2698
        %v2811 = vpack.c.b16 %v2699, %v2699
        %v2812 = vpack.c.b16 %v2700, %v2700
        %v2813 = vpack.c.b16 %v2701, %v2701
        %v2814 = vpack.c.b16 %v2702, %v2702
        %v2815 = vpack.c.b16 %v2703, %v2703
        %v2816 = vpack.c.b16 %v2704, %v2704
        %v2817 = vpack.c.b16 %v2705, %v2705
        %v2818 = vpack.c.b16 %v2706, %v2706
        %v2819 = vpack.c.b16 %v2707, %v2707
        %v2820 = vpack.c.b16 %v2708, %v2708
        %v2821 = vpack.c.b16 %v2709, %v2709
        %v2822 = vpack.c.b16 %v2710, %v2710
        %v2823 = vpack.c.b16 %v2711, %v2711
        %v2824 = vpack.c.b16 %v2712, %v2712
        %v2825 = vpack.c.b16 %v2713, %v2713
        %v2826 = vpack.c.b16 %v2714, %v2714
        %v2827 = vpack.c.b16 %v2715, %v2715
        %v2828 = vpack.c.b16 %v2716, %v2716
        %v2829 = vpack.c.b16 %v2717, %v2717
        %v2830 = vpack.c.b16 %v2718, %v2718
        %v2831 = vpack.c.b16 %v2719, %v2719
        %v2832 = vpack.c.b16 %v2720, %v2720
        %v2833 = vpack.c.b16 %v2721, %v2721
        %v2834 = vpack.c.b16 %v2722, %v2722
        %v2835 = vpack.c.b16 %v2723, %v2723
        %v2836 = vpack.c.b16 %v2724, %v2724
        %v2837 = vpack.c.b16 %v2725, %v2725
        %v2838 = vpack.c.b16 %v2726, %v2726
        %v2839 = vpack.c.b16 %v2727, %v2727
        %v2840 = vpack.c.b16 %v2728, %v2728
        %v2841 = vpack.c.b16 %v2729, %v2729
        %v2842 = vpack.c.b16 %v2730, %v2730
        %v2843 = vpack.c.b16 %v2731, %v2731
        %v2844 = vpack.c.b16 %v2732, %v2732
        %v2845 = vpack.c.b16 %v2733, %v2733
        %v2846 = vpack.c.b16 %v2734, %v2734
        %v2847 = vpack.c.b16 %v2735, %v2735
        %v2848 = vpack.c.b16 %v2736, %v2736
        %v2849 = vpack.c.b16 %v2737, %v2737
        %v2850 = vpack.c.b16 %v2738, %v2738
        %v2851 = vpack.c.b16 %v2739, %v2739
        %v2852 = vpack.c.b16 %v2740, %v2740
        %v2853 = vpack.c.b16 %v2741, %v2741
        %v2854 = vpack.c.b16 %v2742, %v2742
        %v2855 = vpack.c.b16 %v2743, %v2743
        %v2856 = vpack.c.b16 %v2744, %v2744
        %v2857 = vpack.c.b16 %v2745, %v2745
        %v2858 = vpack.c.b16 %v2746, %v2746
        %v2859 = vpack.c.b16 %v2747, %v2747
        %v2860 = vpack.c.b16 %v2748, %v2748
        %v2861 = vpack.c.b16 %v2749, %v2749
        %v2862 = vpack.c.b16 %v2750, %v2750
        %v2863 = vpack.c.b16 %v2751, %v2751
        %v2864 = vpack.c.b16 %v2752, %v2752
        %v2865 = vpack.c.b16 %v2753, %v2753
        %v2866 = vpack.c.b16 %v2754, %v2754
        %v2867 = vpack.c.b16 %v2755, %v2755
        %v2868 = vpack.c.b16 %v2756, %v2756
        %v2869 = vpack.c.b16 %v2757, %v2757
        %v2870 = vpack.c.b16 %v2758, %v2758
        %v2871 = vpack.c.b16 %v2759, %v2759
        %v2872 = vpack.c.b16 %v2760, %v2760
        %v2873 = vpack.c.b16 %v2761, %v2761
        %v2874 = vpack.c.b16 %v2762, %v2762
        %v2875 = vpack.c.b16 %v2763, %v2763
        %v2876 = vpack.c.b16 %v2764, %v2764
        %v2877 = vpack.c.b16 %v2765, %v2765
        %v2878 = vpack.c.b16 %v2766, %v2766
        %v2879 = vpack.c.b16 %v2767, %v2767
        %v2880 = vpack.c.b16 %v2768, %v2768
        %v2881 = vpack.c.b16 %v2769, %v2769
        %v2882 = vpack.c.b16 %v2770, %v2770
        %v2883 = vpack.c.b16 %v2771, %v2771
        %v2884 = vpack.c.b16 %v2772, %v2772
        %v2885 = vpack.c.b16 %v2773, %v2773
        %v2886 = vpack.c.b16 %v2774, %v2774
        %v2887 = vpack.c.b16 %v2775, %v2775
        %v2888 = vpack.c.b16 %v2776, %v2776
        %v2889 = vpack.c.b16 %v2777, %v2777
        %v2890 = vpack.c.b16 %v2778, %v2778
        %v2891 = vpack.c.b16 %v2779, %v2779
        %v2892 = vpack.c.b16 %v2780, %v2780
        %v2893 = vpack.c.b16 %v2781, %v2781
        %v2894 = vpack.c.b16 %v2782, %v2782
        %v2895 = vpack.c.b16 %v2783, %v2783
        %v2896 = vpack.c.b16 %v2784, %v2784
        %v2897 = vpack.c.b16 %v2785, %v2785
        %v2898 = vpack.c.b16 %v2786, %v2786
        %v2899 = vpack.c.b16 %v2787, %v2787
        %v2900 = vpack.c.b16 %v2788, %v2788
        %v2901 = vpack.c.b16 %v2789, %v2789
        %v2902 = vpack.c.b16 %v2790, %v2790
        %v2903 = vpack.c.b16 %v2791, %v2791
        %v2904 = vpack.c.b16 %v2792, %v2792
        %v2905 = vpack.c.b16 %v2793, %v2793
        %v2906 = vpack.c.b16 %v2794, %v2794
        %v2907 = vpack.c.b16 %v2795, %v2795
        %v2908 = vpack.c.b16 %v2796, %v2796
        %v2909 = vpack.c.b16 %v2797, %v2797
        %v2910 = vpack.c.b16 %v2798, %v2798
        %v2911 = vpack.c.b16 %v2799, %v2799
        %v2912 = vpack.c.b16 %v2800, %v2800
        %vm3025 = vcmask 519168
        %3026 = vst.msk [vmem:[%s306] sm:$0xf] %vm3025, %v2801
        %3027 = vst.msk [vmem:[%s306 + $0x4] sm:$0xf] %vm3025, %v2802
        %3028 = vst.msk [vmem:[%s306 + $0x8] sm:$0xf] %vm3025, %v2803
        %3029 = vst.msk [vmem:[%s306 + $0xc] sm:$0xf] %vm3025, %v2804
        %3030 = vst.msk [vmem:[%s306 + $0x10] sm:$0xf] %vm3025, %v2805
        %3031 = vst.msk [vmem:[%s306 + $0x14] sm:$0xf] %vm3025, %v2806
        %3032 = vst.msk [vmem:[%s306 + $0x18] sm:$0xf] %vm3025, %v2807
        %3033 = vst.msk [vmem:[%s306 + $0x1c] sm:$0xf] %vm3025, %v2808
        %3034 = vst.msk [vmem:[%s306 + $0x20] sm:$0xf] %vm3025, %v2809
        %3035 = vst.msk [vmem:[%s306 + $0x24] sm:$0xf] %vm3025, %v2810
        %3036 = vst.msk [vmem:[%s306 + $0x28] sm:$0xf] %vm3025, %v2811
        %3037 = vst.msk [vmem:[%s306 + $0x2c] sm:$0xf] %vm3025, %v2812
        %3038 = vst.msk [vmem:[%s306 + $0x30] sm:$0xf] %vm3025, %v2813
        %3039 = vst.msk [vmem:[%s306 + $0x34] sm:$0xf] %vm3025, %v2814
        %3040 = vst.msk [vmem:[%s306 + $0x38] sm:$0xf] %vm3025, %v2815
        %3041 = vst.msk [vmem:[%s306 + $0x3c] sm:$0xf] %vm3025, %v2816
        %3042 = vst.msk [vmem:[%s306 + $0x40] sm:$0xf] %vm3025, %v2817
        %3043 = vst.msk [vmem:[%s306 + $0x44] sm:$0xf] %vm3025, %v2818
        %3044 = vst.msk [vmem:[%s306 + $0x48] sm:$0xf] %vm3025, %v2819
        %3045 = vst.msk [vmem:[%s306 + $0x4c] sm:$0xf] %vm3025, %v2820
        %3046 = vst.msk [vmem:[%s306 + $0x50] sm:$0xf] %vm3025, %v2821
        %3047 = vst.msk [vmem:[%s306 + $0x54] sm:$0xf] %vm3025, %v2822
        %3048 = vst.msk [vmem:[%s306 + $0x58] sm:$0xf] %vm3025, %v2823
        %3049 = vst.msk [vmem:[%s306 + $0x5c] sm:$0xf] %vm3025, %v2824
        %3050 = vst.msk [vmem:[%s306 + $0x60] sm:$0xf] %vm3025, %v2825
        %3051 = vst.msk [vmem:[%s306 + $0x64] sm:$0xf] %vm3025, %v2826
        %3052 = vst.msk [vmem:[%s306 + $0x68] sm:$0xf] %vm3025, %v2827
        %3053 = vst.msk [vmem:[%s306 + $0x6c] sm:$0xf] %vm3025, %v2828
        %3054 = vst.msk [vmem:[%s306 + $0x70] sm:$0xf] %vm3025, %v2829
        %3055 = vst.msk [vmem:[%s306 + $0x74] sm:$0xf] %vm3025, %v2830
        %3056 = vst.msk [vmem:[%s306 + $0x78] sm:$0xf] %vm3025, %v2831
        %3057 = vst.msk [vmem:[%s306 + $0x7c] sm:$0xf] %vm3025, %v2832
        %3058 = vst.msk [vmem:[%s306 + $0x80] sm:$0xf] %vm3025, %v2833
        %3059 = vst.msk [vmem:[%s306 + $0x84] sm:$0xf] %vm3025, %v2834
        %3060 = vst.msk [vmem:[%s306 + $0x88] sm:$0xf] %vm3025, %v2835
        %3061 = vst.msk [vmem:[%s306 + $0x8c] sm:$0xf] %vm3025, %v2836
        %3062 = vst.msk [vmem:[%s306 + $0x90] sm:$0xf] %vm3025, %v2837
        %3063 = vst.msk [vmem:[%s306 + $0x94] sm:$0xf] %vm3025, %v2838
        %3064 = vst.msk [vmem:[%s306 + $0x98] sm:$0xf] %vm3025, %v2839
        %3065 = vst.msk [vmem:[%s306 + $0x9c] sm:$0xf] %vm3025, %v2840
        %3066 = vst.msk [vmem:[%s306 + $0xa0] sm:$0xf] %vm3025, %v2841
        %3067 = vst.msk [vmem:[%s306 + $0xa4] sm:$0xf] %vm3025, %v2842
        %3068 = vst.msk [vmem:[%s306 + $0xa8] sm:$0xf] %vm3025, %v2843
        %3069 = vst.msk [vmem:[%s306 + $0xac] sm:$0xf] %vm3025, %v2844
        %3070 = vst.msk [vmem:[%s306 + $0xb0] sm:$0xf] %vm3025, %v2845
        %3071 = vst.msk [vmem:[%s306 + $0xb4] sm:$0xf] %vm3025, %v2846
        %3072 = vst.msk [vmem:[%s306 + $0xb8] sm:$0xf] %vm3025, %v2847
        %3073 = vst.msk [vmem:[%s306 + $0xbc] sm:$0xf] %vm3025, %v2848
        %3074 = vst.msk [vmem:[%s306 + $0xc0] sm:$0xf] %vm3025, %v2849
        %3075 = vst.msk [vmem:[%s306 + $0xc4] sm:$0xf] %vm3025, %v2850
        %3076 = vst.msk [vmem:[%s306 + $0xc8] sm:$0xf] %vm3025, %v2851
        %3077 = vst.msk [vmem:[%s306 + $0xcc] sm:$0xf] %vm3025, %v2852
        %3078 = vst.msk [vmem:[%s306 + $0xd0] sm:$0xf] %vm3025, %v2853
        %3079 = vst.msk [vmem:[%s306 + $0xd4] sm:$0xf] %vm3025, %v2854
        %3080 = vst.msk [vmem:[%s306 + $0xd8] sm:$0xf] %vm3025, %v2855
        %3081 = vst.msk [vmem:[%s306 + $0xdc] sm:$0xf] %vm3025, %v2856
        %3082 = vst.msk [vmem:[%s306 + $0xe0] sm:$0xf] %vm3025, %v2857
        %3083 = vst.msk [vmem:[%s306 + $0xe4] sm:$0xf] %vm3025, %v2858
        %3084 = vst.msk [vmem:[%s306 + $0xe8] sm:$0xf] %vm3025, %v2859
        %3085 = vst.msk [vmem:[%s306 + $0xec] sm:$0xf] %vm3025, %v2860
        %3086 = vst.msk [vmem:[%s306 + $0xf0] sm:$0xf] %vm3025, %v2861
        %3087 = vst.msk [vmem:[%s306 + $0xf4] sm:$0xf] %vm3025, %v2862
        %3088 = vst.msk [vmem:[%s306 + $0xf8] sm:$0xf] %vm3025, %v2863
        %3089 = vst.msk [vmem:[%s306 + $0xfc] sm:$0xf] %vm3025, %v2864
        %3090 = vst.msk [vmem:[%s306 + $0x100] sm:$0xf] %vm3025, %v2865
        %3091 = vst.msk [vmem:[%s306 + $0x104] sm:$0xf] %vm3025, %v2866
        %3092 = vst.msk [vmem:[%s306 + $0x108] sm:$0xf] %vm3025, %v2867
        %3093 = vst.msk [vmem:[%s306 + $0x10c] sm:$0xf] %vm3025, %v2868
        %3094 = vst.msk [vmem:[%s306 + $0x110] sm:$0xf] %vm3025, %v2869
        %3095 = vst.msk [vmem:[%s306 + $0x114] sm:$0xf] %vm3025, %v2870
        %3096 = vst.msk [vmem:[%s306 + $0x118] sm:$0xf] %vm3025, %v2871
        %3097 = vst.msk [vmem:[%s306 + $0x11c] sm:$0xf] %vm3025, %v2872
        %3098 = vst.msk [vmem:[%s306 + $0x120] sm:$0xf] %vm3025, %v2873
        %3099 = vst.msk [vmem:[%s306 + $0x124] sm:$0xf] %vm3025, %v2874
        %3100 = vst.msk [vmem:[%s306 + $0x128] sm:$0xf] %vm3025, %v2875
        %3101 = vst.msk [vmem:[%s306 + $0x12c] sm:$0xf] %vm3025, %v2876
        %3102 = vst.msk [vmem:[%s306 + $0x130] sm:$0xf] %vm3025, %v2877
        %3103 = vst.msk [vmem:[%s306 + $0x134] sm:$0xf] %vm3025, %v2878
        %3104 = vst.msk [vmem:[%s306 + $0x138] sm:$0xf] %vm3025, %v2879
        %3105 = vst.msk [vmem:[%s306 + $0x13c] sm:$0xf] %vm3025, %v2880
        %3106 = vst.msk [vmem:[%s306 + $0x140] sm:$0xf] %vm3025, %v2881
        %3107 = vst.msk [vmem:[%s306 + $0x144] sm:$0xf] %vm3025, %v2882
        %3108 = vst.msk [vmem:[%s306 + $0x148] sm:$0xf] %vm3025, %v2883
        %3109 = vst.msk [vmem:[%s306 + $0x14c] sm:$0xf] %vm3025, %v2884
        %3110 = vst.msk [vmem:[%s306 + $0x150] sm:$0xf] %vm3025, %v2885
        %3111 = vst.msk [vmem:[%s306 + $0x154] sm:$0xf] %vm3025, %v2886
        %3112 = vst.msk [vmem:[%s306 + $0x158] sm:$0xf] %vm3025, %v2887
        %3113 = vst.msk [vmem:[%s306 + $0x15c] sm:$0xf] %vm3025, %v2888
        %3114 = vst.msk [vmem:[%s306 + $0x160] sm:$0xf] %vm3025, %v2889
        %3115 = vst.msk [vmem:[%s306 + $0x164] sm:$0xf] %vm3025, %v2890
        %3116 = vst.msk [vmem:[%s306 + $0x168] sm:$0xf] %vm3025, %v2891
        %3117 = vst.msk [vmem:[%s306 + $0x16c] sm:$0xf] %vm3025, %v2892
        %3118 = vst.msk [vmem:[%s306 + $0x170] sm:$0xf] %vm3025, %v2893
        %3119 = vst.msk [vmem:[%s306 + $0x174] sm:$0xf] %vm3025, %v2894
        %3120 = vst.msk [vmem:[%s306 + $0x178] sm:$0xf] %vm3025, %v2895
        %3121 = vst.msk [vmem:[%s306 + $0x17c] sm:$0xf] %vm3025, %v2896
        %3122 = vst.msk [vmem:[%s306 + $0x180] sm:$0xf] %vm3025, %v2897
        %3123 = vst.msk [vmem:[%s306 + $0x184] sm:$0xf] %vm3025, %v2898
        %3124 = vst.msk [vmem:[%s306 + $0x188] sm:$0xf] %vm3025, %v2899
        %3125 = vst.msk [vmem:[%s306 + $0x18c] sm:$0xf] %vm3025, %v2900
        %3126 = vst.msk [vmem:[%s306 + $0x190] sm:$0xf] %vm3025, %v2901
        %3127 = vst.msk [vmem:[%s306 + $0x194] sm:$0xf] %vm3025, %v2902
        %3128 = vst.msk [vmem:[%s306 + $0x198] sm:$0xf] %vm3025, %v2903
        %3129 = vst.msk [vmem:[%s306 + $0x19c] sm:$0xf] %vm3025, %v2904
        %3130 = vst.msk [vmem:[%s306 + $0x1a0] sm:$0xf] %vm3025, %v2905
        %3131 = vst.msk [vmem:[%s306 + $0x1a4] sm:$0xf] %vm3025, %v2906
        %3132 = vst.msk [vmem:[%s306 + $0x1a8] sm:$0xf] %vm3025, %v2907
        %3133 = vst.msk [vmem:[%s306 + $0x1ac] sm:$0xf] %vm3025, %v2908
        %3134 = vst.msk [vmem:[%s306 + $0x1b0] sm:$0xf] %vm3025, %v2909
        %3135 = vst.msk [vmem:[%s306 + $0x1b4] sm:$0xf] %vm3025, %v2910
        %3136 = vst.msk [vmem:[%s306 + $0x1b8] sm:$0xf] %vm3025, %v2911
        %3137 = vst.msk [vmem:[%s306 + $0x1bc] sm:$0xf] %vm3025, %v2912
      $region44: #{tpu_custom_call.1} parent=35 // pred_fallthru
        _
      %s3138 = smul.u32 112, %s20
      %p3139 = scmp.lt.s32.totalorder %s3138, 3135
      %s3140 = scalar_select %p3139, %s3138, 3135
      %p3141 = scmp.lt.s32.totalorder %s21, 0
      %s3142 = scalar_select %p3141, %s21, 0
      %s3143 = sadd.s32 %s3142, %s3140
      %s3144 = smul.addr %s3143, 4
      %s3145 = scalar_lea.vmem %s4, %s3144
      // Predicated region
      $region45: #{tpu_custom_call.1} parent=35 // pred_check
        %p3146 = pneg %p162
      $region46: #{tpu_custom_call.1} parent=35 // pred_check_branch
        %3148 = sbr.rel (%p3146) target = $region48
      $region47: #{tpu_custom_call.1} parent=35 // pred_region
        %s3149 = smul.u32 112, %s20
      $region48: #{tpu_custom_call.1} parent=35 // pred_fallthru
        _
    $region36: #{tpu_custom_call.1} parent=5 // pred_fallthru
      _
    %p3150 = scmp.le.s32.totalorder 2, %s10
    // Predicated region
    $region49: #{tpu_custom_call.1} parent=5 // pred_check
      %p3151 = pneg %p3150
    $region50: #{tpu_custom_call.1} parent=5 // pred_check_branch
      %3153 = sbr.rel (%p3151) target = $region52
    $region51: #{tpu_custom_call.1} parent=5 // pred_region
      %s3154 = ssub.s32 %s10, 2
      // Predicated region
      $region53: #{tpu_custom_call.1} parent=51 // pred_check
        %p3155 = pneg %p168
      $region54: #{tpu_custom_call.1} parent=51 // pred_check_branch
        %3157 = sbr.rel (%p3155) target = $region56
      $region55: #{tpu_custom_call.1} parent=51 // pred_region
        %s3158 = smul.u32 112, %s23
        %p3159 = scmp.lt.s32.totalorder %s3158, 3135
        %s3160 = scalar_select %p3159, %s3158, 3135
        %p3161 = scmp.lt.s32.totalorder %s24, 0
        %s3162 = scalar_select %p3161, %s24, 0
        %s3163 = sadd.s32 %s3162, %s3160
        %s3164 = smul.addr %s3163, 4
        %s3165 = scalar_lea.vmem %s4, %s3164
      $region56: #{tpu_custom_call.1} parent=51 // pred_fallthru
        _
    $region52: #{tpu_custom_call.1} parent=5 // pred_fallthru
      _
  $region6: #{tpu_custom_call.1} parent=0 // loop_footer
    %s14 = sadd.s32 1, %s10
  $region7: #{tpu_custom_call.1} parent=0 // loop_footer_branch
    %9 = sbr.rel target = $region3
  $region8: #{tpu_custom_call.1} parent=0 // loop_exit
    _

</llo_original>
